<compile_context>
chip_gen: v7x
topology: tpu7x:2x2x1
jax: 0.10.0
libtpu: 0.0.40
codegen_flags: <defaults>
</compile_context>

<pallas_src>
import jax
import jax.numpy as jnp
import numpy as np
from jax import lax
from jax.experimental import pallas as pl
from jax.experimental.pallas import tpu as pltpu

# ----------------------------- configuration --------------------------------
VOCAB = 9488
EMB_DIM = 300
HID_DIM = 32
N_LAYERS = 2          # fixed by hidden0's shape (2, 2, 1, hid_dim)
T = 8                 # sequence length
BK = 2                # batch size
LN_EPS = 1e-5


# ----------------------------- shared math (reference) -----------------------
def _dot(a, b):
    """bf16-operand matmul with f32 accumulation (MXU-native)."""
    return jnp.dot(a.astype(jnp.bfloat16), b.astype(jnp.bfloat16),
                   preferred_element_type=jnp.float32)


def _layer_norm(x, gamma, beta):
    mu = jnp.mean(x, axis=-1, keepdims=True)
    var = jnp.mean(jnp.square(x - mu), axis=-1, keepdims=True)
    return (x - mu) * lax.rsqrt(var + LN_EPS) * gamma + beta


def _gru_cell(x, h, w_ih, w_hh, g_i, b_i, g_h, b_h):
    """LayerNormGRUCell: LN on both gate pre-activations, standard r/z/n gates."""
    ig = _layer_norm(_dot(x, w_ih), g_i, b_i)
    hg = _layer_norm(_dot(h, w_hh), g_h, b_h)
    H = h.shape[-1]
    ir, iz, inn = ig[:, :H], ig[:, H:2 * H], ig[:, 2 * H:]
    hr, hz, hn = hg[:, :H], hg[:, H:2 * H], hg[:, 2 * H:]
    r = jax.nn.sigmoid(ir + hr)
    z = jax.nn.sigmoid(iz + hz)
    n = jnp.tanh(inn + r * hn)
    return (1.0 - z) * n + z * h


# ------------------------------ Pallas kernel ---------------------------------
def encoder_kernel(len_ref,             # VMEM (BK, 1) int32 (time index per row)
                   emb_ref,             # VMEM (T*BK, E) f32  (row r: t=r//BK, b=r%BK)
                   w_ih0_ref,           # VMEM (E, 6H) bf16   [fwd | bwd] cols
                   w_hh0_ref,           # VMEM (H, 6H) bf16   [fwd | bwd] cols
                   ln_ih0_ref,          # VMEM (2, 2, 3H) f32 [dir][gamma, beta]
                   ln_hh0_ref,          # VMEM (2, 2BK, 3H) f32 [gamma, beta] per stacked row
                   w_ih1_ref,           # VMEM (2H, 6H) bf16  [fwd | bwd] cols
                   w_hh1_ref,           # VMEM (H, 6H) bf16
                   ln_ih1_ref,          # VMEM (2, 2, 3H) f32
                   ln_hh1_ref,          # VMEM (2, 2BK, 3H) f32
                   h0s_ref,             # VMEM (2, 2BK, H) f32 (stacked initial hidden per layer)
                   out1_ref,            # VMEM (BK, T*H) f32  (lane-dense slab)
                   out2_ref):           # VMEM (BK, H) f32
    bk, H = out2_ref.shape
    h3 = 3 * H
    bk2 = 2 * bk
    t_len = emb_ref.shape[0] // bk

    def dotf32(a, b):
        return jnp.dot(a, b, preferred_element_type=jnp.float32)

    def ln(x, g, b):
        mu = jnp.mean(x, axis=-1, keepdims=True)
        var = jnp.mean(jnp.square(x - mu), axis=-1, keepdims=True)
        return (x - mu) * lax.rsqrt(var + LN_EPS) * g + b

    # row mask: True for the first BK rows (fwd direction) of a stacked tile
    fwd_rows = lax.broadcasted_iota(jnp.int32, (bk2, h3), 0) < bk

    def make_ig_steps(ig6, ln_ih_ref):
        """ig6: (T*BK, 6H) raw input-gate pre-activations for both directions.
        Returns T stacked (2BK, 3H) tiles: element s = [fwd @ time s ; bwd @ time T-1-s]."""
        igf = ln(ig6[:, :h3], ln_ih_ref[0, 0:1, :], ln_ih_ref[0, 1:2, :])
        igb = ln(ig6[:, h3:], ln_ih_ref[1, 0:1, :], ln_ih_ref[1, 1:2, :])
        steps = []
        for s in range(t_len):
            tb = t_len - 1 - s
            steps.append(jnp.concatenate(
                [igf[s * bk:(s + 1) * bk, :], igb[tb * bk:(tb + 1) * bk, :]], axis=0))
        return steps

    def run_layer(ig_steps, w_hh6, g_hh, b_hh, h_init):
        """Stacked bidirectional recurrence, state register-resident.
        Returns T stacked (2BK, H) states (element s: fwd hidden at time s,
        bwd hidden at time T-1-s)."""
        h = h_init
        outs = []
        for s in range(t_len):
            hg6 = dotf32(h.astype(jnp.bfloat16), w_hh6)            # (2BK, 6H), one MXU push
            hg = jnp.where(fwd_rows, hg6[:, :h3], hg6[:, h3:])     # block-diagonal pick
            hg = ln(hg, g_hh, b_hh)                                # one LN for both dirs
            ig = ig_steps[s]
            rz = jax.nn.sigmoid(ig[:, :2 * H] + hg[:, :2 * H])     # one sigmoid for r and z
            r, z = rz[:, :H], rz[:, H:]
            n = jnp.tanh(ig[:, 2 * H:] + r * hg[:, 2 * H:])
            h = (1.0 - z) * n + z * h
            outs.append(h)
        return outs

    # ---- layer 0: hoisted batched input gates (all T, both directions) ----
    x0 = emb_ref[...].astype(jnp.bfloat16)                          # (T*BK, E)
    ig0 = dotf32(x0, w_ih0_ref[...])                                # (T*BK, 6H)
    l0 = run_layer(make_ig_steps(ig0, ln_ih0_ref),
                   w_hh0_ref[...], ln_hh0_ref[0], ln_hh0_ref[1], h0s_ref[0])

    # ---- layer 1: input = concat(fwd, bwd) of layer-0 outputs, one dot ----
    x1 = jnp.concatenate(
        [jnp.concatenate([l0[t][:bk, :], l0[t_len - 1 - t][bk:, :]], axis=-1)
         for t in range(t_len)], axis=0).astype(jnp.bfloat16)       # (T*BK, 2H)
    ig1 = dotf32(x1, w_ih1_ref[...])                                # (T*BK, 6H)
    l1 = run_layer(make_ig_steps(ig1, ln_ih1_ref),
                   w_hh1_ref[...], ln_hh1_ref[0], ln_hh1_ref[1], h0s_ref[1])

    # ---- outputs (all from register-resident values) ----
    ssum = [l0[s] + l1[s] for s in range(t_len)]                    # layer sums, stacked
    # out1[b, t] = (fwd_sum[t] + bwd_sum[t]) / 4  -> single lane-dense (BK, T*H) store
    out1_ref[...] = jnp.concatenate(
        [(ssum[t][:bk, :] + ssum[t_len - 1 - t][bk:, :]) * 0.25 for t in range(t_len)],
        axis=-1)

    # out2 = (bwd_mean[t=0] + fwd_mean[t=lengths[b]]) / 2  via one-hot select over T
    lengths = len_ref[...]                                          # (BK, 1) int32
    sel = jnp.zeros((bk, H), jnp.float32)
    for t in range(t_len):
        sel = sel + jnp.where(lengths == t, ssum[t][:bk, :] * 0.5, 0.0)
    out2_ref[...] = (ssum[t_len - 1][bk:, :] * 0.5 + sel) * 0.5


# --------------------------- one-time weight packing ---------------------------
def pack_params(params, bk):
    """Hoisted out of the per-call forward path: direction concat + bf16 cast of
    the GRU weights, LN packing, and the hidden0 broadcast are done once."""
    H = HID_DIM

    def cat_dirs(w):                     # (2, in, 3H) -> (in, 6H) bf16
        return jnp.concatenate([w[0], w[1]], axis=-1).astype(jnp.bfloat16)

    def ln_ih(ln):                       # (2, 4, 3H) -> (2, 2, 3H) [dir][gamma, beta]
        return ln[:, 0:2, :].astype(jnp.float32)

    def ln_hh(ln):                       # (2, 4, 3H) -> (2, 2*bk, 3H) stacked-row gamma/beta
        g = jnp.concatenate([jnp.broadcast_to(ln[0, 2:3, :], (bk, 3 * H)),
                             jnp.broadcast_to(ln[1, 2:3, :], (bk, 3 * H))], axis=0)
        b = jnp.concatenate([jnp.broadcast_to(ln[0, 3:4, :], (bk, 3 * H)),
                             jnp.broadcast_to(ln[1, 3:4, :], (bk, 3 * H))], axis=0)
        return jnp.stack([g, b], axis=0).astype(jnp.float32)

    h0 = jnp.broadcast_to(params["h0"], (N_LAYERS, 2, bk, H))        # hidden0.repeat(1,1,BK,1)
    h0s = h0.reshape(N_LAYERS, 2 * bk, H).astype(jnp.float32)        # stacked [fwd rows ; bwd rows]

    return {
        "emb": params["emb"].astype(jnp.float32),
        "w_ih0": cat_dirs(params["w_ih_l0"]),
        "w_hh0": cat_dirs(params["w_hh_l0"]),
        "ln_ih0": ln_ih(params["ln_l0"]),
        "ln_hh0": ln_hh(params["ln_l0"]),
        "w_ih1": cat_dirs(params["w_ih_l1"]),
        "w_hh1": cat_dirs(params["w_hh_l1"]),
        "ln_ih1": ln_ih(params["ln_l1"]),
        "ln_hh1": ln_hh(params["ln_l1"]),
        "h0s": h0s,
    }


# ------------------------------ wrapper ---------------------------------------
def encoder_forward(src, lengths, pk):
    """src: (BK, T) int32 tokens, lengths: (BK,) int32 time indices, pk: pack_params output."""
    bk, t_len = src.shape
    H = HID_DIM

    # glue: embedding gather directly in flattened time-major order (T*BK, E)
    emb_flat = jnp.take(pk["emb"], src.T.reshape(-1), axis=0)
    # clamp lengths so the in-kernel one-hot select matches JAX's clamped gather
    len_col = jnp.clip(lengths.astype(jnp.int32), 0, t_len - 1).reshape(bk, 1)

    grid_spec = pltpu.PrefetchScalarGridSpec(
        num_scalar_prefetch=0,
        grid=(1,),
        in_specs=[
            pl.BlockSpec(len_col.shape, lambda i: (0, 0)),
            pl.BlockSpec(emb_flat.shape, lambda i: (0, 0)),
            pl.BlockSpec(pk["w_ih0"].shape, lambda i: (0, 0)),
            pl.BlockSpec(pk["w_hh0"].shape, lambda i: (0, 0)),
            pl.BlockSpec(pk["ln_ih0"].shape, lambda i: (0, 0, 0)),
            pl.BlockSpec(pk["ln_hh0"].shape, lambda i: (0, 0, 0)),
            pl.BlockSpec(pk["w_ih1"].shape, lambda i: (0, 0)),
            pl.BlockSpec(pk["w_hh1"].shape, lambda i: (0, 0)),
            pl.BlockSpec(pk["ln_ih1"].shape, lambda i: (0, 0, 0)),
            pl.BlockSpec(pk["ln_hh1"].shape, lambda i: (0, 0, 0)),
            pl.BlockSpec(pk["h0s"].shape, lambda i: (0, 0, 0)),
        ],
        out_specs=[
            pl.BlockSpec((bk, t_len * H), lambda i: (0, 0)),
            pl.BlockSpec((bk, H), lambda i: (0, 0)),
        ],
    )

    out1_flat, out2 = pl.pallas_call(
        encoder_kernel,
        grid_spec=grid_spec,
        out_shape=(jax.ShapeDtypeStruct((bk, t_len * H), jnp.float32),
                   jax.ShapeDtypeStruct((bk, H), jnp.float32)),
        compiler_params=pltpu.CompilerParams(dimension_semantics=("arbitrary",)),
    )(len_col, emb_flat, pk["w_ih0"], pk["w_hh0"], pk["ln_ih0"], pk["ln_hh0"],
      pk["w_ih1"], pk["w_hh1"], pk["ln_ih1"], pk["ln_hh1"], pk["h0s"])

    return out1_flat.reshape(bk, t_len, H), out2


# --------------------------- pure-JAX reference --------------------------------
def encoder_reference(src, lengths, params):
    bk, t_len = src.shape
    H = HID_DIM
    x = jnp.transpose(jnp.take(params["emb"], src, axis=0), (1, 0, 2))  # (T, BK, E)
    h0 = jnp.broadcast_to(params["h0"], (N_LAYERS, 2, bk, H))

    w_ih = [params["w_ih_l0"], params["w_ih_l1"]]
    w_hh = [params["w_hh_l0"], params["w_hh_l1"]]
    ln = [params["ln_l0"], params["ln_l1"]]

    layer_outs = []
    for l in range(N_LAYERS):
        fwd = []
        h = h0[l, 0]
        for t in range(t_len):
            h = _gru_cell(x[t], h, w_ih[l][0], w_hh[l][0],
                          ln[l][0, 0], ln[l][0, 1], ln[l][0, 2], ln[l][0, 3])
            fwd.append(h)
        bwd = [None] * t_len
        h = h0[l, 1]
        for t in range(t_len - 1, -1, -1):
            h = _gru_cell(x[t], h, w_ih[l][1], w_hh[l][1],
                          ln[l][1, 0], ln[l][1, 1], ln[l][1, 2], ln[l][1, 3])
            bwd[t] = h
        out_l = jnp.stack([jnp.stack(fwd), jnp.stack(bwd)], axis=2)  # (T, BK, 2, H)
        layer_outs.append(out_l)
        x = out_l.reshape(t_len, bk, 2 * H)                          # concat(fwd, bwd)

    hidden = jnp.mean(jnp.stack(layer_outs), axis=0)                 # (T, BK, 2, H)
    hidden = jnp.transpose(hidden, (1, 0, 2, 3))                     # (BK, T, 2, H)
    out1 = hidden.mean(2)
    # NOTE: lengths used as a direct time index (matches the provided reference);
    # the original PyTorch code may intend lengths-1 — kept as-is per spec.
    out2 = (hidden[:, 0, -1, :] + hidden[jnp.arange(bk), lengths, 0]) / 2
    return out1, out2


# ------------------------------ main -------------------------------------------
if __name__ == "__main__":
    key = jax.random.PRNGKey(0)
    ks = jax.random.split(key, 12)
    H = HID_DIM

    def w_init(k, shape, fan_in):
        return (jax.random.normal(k, shape, jnp.float32) / np.sqrt(fan_in)).astype(jnp.float32)

    def ln_init(k, dirs=2):
        kgi, kbi, kgh, kbh = jax.random.split(k, 4)
        g_ih = 1.0 + 0.1 * jax.random.normal(kgi, (dirs, 1, 3 * H), jnp.float32)
        b_ih = 0.1 * jax.random.normal(kbi, (dirs, 1, 3 * H), jnp.float32)
        g_hh = 1.0 + 0.1 * jax.random.normal(kgh, (dirs, 1, 3 * H), jnp.float32)
        b_hh = 0.1 * jax.random.normal(kbh, (dirs, 1, 3 * H), jnp.float32)
        # pack as (dir, 4, 3H) = [gamma_ih, beta_ih, gamma_hh, beta_hh] (all distinct)
        return jnp.concatenate([g_ih, b_ih, g_hh, b_hh], axis=1)

    params = {
        "emb": 0.1 * jax.random.normal(ks[0], (VOCAB, EMB_DIM), jnp.float32),
        "w_ih_l0": w_init(ks[1], (2, EMB_DIM, 3 * H), EMB_DIM),
        "w_hh_l0": w_init(ks[2], (2, H, 3 * H), H),
        "ln_l0": ln_init(ks[3]),
        "w_ih_l1": w_init(ks[4], (2, 2 * H, 3 * H), 2 * H),
        "w_hh_l1": w_init(ks[5], (2, H, 3 * H), H),
        "ln_l1": ln_init(ks[6]),
        "h0": 0.01 * jax.random.normal(ks[7], (N_LAYERS, 2, 1, H), jnp.float32),
    }

    src = jax.random.randint(ks[8], (BK, T), 0, VOCAB, dtype=jnp.int32)
    lengths = jnp.array([T - 1, T // 2], dtype=jnp.int32)   # valid time indices

    packed = pack_params(params, BK)                          # one-time weight packing
    out1, out2 = encoder_forward(src, lengths, packed)
    jax.block_until_ready((out1, out2))

    ref1, ref2 = encoder_reference(src, lengths, params)
    np.testing.assert_allclose(np.asarray(out1), np.asarray(ref1), rtol=2e-2, atol=2e-2)
    np.testing.assert_allclose(np.asarray(out2), np.asarray(ref2), rtol=2e-2, atol=2e-2)
    assert out1.shape == (BK, T, HID_DIM) and out2.shape == (BK, HID_DIM)

    print("KERNEL_OK")
</pallas_src>

<mosaic_0001>
module attributes {stable_mosaic.version = 11 : i64} {
  func.func @encoder_kernel(%arg0: i32, %arg1: memref<2x1xi32, #tpu.memory_space<vmem>>, %arg2: memref<16x300xf32, #tpu.memory_space<vmem>>, %arg3: memref<300x192xbf16, #tpu.memory_space<vmem>>, %arg4: memref<32x192xbf16, #tpu.memory_space<vmem>>, %arg5: memref<2x2x96xf32, #tpu.memory_space<vmem>>, %arg6: memref<2x4x96xf32, #tpu.memory_space<vmem>>, %arg7: memref<64x192xbf16, #tpu.memory_space<vmem>>, %arg8: memref<32x192xbf16, #tpu.memory_space<vmem>>, %arg9: memref<2x2x96xf32, #tpu.memory_space<vmem>>, %arg10: memref<2x4x96xf32, #tpu.memory_space<vmem>>, %arg11: memref<2x4x32xf32, #tpu.memory_space<vmem>>, %arg12: memref<2x256xf32, #tpu.memory_space<vmem>>, %arg13: memref<2x32xf32, #tpu.memory_space<vmem>>) attributes {dimension_semantics = [#tpu.dimension_semantics<arbitrary>], iteration_bounds = array<i64: 1>, scalar_prefetch = 0 : i64, scratch_operands = 0 : i64, tpu.core_type = #tpu.core_type<tc>, window_params = [{pipeline_mode = #tpu.pipeline_mode<synchronous>, transform_indices = @transform_0, window_bounds = array<i64: 2, 1>}, {pipeline_mode = #tpu.pipeline_mode<synchronous>, transform_indices = @transform_1, window_bounds = array<i64: 16, 300>}, {pipeline_mode = #tpu.pipeline_mode<synchronous>, transform_indices = @transform_2, window_bounds = array<i64: 300, 192>}, {pipeline_mode = #tpu.pipeline_mode<synchronous>, transform_indices = @transform_3, window_bounds = array<i64: 32, 192>}, {pipeline_mode = #tpu.pipeline_mode<synchronous>, transform_indices = @transform_4, window_bounds = array<i64: 2, 2, 96>}, {pipeline_mode = #tpu.pipeline_mode<synchronous>, transform_indices = @transform_5, window_bounds = array<i64: 2, 4, 96>}, {pipeline_mode = #tpu.pipeline_mode<synchronous>, transform_indices = @transform_6, window_bounds = array<i64: 64, 192>}, {pipeline_mode = #tpu.pipeline_mode<synchronous>, transform_indices = @transform_7, window_bounds = array<i64: 32, 192>}, {pipeline_mode = #tpu.pipeline_mode<synchronous>, transform_indices = @transform_8, window_bounds = array<i64: 2, 2, 96>}, {pipeline_mode = #tpu.pipeline_mode<synchronous>, transform_indices = @transform_9, window_bounds = array<i64: 2, 4, 96>}, {pipeline_mode = #tpu.pipeline_mode<synchronous>, transform_indices = @transform_10, window_bounds = array<i64: 2, 4, 32>}, {pipeline_mode = #tpu.pipeline_mode<synchronous>, transform_indices = @transform_11, window_bounds = array<i64: 2, 256>}, {pipeline_mode = #tpu.pipeline_mode<synchronous>, transform_indices = @transform_12, window_bounds = array<i64: 2, 32>}]} {
    %0 = tpu.iota {dimensions = array<i32: 0>} : vector<4x96xi32>
    %c2_i32 = arith.constant 2 : i32
    %1 = vector.broadcast %c2_i32 : i32 to vector<4x96xi32>
    %2 = arith.cmpi slt, %0, %1 : vector<4x96xi32>
    %c0 = arith.constant 0 : index
    %c0_0 = arith.constant 0 : index
    %3 = vector.load %arg2[%c0, %c0_0] : memref<16x300xf32, #tpu.memory_space<vmem>>, vector<16x300xf32>
    %4 = arith.truncf %3 : vector<16x300xf32> to vector<16x300xbf16>
    %c0_1 = arith.constant 0 : index
    %c0_2 = arith.constant 0 : index
    %5 = vector.load %arg3[%c0_1, %c0_2] : memref<300x192xbf16, #tpu.memory_space<vmem>>, vector<300x192xbf16>
    %cst = arith.constant dense<0.000000e+00> : vector<16x192xf32>
    %6 = tpu.matmul %4, %5, %cst {dimension_numbers = #tpu.dot_dimension_numbers<[1], [0], [0], [1], [0, 0, 1, 1], [], []>} : vector<16x300xbf16>, vector<300x192xbf16>, vector<16x192xf32> -> vector<16x192xf32>
    %7 = vector.extract_strided_slice %6 {offsets = [0, 0], sizes = [16, 96], strides = [1, 1]} : vector<16x192xf32> to vector<16x96xf32>
    %c0_3 = arith.constant 0 : index
    %c0_4 = arith.constant 0 : index
    %c0_5 = arith.constant 0 : index
    %8 = vector.load %arg5[%c0_3, %c0_4, %c0_5] : memref<2x2x96xf32, #tpu.memory_space<vmem>>, vector<1x1x96xf32>
    %9 = vector.shape_cast %8 : vector<1x1x96xf32> to vector<1x96xf32>
    %c0_6 = arith.constant 0 : index
    %c1 = arith.constant 1 : index
    %c0_7 = arith.constant 0 : index
    %10 = vector.load %arg5[%c0_6, %c1, %c0_7] : memref<2x2x96xf32, #tpu.memory_space<vmem>>, vector<1x1x96xf32>
    %11 = vector.shape_cast %10 : vector<1x1x96xf32> to vector<1x96xf32>
    %cst_8 = arith.constant dense<0.000000e+00> : vector<16xf32>
    %12 = vector.multi_reduction <add>, %7, %cst_8 [1] : vector<16x96xf32> to vector<16xf32>
    %13 = vector.shape_cast %12 : vector<16xf32> to vector<16x1xf32>
    %cst_9 = arith.constant 9.600000e+01 : f32
    %14 = vector.broadcast %cst_9 : f32 to vector<16x1xf32>
    %15 = arith.divf %13, %14 : vector<16x1xf32>
    %16 = vector.broadcast %15 : vector<16x1xf32> to vector<16x96xf32>
    %17 = arith.subf %7, %16 : vector<16x96xf32>
    %18 = arith.mulf %17, %17 : vector<16x96xf32>
    %cst_10 = arith.constant dense<0.000000e+00> : vector<16xf32>
    %19 = vector.multi_reduction <add>, %18, %cst_10 [1] : vector<16x96xf32> to vector<16xf32>
    %20 = vector.shape_cast %19 : vector<16xf32> to vector<16x1xf32>
    %cst_11 = arith.constant 9.600000e+01 : f32
    %21 = vector.broadcast %cst_11 : f32 to vector<16x1xf32>
    %22 = arith.divf %20, %21 : vector<16x1xf32>
    %23 = vector.broadcast %15 : vector<16x1xf32> to vector<16x96xf32>
    %24 = arith.subf %7, %23 : vector<16x96xf32>
    %cst_12 = arith.constant 9.99999974E-6 : f32
    %25 = vector.broadcast %cst_12 : f32 to vector<16x1xf32>
    %26 = arith.addf %22, %25 : vector<16x1xf32>
    %27 = math.rsqrt %26 : vector<16x1xf32>
    %28 = vector.broadcast %27 : vector<16x1xf32> to vector<16x96xf32>
    %29 = arith.mulf %24, %28 : vector<16x96xf32>
    %30 = vector.broadcast %9 : vector<1x96xf32> to vector<16x96xf32>
    %31 = arith.mulf %29, %30 : vector<16x96xf32>
    %32 = vector.broadcast %11 : vector<1x96xf32> to vector<16x96xf32>
    %33 = arith.addf %31, %32 : vector<16x96xf32>
    %34 = vector.extract_strided_slice %6 {offsets = [0, 96], sizes = [16, 96], strides = [1, 1]} : vector<16x192xf32> to vector<16x96xf32>
    %c1_13 = arith.constant 1 : index
    %c0_14 = arith.constant 0 : index
    %c0_15 = arith.constant 0 : index
    %35 = vector.load %arg5[%c1_13, %c0_14, %c0_15] : memref<2x2x96xf32, #tpu.memory_space<vmem>>, vector<1x1x96xf32>
    %36 = vector.shape_cast %35 : vector<1x1x96xf32> to vector<1x96xf32>
    %c1_16 = arith.constant 1 : index
    %c1_17 = arith.constant 1 : index
    %c0_18 = arith.constant 0 : index
    %37 = vector.load %arg5[%c1_16, %c1_17, %c0_18] : memref<2x2x96xf32, #tpu.memory_space<vmem>>, vector<1x1x96xf32>
    %38 = vector.shape_cast %37 : vector<1x1x96xf32> to vector<1x96xf32>
    %cst_19 = arith.constant dense<0.000000e+00> : vector<16xf32>
    %39 = vector.multi_reduction <add>, %34, %cst_19 [1] : vector<16x96xf32> to vector<16xf32>
    %40 = vector.shape_cast %39 : vector<16xf32> to vector<16x1xf32>
    %cst_20 = arith.constant 9.600000e+01 : f32
    %41 = vector.broadcast %cst_20 : f32 to vector<16x1xf32>
    %42 = arith.divf %40, %41 : vector<16x1xf32>
    %43 = vector.broadcast %42 : vector<16x1xf32> to vector<16x96xf32>
    %44 = arith.subf %34, %43 : vector<16x96xf32>
    %45 = arith.mulf %44, %44 : vector<16x96xf32>
    %cst_21 = arith.constant dense<0.000000e+00> : vector<16xf32>
    %46 = vector.multi_reduction <add>, %45, %cst_21 [1] : vector<16x96xf32> to vector<16xf32>
    %47 = vector.shape_cast %46 : vector<16xf32> to vector<16x1xf32>
    %cst_22 = arith.constant 9.600000e+01 : f32
    %48 = vector.broadcast %cst_22 : f32 to vector<16x1xf32>
    %49 = arith.divf %47, %48 : vector<16x1xf32>
    %50 = vector.broadcast %42 : vector<16x1xf32> to vector<16x96xf32>
    %51 = arith.subf %34, %50 : vector<16x96xf32>
    %cst_23 = arith.constant 9.99999974E-6 : f32
    %52 = vector.broadcast %cst_23 : f32 to vector<16x1xf32>
    %53 = arith.addf %49, %52 : vector<16x1xf32>
    %54 = math.rsqrt %53 : vector<16x1xf32>
    %55 = vector.broadcast %54 : vector<16x1xf32> to vector<16x96xf32>
    %56 = arith.mulf %51, %55 : vector<16x96xf32>
    %57 = vector.broadcast %36 : vector<1x96xf32> to vector<16x96xf32>
    %58 = arith.mulf %56, %57 : vector<16x96xf32>
    %59 = vector.broadcast %38 : vector<1x96xf32> to vector<16x96xf32>
    %60 = arith.addf %58, %59 : vector<16x96xf32>
    %61 = vector.extract_strided_slice %33 {offsets = [0, 0], sizes = [2, 96], strides = [1, 1]} : vector<16x96xf32> to vector<2x96xf32>
    %62 = vector.extract_strided_slice %60 {offsets = [14, 0], sizes = [2, 96], strides = [1, 1]} : vector<16x96xf32> to vector<2x96xf32>
    %63 = tpu.concatenate %61, %62 in 0 : vector<2x96xf32>, vector<2x96xf32> -> vector<4x96xf32>
    %64 = vector.extract_strided_slice %33 {offsets = [2, 0], sizes = [2, 96], strides = [1, 1]} : vector<16x96xf32> to vector<2x96xf32>
    %65 = vector.extract_strided_slice %60 {offsets = [12, 0], sizes = [2, 96], strides = [1, 1]} : vector<16x96xf32> to vector<2x96xf32>
    %66 = tpu.concatenate %64, %65 in 0 : vector<2x96xf32>, vector<2x96xf32> -> vector<4x96xf32>
    %67 = vector.extract_strided_slice %33 {offsets = [4, 0], sizes = [2, 96], strides = [1, 1]} : vector<16x96xf32> to vector<2x96xf32>
    %68 = vector.extract_strided_slice %60 {offsets = [10, 0], sizes = [2, 96], strides = [1, 1]} : vector<16x96xf32> to vector<2x96xf32>
    %69 = tpu.concatenate %67, %68 in 0 : vector<2x96xf32>, vector<2x96xf32> -> vector<4x96xf32>
    %70 = vector.extract_strided_slice %33 {offsets = [6, 0], sizes = [2, 96], strides = [1, 1]} : vector<16x96xf32> to vector<2x96xf32>
    %71 = vector.extract_strided_slice %60 {offsets = [8, 0], sizes = [2, 96], strides = [1, 1]} : vector<16x96xf32> to vector<2x96xf32>
    %72 = tpu.concatenate %70, %71 in 0 : vector<2x96xf32>, vector<2x96xf32> -> vector<4x96xf32>
    %73 = vector.extract_strided_slice %33 {offsets = [8, 0], sizes = [2, 96], strides = [1, 1]} : vector<16x96xf32> to vector<2x96xf32>
    %74 = vector.extract_strided_slice %60 {offsets = [6, 0], sizes = [2, 96], strides = [1, 1]} : vector<16x96xf32> to vector<2x96xf32>
    %75 = tpu.concatenate %73, %74 in 0 : vector<2x96xf32>, vector<2x96xf32> -> vector<4x96xf32>
    %76 = vector.extract_strided_slice %33 {offsets = [10, 0], sizes = [2, 96], strides = [1, 1]} : vector<16x96xf32> to vector<2x96xf32>
    %77 = vector.extract_strided_slice %60 {offsets = [4, 0], sizes = [2, 96], strides = [1, 1]} : vector<16x96xf32> to vector<2x96xf32>
    %78 = tpu.concatenate %76, %77 in 0 : vector<2x96xf32>, vector<2x96xf32> -> vector<4x96xf32>
    %79 = vector.extract_strided_slice %33 {offsets = [12, 0], sizes = [2, 96], strides = [1, 1]} : vector<16x96xf32> to vector<2x96xf32>
    %80 = vector.extract_strided_slice %60 {offsets = [2, 0], sizes = [2, 96], strides = [1, 1]} : vector<16x96xf32> to vector<2x96xf32>
    %81 = tpu.concatenate %79, %80 in 0 : vector<2x96xf32>, vector<2x96xf32> -> vector<4x96xf32>
    %82 = vector.extract_strided_slice %33 {offsets = [14, 0], sizes = [2, 96], strides = [1, 1]} : vector<16x96xf32> to vector<2x96xf32>
    %83 = vector.extract_strided_slice %60 {offsets = [0, 0], sizes = [2, 96], strides = [1, 1]} : vector<16x96xf32> to vector<2x96xf32>
    %84 = tpu.concatenate %82, %83 in 0 : vector<2x96xf32>, vector<2x96xf32> -> vector<4x96xf32>
    %c0_24 = arith.constant 0 : index
    %c0_25 = arith.constant 0 : index
    %85 = vector.load %arg4[%c0_24, %c0_25] : memref<32x192xbf16, #tpu.memory_space<vmem>>, vector<32x192xbf16>
    %c0_26 = arith.constant 0 : index
    %c0_27 = arith.constant 0 : index
    %c0_28 = arith.constant 0 : index
    %86 = vector.load %arg6[%c0_26, %c0_27, %c0_28] : memref<2x4x96xf32, #tpu.memory_space<vmem>>, vector<1x4x96xf32>
    %87 = vector.shape_cast %86 : vector<1x4x96xf32> to vector<4x96xf32>
    %c1_29 = arith.constant 1 : index
    %c0_30 = arith.constant 0 : index
    %c0_31 = arith.constant 0 : index
    %88 = vector.load %arg6[%c1_29, %c0_30, %c0_31] : memref<2x4x96xf32, #tpu.memory_space<vmem>>, vector<1x4x96xf32>
    %89 = vector.shape_cast %88 : vector<1x4x96xf32> to vector<4x96xf32>
    %c0_32 = arith.constant 0 : index
    %c0_33 = arith.constant 0 : index
    %c0_34 = arith.constant 0 : index
    %90 = vector.load %arg11[%c0_32, %c0_33, %c0_34] : memref<2x4x32xf32, #tpu.memory_space<vmem>>, vector<1x4x32xf32>
    %91 = vector.shape_cast %90 : vector<1x4x32xf32> to vector<4x32xf32>
    %92 = arith.truncf %91 : vector<4x32xf32> to vector<4x32xbf16>
    %cst_35 = arith.constant dense<0.000000e+00> : vector<4x192xf32>
    %93 = tpu.matmul %92, %85, %cst_35 {dimension_numbers = #tpu.dot_dimension_numbers<[1], [0], [0], [1], [0, 0, 1, 1], [], []>} : vector<4x32xbf16>, vector<32x192xbf16>, vector<4x192xf32> -> vector<4x192xf32>
    %94 = vector.extract_strided_slice %93 {offsets = [0, 0], sizes = [4, 96], strides = [1, 1]} : vector<4x192xf32> to vector<4x96xf32>
    %95 = vector.extract_strided_slice %93 {offsets = [0, 96], sizes = [4, 96], strides = [1, 1]} : vector<4x192xf32> to vector<4x96xf32>
    %96 = arith.select %2, %94, %95 : vector<4x96xi1>, vector<4x96xf32>
    %cst_36 = arith.constant dense<0.000000e+00> : vector<4xf32>
    %97 = vector.multi_reduction <add>, %96, %cst_36 [1] : vector<4x96xf32> to vector<4xf32>
    %98 = vector.shape_cast %97 : vector<4xf32> to vector<4x1xf32>
    %cst_37 = arith.constant 9.600000e+01 : f32
    %99 = vector.broadcast %cst_37 : f32 to vector<4x1xf32>
    %100 = arith.divf %98, %99 : vector<4x1xf32>
    %101 = vector.broadcast %100 : vector<4x1xf32> to vector<4x96xf32>
    %102 = arith.subf %96, %101 : vector<4x96xf32>
    %103 = arith.mulf %102, %102 : vector<4x96xf32>
    %cst_38 = arith.constant dense<0.000000e+00> : vector<4xf32>
    %104 = vector.multi_reduction <add>, %103, %cst_38 [1] : vector<4x96xf32> to vector<4xf32>
    %105 = vector.shape_cast %104 : vector<4xf32> to vector<4x1xf32>
    %cst_39 = arith.constant 9.600000e+01 : f32
    %106 = vector.broadcast %cst_39 : f32 to vector<4x1xf32>
    %107 = arith.divf %105, %106 : vector<4x1xf32>
    %108 = vector.broadcast %100 : vector<4x1xf32> to vector<4x96xf32>
    %109 = arith.subf %96, %108 : vector<4x96xf32>
    %cst_40 = arith.constant 9.99999974E-6 : f32
    %110 = vector.broadcast %cst_40 : f32 to vector<4x1xf32>
    %111 = arith.addf %107, %110 : vector<4x1xf32>
    %112 = math.rsqrt %111 : vector<4x1xf32>
    %113 = vector.broadcast %112 : vector<4x1xf32> to vector<4x96xf32>
    %114 = arith.mulf %109, %113 : vector<4x96xf32>
    %115 = arith.mulf %114, %87 : vector<4x96xf32>
    %116 = arith.addf %115, %89 : vector<4x96xf32>
    %117 = vector.extract_strided_slice %63 {offsets = [0, 0], sizes = [4, 64], strides = [1, 1]} : vector<4x96xf32> to vector<4x64xf32>
    %118 = vector.extract_strided_slice %116 {offsets = [0, 0], sizes = [4, 64], strides = [1, 1]} : vector<4x96xf32> to vector<4x64xf32>
    %119 = arith.addf %117, %118 : vector<4x64xf32>
    %120 = arith.negf %119 : vector<4x64xf32>
    %121 = math.exp %120 : vector<4x64xf32>
    %cst_41 = arith.constant 1.000000e+00 : f32
    %122 = vector.broadcast %cst_41 : f32 to vector<4x64xf32>
    %123 = arith.addf %122, %121 : vector<4x64xf32>
    %124 = arith.divf %122, %123 : vector<4x64xf32>
    %125 = vector.extract_strided_slice %124 {offsets = [0, 0], sizes = [4, 32], strides = [1, 1]} : vector<4x64xf32> to vector<4x32xf32>
    %126 = vector.extract_strided_slice %124 {offsets = [0, 32], sizes = [4, 32], strides = [1, 1]} : vector<4x64xf32> to vector<4x32xf32>
    %127 = vector.extract_strided_slice %63 {offsets = [0, 64], sizes = [4, 32], strides = [1, 1]} : vector<4x96xf32> to vector<4x32xf32>
    %128 = vector.extract_strided_slice %116 {offsets = [0, 64], sizes = [4, 32], strides = [1, 1]} : vector<4x96xf32> to vector<4x32xf32>
    %129 = arith.mulf %125, %128 : vector<4x32xf32>
    %130 = arith.addf %127, %129 : vector<4x32xf32>
    %131 = math.tanh %130 : vector<4x32xf32>
    %cst_42 = arith.constant 1.000000e+00 : f32
    %132 = vector.broadcast %cst_42 : f32 to vector<4x32xf32>
    %133 = arith.subf %132, %126 : vector<4x32xf32>
    %134 = arith.mulf %133, %131 : vector<4x32xf32>
    %135 = arith.mulf %126, %91 : vector<4x32xf32>
    %136 = arith.addf %134, %135 : vector<4x32xf32>
    %137 = arith.truncf %136 : vector<4x32xf32> to vector<4x32xbf16>
    %cst_43 = arith.constant dense<0.000000e+00> : vector<4x192xf32>
    %138 = tpu.matmul %137, %85, %cst_43 {dimension_numbers = #tpu.dot_dimension_numbers<[1], [0], [0], [1], [0, 0, 1, 1], [], []>} : vector<4x32xbf16>, vector<32x192xbf16>, vector<4x192xf32> -> vector<4x192xf32>
    %139 = vector.extract_strided_slice %138 {offsets = [0, 0], sizes = [4, 96], strides = [1, 1]} : vector<4x192xf32> to vector<4x96xf32>
    %140 = vector.extract_strided_slice %138 {offsets = [0, 96], sizes = [4, 96], strides = [1, 1]} : vector<4x192xf32> to vector<4x96xf32>
    %141 = arith.select %2, %139, %140 : vector<4x96xi1>, vector<4x96xf32>
    %cst_44 = arith.constant dense<0.000000e+00> : vector<4xf32>
    %142 = vector.multi_reduction <add>, %141, %cst_44 [1] : vector<4x96xf32> to vector<4xf32>
    %143 = vector.shape_cast %142 : vector<4xf32> to vector<4x1xf32>
    %cst_45 = arith.constant 9.600000e+01 : f32
    %144 = vector.broadcast %cst_45 : f32 to vector<4x1xf32>
    %145 = arith.divf %143, %144 : vector<4x1xf32>
    %146 = vector.broadcast %145 : vector<4x1xf32> to vector<4x96xf32>
    %147 = arith.subf %141, %146 : vector<4x96xf32>
    %148 = arith.mulf %147, %147 : vector<4x96xf32>
    %cst_46 = arith.constant dense<0.000000e+00> : vector<4xf32>
    %149 = vector.multi_reduction <add>, %148, %cst_46 [1] : vector<4x96xf32> to vector<4xf32>
    %150 = vector.shape_cast %149 : vector<4xf32> to vector<4x1xf32>
    %cst_47 = arith.constant 9.600000e+01 : f32
    %151 = vector.broadcast %cst_47 : f32 to vector<4x1xf32>
    %152 = arith.divf %150, %151 : vector<4x1xf32>
    %153 = vector.broadcast %145 : vector<4x1xf32> to vector<4x96xf32>
    %154 = arith.subf %141, %153 : vector<4x96xf32>
    %cst_48 = arith.constant 9.99999974E-6 : f32
    %155 = vector.broadcast %cst_48 : f32 to vector<4x1xf32>
    %156 = arith.addf %152, %155 : vector<4x1xf32>
    %157 = math.rsqrt %156 : vector<4x1xf32>
    %158 = vector.broadcast %157 : vector<4x1xf32> to vector<4x96xf32>
    %159 = arith.mulf %154, %158 : vector<4x96xf32>
    %160 = arith.mulf %159, %87 : vector<4x96xf32>
    %161 = arith.addf %160, %89 : vector<4x96xf32>
    %162 = vector.extract_strided_slice %66 {offsets = [0, 0], sizes = [4, 64], strides = [1, 1]} : vector<4x96xf32> to vector<4x64xf32>
    %163 = vector.extract_strided_slice %161 {offsets = [0, 0], sizes = [4, 64], strides = [1, 1]} : vector<4x96xf32> to vector<4x64xf32>
    %164 = arith.addf %162, %163 : vector<4x64xf32>
    %165 = arith.negf %164 : vector<4x64xf32>
    %166 = math.exp %165 : vector<4x64xf32>
    %cst_49 = arith.constant 1.000000e+00 : f32
    %167 = vector.broadcast %cst_49 : f32 to vector<4x64xf32>
    %168 = arith.addf %167, %166 : vector<4x64xf32>
    %169 = arith.divf %167, %168 : vector<4x64xf32>
    %170 = vector.extract_strided_slice %169 {offsets = [0, 0], sizes = [4, 32], strides = [1, 1]} : vector<4x64xf32> to vector<4x32xf32>
    %171 = vector.extract_strided_slice %169 {offsets = [0, 32], sizes = [4, 32], strides = [1, 1]} : vector<4x64xf32> to vector<4x32xf32>
    %172 = vector.extract_strided_slice %66 {offsets = [0, 64], sizes = [4, 32], strides = [1, 1]} : vector<4x96xf32> to vector<4x32xf32>
    %173 = vector.extract_strided_slice %161 {offsets = [0, 64], sizes = [4, 32], strides = [1, 1]} : vector<4x96xf32> to vector<4x32xf32>
    %174 = arith.mulf %170, %173 : vector<4x32xf32>
    %175 = arith.addf %172, %174 : vector<4x32xf32>
    %176 = math.tanh %175 : vector<4x32xf32>
    %cst_50 = arith.constant 1.000000e+00 : f32
    %177 = vector.broadcast %cst_50 : f32 to vector<4x32xf32>
    %178 = arith.subf %177, %171 : vector<4x32xf32>
    %179 = arith.mulf %178, %176 : vector<4x32xf32>
    %180 = arith.mulf %171, %136 : vector<4x32xf32>
    %181 = arith.addf %179, %180 : vector<4x32xf32>
    %182 = arith.truncf %181 : vector<4x32xf32> to vector<4x32xbf16>
    %cst_51 = arith.constant dense<0.000000e+00> : vector<4x192xf32>
    %183 = tpu.matmul %182, %85, %cst_51 {dimension_numbers = #tpu.dot_dimension_numbers<[1], [0], [0], [1], [0, 0, 1, 1], [], []>} : vector<4x32xbf16>, vector<32x192xbf16>, vector<4x192xf32> -> vector<4x192xf32>
    %184 = vector.extract_strided_slice %183 {offsets = [0, 0], sizes = [4, 96], strides = [1, 1]} : vector<4x192xf32> to vector<4x96xf32>
    %185 = vector.extract_strided_slice %183 {offsets = [0, 96], sizes = [4, 96], strides = [1, 1]} : vector<4x192xf32> to vector<4x96xf32>
    %186 = arith.select %2, %184, %185 : vector<4x96xi1>, vector<4x96xf32>
    %cst_52 = arith.constant dense<0.000000e+00> : vector<4xf32>
    %187 = vector.multi_reduction <add>, %186, %cst_52 [1] : vector<4x96xf32> to vector<4xf32>
    %188 = vector.shape_cast %187 : vector<4xf32> to vector<4x1xf32>
    %cst_53 = arith.constant 9.600000e+01 : f32
    %189 = vector.broadcast %cst_53 : f32 to vector<4x1xf32>
    %190 = arith.divf %188, %189 : vector<4x1xf32>
    %191 = vector.broadcast %190 : vector<4x1xf32> to vector<4x96xf32>
    %192 = arith.subf %186, %191 : vector<4x96xf32>
    %193 = arith.mulf %192, %192 : vector<4x96xf32>
    %cst_54 = arith.constant dense<0.000000e+00> : vector<4xf32>
    %194 = vector.multi_reduction <add>, %193, %cst_54 [1] : vector<4x96xf32> to vector<4xf32>
    %195 = vector.shape_cast %194 : vector<4xf32> to vector<4x1xf32>
    %cst_55 = arith.constant 9.600000e+01 : f32
    %196 = vector.broadcast %cst_55 : f32 to vector<4x1xf32>
    %197 = arith.divf %195, %196 : vector<4x1xf32>
    %198 = vector.broadcast %190 : vector<4x1xf32> to vector<4x96xf32>
    %199 = arith.subf %186, %198 : vector<4x96xf32>
    %cst_56 = arith.constant 9.99999974E-6 : f32
    %200 = vector.broadcast %cst_56 : f32 to vector<4x1xf32>
    %201 = arith.addf %197, %200 : vector<4x1xf32>
    %202 = math.rsqrt %201 : vector<4x1xf32>
    %203 = vector.broadcast %202 : vector<4x1xf32> to vector<4x96xf32>
    %204 = arith.mulf %199, %203 : vector<4x96xf32>
    %205 = arith.mulf %204, %87 : vector<4x96xf32>
    %206 = arith.addf %205, %89 : vector<4x96xf32>
    %207 = vector.extract_strided_slice %69 {offsets = [0, 0], sizes = [4, 64], strides = [1, 1]} : vector<4x96xf32> to vector<4x64xf32>
    %208 = vector.extract_strided_slice %206 {offsets = [0, 0], sizes = [4, 64], strides = [1, 1]} : vector<4x96xf32> to vector<4x64xf32>
    %209 = arith.addf %207, %208 : vector<4x64xf32>
    %210 = arith.negf %209 : vector<4x64xf32>
    %211 = math.exp %210 : vector<4x64xf32>
    %cst_57 = arith.constant 1.000000e+00 : f32
    %212 = vector.broadcast %cst_57 : f32 to vector<4x64xf32>
    %213 = arith.addf %212, %211 : vector<4x64xf32>
    %214 = arith.divf %212, %213 : vector<4x64xf32>
    %215 = vector.extract_strided_slice %214 {offsets = [0, 0], sizes = [4, 32], strides = [1, 1]} : vector<4x64xf32> to vector<4x32xf32>
    %216 = vector.extract_strided_slice %214 {offsets = [0, 32], sizes = [4, 32], strides = [1, 1]} : vector<4x64xf32> to vector<4x32xf32>
    %217 = vector.extract_strided_slice %69 {offsets = [0, 64], sizes = [4, 32], strides = [1, 1]} : vector<4x96xf32> to vector<4x32xf32>
    %218 = vector.extract_strided_slice %206 {offsets = [0, 64], sizes = [4, 32], strides = [1, 1]} : vector<4x96xf32> to vector<4x32xf32>
    %219 = arith.mulf %215, %218 : vector<4x32xf32>
    %220 = arith.addf %217, %219 : vector<4x32xf32>
    %221 = math.tanh %220 : vector<4x32xf32>
    %cst_58 = arith.constant 1.000000e+00 : f32
    %222 = vector.broadcast %cst_58 : f32 to vector<4x32xf32>
    %223 = arith.subf %222, %216 : vector<4x32xf32>
    %224 = arith.mulf %223, %221 : vector<4x32xf32>
    %225 = arith.mulf %216, %181 : vector<4x32xf32>
    %226 = arith.addf %224, %225 : vector<4x32xf32>
    %227 = arith.truncf %226 : vector<4x32xf32> to vector<4x32xbf16>
    %cst_59 = arith.constant dense<0.000000e+00> : vector<4x192xf32>
    %228 = tpu.matmul %227, %85, %cst_59 {dimension_numbers = #tpu.dot_dimension_numbers<[1], [0], [0], [1], [0, 0, 1, 1], [], []>} : vector<4x32xbf16>, vector<32x192xbf16>, vector<4x192xf32> -> vector<4x192xf32>
    %229 = vector.extract_strided_slice %228 {offsets = [0, 0], sizes = [4, 96], strides = [1, 1]} : vector<4x192xf32> to vector<4x96xf32>
    %230 = vector.extract_strided_slice %228 {offsets = [0, 96], sizes = [4, 96], strides = [1, 1]} : vector<4x192xf32> to vector<4x96xf32>
    %231 = arith.select %2, %229, %230 : vector<4x96xi1>, vector<4x96xf32>
    %cst_60 = arith.constant dense<0.000000e+00> : vector<4xf32>
    %232 = vector.multi_reduction <add>, %231, %cst_60 [1] : vector<4x96xf32> to vector<4xf32>
    %233 = vector.shape_cast %232 : vector<4xf32> to vector<4x1xf32>
    %cst_61 = arith.constant 9.600000e+01 : f32
    %234 = vector.broadcast %cst_61 : f32 to vector<4x1xf32>
    %235 = arith.divf %233, %234 : vector<4x1xf32>
    %236 = vector.broadcast %235 : vector<4x1xf32> to vector<4x96xf32>
    %237 = arith.subf %231, %236 : vector<4x96xf32>
    %238 = arith.mulf %237, %237 : vector<4x96xf32>
    %cst_62 = arith.constant dense<0.000000e+00> : vector<4xf32>
    %239 = vector.multi_reduction <add>, %238, %cst_62 [1] : vector<4x96xf32> to vector<4xf32>
    %240 = vector.shape_cast %239 : vector<4xf32> to vector<4x1xf32>
    %cst_63 = arith.constant 9.600000e+01 : f32
    %241 = vector.broadcast %cst_63 : f32 to vector<4x1xf32>
    %242 = arith.divf %240, %241 : vector<4x1xf32>
    %243 = vector.broadcast %235 : vector<4x1xf32> to vector<4x96xf32>
    %244 = arith.subf %231, %243 : vector<4x96xf32>
    %cst_64 = arith.constant 9.99999974E-6 : f32
    %245 = vector.broadcast %cst_64 : f32 to vector<4x1xf32>
    %246 = arith.addf %242, %245 : vector<4x1xf32>
    %247 = math.rsqrt %246 : vector<4x1xf32>
    %248 = vector.broadcast %247 : vector<4x1xf32> to vector<4x96xf32>
    %249 = arith.mulf %244, %248 : vector<4x96xf32>
    %250 = arith.mulf %249, %87 : vector<4x96xf32>
    %251 = arith.addf %250, %89 : vector<4x96xf32>
    %252 = vector.extract_strided_slice %72 {offsets = [0, 0], sizes = [4, 64], strides = [1, 1]} : vector<4x96xf32> to vector<4x64xf32>
    %253 = vector.extract_strided_slice %251 {offsets = [0, 0], sizes = [4, 64], strides = [1, 1]} : vector<4x96xf32> to vector<4x64xf32>
    %254 = arith.addf %252, %253 : vector<4x64xf32>
    %255 = arith.negf %254 : vector<4x64xf32>
    %256 = math.exp %255 : vector<4x64xf32>
    %cst_65 = arith.constant 1.000000e+00 : f32
    %257 = vector.broadcast %cst_65 : f32 to vector<4x64xf32>
    %258 = arith.addf %257, %256 : vector<4x64xf32>
    %259 = arith.divf %257, %258 : vector<4x64xf32>
    %260 = vector.extract_strided_slice %259 {offsets = [0, 0], sizes = [4, 32], strides = [1, 1]} : vector<4x64xf32> to vector<4x32xf32>
    %261 = vector.extract_strided_slice %259 {offsets = [0, 32], sizes = [4, 32], strides = [1, 1]} : vector<4x64xf32> to vector<4x32xf32>
    %262 = vector.extract_strided_slice %72 {offsets = [0, 64], sizes = [4, 32], strides = [1, 1]} : vector<4x96xf32> to vector<4x32xf32>
    %263 = vector.extract_strided_slice %251 {offsets = [0, 64], sizes = [4, 32], strides = [1, 1]} : vector<4x96xf32> to vector<4x32xf32>
    %264 = arith.mulf %260, %263 : vector<4x32xf32>
    %265 = arith.addf %262, %264 : vector<4x32xf32>
    %266 = math.tanh %265 : vector<4x32xf32>
    %cst_66 = arith.constant 1.000000e+00 : f32
    %267 = vector.broadcast %cst_66 : f32 to vector<4x32xf32>
    %268 = arith.subf %267, %261 : vector<4x32xf32>
    %269 = arith.mulf %268, %266 : vector<4x32xf32>
    %270 = arith.mulf %261, %226 : vector<4x32xf32>
    %271 = arith.addf %269, %270 : vector<4x32xf32>
    %272 = arith.truncf %271 : vector<4x32xf32> to vector<4x32xbf16>
    %cst_67 = arith.constant dense<0.000000e+00> : vector<4x192xf32>
    %273 = tpu.matmul %272, %85, %cst_67 {dimension_numbers = #tpu.dot_dimension_numbers<[1], [0], [0], [1], [0, 0, 1, 1], [], []>} : vector<4x32xbf16>, vector<32x192xbf16>, vector<4x192xf32> -> vector<4x192xf32>
    %274 = vector.extract_strided_slice %273 {offsets = [0, 0], sizes = [4, 96], strides = [1, 1]} : vector<4x192xf32> to vector<4x96xf32>
    %275 = vector.extract_strided_slice %273 {offsets = [0, 96], sizes = [4, 96], strides = [1, 1]} : vector<4x192xf32> to vector<4x96xf32>
    %276 = arith.select %2, %274, %275 : vector<4x96xi1>, vector<4x96xf32>
    %cst_68 = arith.constant dense<0.000000e+00> : vector<4xf32>
    %277 = vector.multi_reduction <add>, %276, %cst_68 [1] : vector<4x96xf32> to vector<4xf32>
    %278 = vector.shape_cast %277 : vector<4xf32> to vector<4x1xf32>
    %cst_69 = arith.constant 9.600000e+01 : f32
    %279 = vector.broadcast %cst_69 : f32 to vector<4x1xf32>
    %280 = arith.divf %278, %279 : vector<4x1xf32>
    %281 = vector.broadcast %280 : vector<4x1xf32> to vector<4x96xf32>
    %282 = arith.subf %276, %281 : vector<4x96xf32>
    %283 = arith.mulf %282, %282 : vector<4x96xf32>
    %cst_70 = arith.constant dense<0.000000e+00> : vector<4xf32>
    %284 = vector.multi_reduction <add>, %283, %cst_70 [1] : vector<4x96xf32> to vector<4xf32>
    %285 = vector.shape_cast %284 : vector<4xf32> to vector<4x1xf32>
    %cst_71 = arith.constant 9.600000e+01 : f32
    %286 = vector.broadcast %cst_71 : f32 to vector<4x1xf32>
    %287 = arith.divf %285, %286 : vector<4x1xf32>
    %288 = vector.broadcast %280 : vector<4x1xf32> to vector<4x96xf32>
    %289 = arith.subf %276, %288 : vector<4x96xf32>
    %cst_72 = arith.constant 9.99999974E-6 : f32
    %290 = vector.broadcast %cst_72 : f32 to vector<4x1xf32>
    %291 = arith.addf %287, %290 : vector<4x1xf32>
    %292 = math.rsqrt %291 : vector<4x1xf32>
    %293 = vector.broadcast %292 : vector<4x1xf32> to vector<4x96xf32>
    %294 = arith.mulf %289, %293 : vector<4x96xf32>
    %295 = arith.mulf %294, %87 : vector<4x96xf32>
    %296 = arith.addf %295, %89 : vector<4x96xf32>
    %297 = vector.extract_strided_slice %75 {offsets = [0, 0], sizes = [4, 64], strides = [1, 1]} : vector<4x96xf32> to vector<4x64xf32>
    %298 = vector.extract_strided_slice %296 {offsets = [0, 0], sizes = [4, 64], strides = [1, 1]} : vector<4x96xf32> to vector<4x64xf32>
    %299 = arith.addf %297, %298 : vector<4x64xf32>
    %300 = arith.negf %299 : vector<4x64xf32>
    %301 = math.exp %300 : vector<4x64xf32>
    %cst_73 = arith.constant 1.000000e+00 : f32
    %302 = vector.broadcast %cst_73 : f32 to vector<4x64xf32>
    %303 = arith.addf %302, %301 : vector<4x64xf32>
    %304 = arith.divf %302, %303 : vector<4x64xf32>
    %305 = vector.extract_strided_slice %304 {offsets = [0, 0], sizes = [4, 32], strides = [1, 1]} : vector<4x64xf32> to vector<4x32xf32>
    %306 = vector.extract_strided_slice %304 {offsets = [0, 32], sizes = [4, 32], strides = [1, 1]} : vector<4x64xf32> to vector<4x32xf32>
    %307 = vector.extract_strided_slice %75 {offsets = [0, 64], sizes = [4, 32], strides = [1, 1]} : vector<4x96xf32> to vector<4x32xf32>
    %308 = vector.extract_strided_slice %296 {offsets = [0, 64], sizes = [4, 32], strides = [1, 1]} : vector<4x96xf32> to vector<4x32xf32>
    %309 = arith.mulf %305, %308 : vector<4x32xf32>
    %310 = arith.addf %307, %309 : vector<4x32xf32>
    %311 = math.tanh %310 : vector<4x32xf32>
    %cst_74 = arith.constant 1.000000e+00 : f32
    %312 = vector.broadcast %cst_74 : f32 to vector<4x32xf32>
    %313 = arith.subf %312, %306 : vector<4x32xf32>
    %314 = arith.mulf %313, %311 : vector<4x32xf32>
    %315 = arith.mulf %306, %271 : vector<4x32xf32>
    %316 = arith.addf %314, %315 : vector<4x32xf32>
    %317 = arith.truncf %316 : vector<4x32xf32> to vector<4x32xbf16>
    %cst_75 = arith.constant dense<0.000000e+00> : vector<4x192xf32>
    %318 = tpu.matmul %317, %85, %cst_75 {dimension_numbers = #tpu.dot_dimension_numbers<[1], [0], [0], [1], [0, 0, 1, 1], [], []>} : vector<4x32xbf16>, vector<32x192xbf16>, vector<4x192xf32> -> vector<4x192xf32>
    %319 = vector.extract_strided_slice %318 {offsets = [0, 0], sizes = [4, 96], strides = [1, 1]} : vector<4x192xf32> to vector<4x96xf32>
    %320 = vector.extract_strided_slice %318 {offsets = [0, 96], sizes = [4, 96], strides = [1, 1]} : vector<4x192xf32> to vector<4x96xf32>
    %321 = arith.select %2, %319, %320 : vector<4x96xi1>, vector<4x96xf32>
    %cst_76 = arith.constant dense<0.000000e+00> : vector<4xf32>
    %322 = vector.multi_reduction <add>, %321, %cst_76 [1] : vector<4x96xf32> to vector<4xf32>
    %323 = vector.shape_cast %322 : vector<4xf32> to vector<4x1xf32>
    %cst_77 = arith.constant 9.600000e+01 : f32
    %324 = vector.broadcast %cst_77 : f32 to vector<4x1xf32>
    %325 = arith.divf %323, %324 : vector<4x1xf32>
    %326 = vector.broadcast %325 : vector<4x1xf32> to vector<4x96xf32>
    %327 = arith.subf %321, %326 : vector<4x96xf32>
    %328 = arith.mulf %327, %327 : vector<4x96xf32>
    %cst_78 = arith.constant dense<0.000000e+00> : vector<4xf32>
    %329 = vector.multi_reduction <add>, %328, %cst_78 [1] : vector<4x96xf32> to vector<4xf32>
    %330 = vector.shape_cast %329 : vector<4xf32> to vector<4x1xf32>
    %cst_79 = arith.constant 9.600000e+01 : f32
    %331 = vector.broadcast %cst_79 : f32 to vector<4x1xf32>
    %332 = arith.divf %330, %331 : vector<4x1xf32>
    %333 = vector.broadcast %325 : vector<4x1xf32> to vector<4x96xf32>
    %334 = arith.subf %321, %333 : vector<4x96xf32>
    %cst_80 = arith.constant 9.99999974E-6 : f32
    %335 = vector.broadcast %cst_80 : f32 to vector<4x1xf32>
    %336 = arith.addf %332, %335 : vector<4x1xf32>
    %337 = math.rsqrt %336 : vector<4x1xf32>
    %338 = vector.broadcast %337 : vector<4x1xf32> to vector<4x96xf32>
    %339 = arith.mulf %334, %338 : vector<4x96xf32>
    %340 = arith.mulf %339, %87 : vector<4x96xf32>
    %341 = arith.addf %340, %89 : vector<4x96xf32>
    %342 = vector.extract_strided_slice %78 {offsets = [0, 0], sizes = [4, 64], strides = [1, 1]} : vector<4x96xf32> to vector<4x64xf32>
    %343 = vector.extract_strided_slice %341 {offsets = [0, 0], sizes = [4, 64], strides = [1, 1]} : vector<4x96xf32> to vector<4x64xf32>
    %344 = arith.addf %342, %343 : vector<4x64xf32>
    %345 = arith.negf %344 : vector<4x64xf32>
    %346 = math.exp %345 : vector<4x64xf32>
    %cst_81 = arith.constant 1.000000e+00 : f32
    %347 = vector.broadcast %cst_81 : f32 to vector<4x64xf32>
    %348 = arith.addf %347, %346 : vector<4x64xf32>
    %349 = arith.divf %347, %348 : vector<4x64xf32>
    %350 = vector.extract_strided_slice %349 {offsets = [0, 0], sizes = [4, 32], strides = [1, 1]} : vector<4x64xf32> to vector<4x32xf32>
    %351 = vector.extract_strided_slice %349 {offsets = [0, 32], sizes = [4, 32], strides = [1, 1]} : vector<4x64xf32> to vector<4x32xf32>
    %352 = vector.extract_strided_slice %78 {offsets = [0, 64], sizes = [4, 32], strides = [1, 1]} : vector<4x96xf32> to vector<4x32xf32>
    %353 = vector.extract_strided_slice %341 {offsets = [0, 64], sizes = [4, 32], strides = [1, 1]} : vector<4x96xf32> to vector<4x32xf32>
    %354 = arith.mulf %350, %353 : vector<4x32xf32>
    %355 = arith.addf %352, %354 : vector<4x32xf32>
    %356 = math.tanh %355 : vector<4x32xf32>
    %cst_82 = arith.constant 1.000000e+00 : f32
    %357 = vector.broadcast %cst_82 : f32 to vector<4x32xf32>
    %358 = arith.subf %357, %351 : vector<4x32xf32>
    %359 = arith.mulf %358, %356 : vector<4x32xf32>
    %360 = arith.mulf %351, %316 : vector<4x32xf32>
    %361 = arith.addf %359, %360 : vector<4x32xf32>
    %362 = arith.truncf %361 : vector<4x32xf32> to vector<4x32xbf16>
    %cst_83 = arith.constant dense<0.000000e+00> : vector<4x192xf32>
    %363 = tpu.matmul %362, %85, %cst_83 {dimension_numbers = #tpu.dot_dimension_numbers<[1], [0], [0], [1], [0, 0, 1, 1], [], []>} : vector<4x32xbf16>, vector<32x192xbf16>, vector<4x192xf32> -> vector<4x192xf32>
    %364 = vector.extract_strided_slice %363 {offsets = [0, 0], sizes = [4, 96], strides = [1, 1]} : vector<4x192xf32> to vector<4x96xf32>
    %365 = vector.extract_strided_slice %363 {offsets = [0, 96], sizes = [4, 96], strides = [1, 1]} : vector<4x192xf32> to vector<4x96xf32>
    %366 = arith.select %2, %364, %365 : vector<4x96xi1>, vector<4x96xf32>
    %cst_84 = arith.constant dense<0.000000e+00> : vector<4xf32>
    %367 = vector.multi_reduction <add>, %366, %cst_84 [1] : vector<4x96xf32> to vector<4xf32>
    %368 = vector.shape_cast %367 : vector<4xf32> to vector<4x1xf32>
    %cst_85 = arith.constant 9.600000e+01 : f32
    %369 = vector.broadcast %cst_85 : f32 to vector<4x1xf32>
    %370 = arith.divf %368, %369 : vector<4x1xf32>
    %371 = vector.broadcast %370 : vector<4x1xf32> to vector<4x96xf32>
    %372 = arith.subf %366, %371 : vector<4x96xf32>
    %373 = arith.mulf %372, %372 : vector<4x96xf32>
    %cst_86 = arith.constant dense<0.000000e+00> : vector<4xf32>
    %374 = vector.multi_reduction <add>, %373, %cst_86 [1] : vector<4x96xf32> to vector<4xf32>
    %375 = vector.shape_cast %374 : vector<4xf32> to vector<4x1xf32>
    %cst_87 = arith.constant 9.600000e+01 : f32
    %376 = vector.broadcast %cst_87 : f32 to vector<4x1xf32>
    %377 = arith.divf %375, %376 : vector<4x1xf32>
    %378 = vector.broadcast %370 : vector<4x1xf32> to vector<4x96xf32>
    %379 = arith.subf %366, %378 : vector<4x96xf32>
    %cst_88 = arith.constant 9.99999974E-6 : f32
    %380 = vector.broadcast %cst_88 : f32 to vector<4x1xf32>
    %381 = arith.addf %377, %380 : vector<4x1xf32>
    %382 = math.rsqrt %381 : vector<4x1xf32>
    %383 = vector.broadcast %382 : vector<4x1xf32> to vector<4x96xf32>
    %384 = arith.mulf %379, %383 : vector<4x96xf32>
    %385 = arith.mulf %384, %87 : vector<4x96xf32>
    %386 = arith.addf %385, %89 : vector<4x96xf32>
    %387 = vector.extract_strided_slice %81 {offsets = [0, 0], sizes = [4, 64], strides = [1, 1]} : vector<4x96xf32> to vector<4x64xf32>
    %388 = vector.extract_strided_slice %386 {offsets = [0, 0], sizes = [4, 64], strides = [1, 1]} : vector<4x96xf32> to vector<4x64xf32>
    %389 = arith.addf %387, %388 : vector<4x64xf32>
    %390 = arith.negf %389 : vector<4x64xf32>
    %391 = math.exp %390 : vector<4x64xf32>
    %cst_89 = arith.constant 1.000000e+00 : f32
    %392 = vector.broadcast %cst_89 : f32 to vector<4x64xf32>
    %393 = arith.addf %392, %391 : vector<4x64xf32>
    %394 = arith.divf %392, %393 : vector<4x64xf32>
    %395 = vector.extract_strided_slice %394 {offsets = [0, 0], sizes = [4, 32], strides = [1, 1]} : vector<4x64xf32> to vector<4x32xf32>
    %396 = vector.extract_strided_slice %394 {offsets = [0, 32], sizes = [4, 32], strides = [1, 1]} : vector<4x64xf32> to vector<4x32xf32>
    %397 = vector.extract_strided_slice %81 {offsets = [0, 64], sizes = [4, 32], strides = [1, 1]} : vector<4x96xf32> to vector<4x32xf32>
    %398 = vector.extract_strided_slice %386 {offsets = [0, 64], sizes = [4, 32], strides = [1, 1]} : vector<4x96xf32> to vector<4x32xf32>
    %399 = arith.mulf %395, %398 : vector<4x32xf32>
    %400 = arith.addf %397, %399 : vector<4x32xf32>
    %401 = math.tanh %400 : vector<4x32xf32>
    %cst_90 = arith.constant 1.000000e+00 : f32
    %402 = vector.broadcast %cst_90 : f32 to vector<4x32xf32>
    %403 = arith.subf %402, %396 : vector<4x32xf32>
    %404 = arith.mulf %403, %401 : vector<4x32xf32>
    %405 = arith.mulf %396, %361 : vector<4x32xf32>
    %406 = arith.addf %404, %405 : vector<4x32xf32>
    %407 = arith.truncf %406 : vector<4x32xf32> to vector<4x32xbf16>
    %cst_91 = arith.constant dense<0.000000e+00> : vector<4x192xf32>
    %408 = tpu.matmul %407, %85, %cst_91 {dimension_numbers = #tpu.dot_dimension_numbers<[1], [0], [0], [1], [0, 0, 1, 1], [], []>} : vector<4x32xbf16>, vector<32x192xbf16>, vector<4x192xf32> -> vector<4x192xf32>
    %409 = vector.extract_strided_slice %408 {offsets = [0, 0], sizes = [4, 96], strides = [1, 1]} : vector<4x192xf32> to vector<4x96xf32>
    %410 = vector.extract_strided_slice %408 {offsets = [0, 96], sizes = [4, 96], strides = [1, 1]} : vector<4x192xf32> to vector<4x96xf32>
    %411 = arith.select %2, %409, %410 : vector<4x96xi1>, vector<4x96xf32>
    %cst_92 = arith.constant dense<0.000000e+00> : vector<4xf32>
    %412 = vector.multi_reduction <add>, %411, %cst_92 [1] : vector<4x96xf32> to vector<4xf32>
    %413 = vector.shape_cast %412 : vector<4xf32> to vector<4x1xf32>
    %cst_93 = arith.constant 9.600000e+01 : f32
    %414 = vector.broadcast %cst_93 : f32 to vector<4x1xf32>
    %415 = arith.divf %413, %414 : vector<4x1xf32>
    %416 = vector.broadcast %415 : vector<4x1xf32> to vector<4x96xf32>
    %417 = arith.subf %411, %416 : vector<4x96xf32>
    %418 = arith.mulf %417, %417 : vector<4x96xf32>
    %cst_94 = arith.constant dense<0.000000e+00> : vector<4xf32>
    %419 = vector.multi_reduction <add>, %418, %cst_94 [1] : vector<4x96xf32> to vector<4xf32>
    %420 = vector.shape_cast %419 : vector<4xf32> to vector<4x1xf32>
    %cst_95 = arith.constant 9.600000e+01 : f32
    %421 = vector.broadcast %cst_95 : f32 to vector<4x1xf32>
    %422 = arith.divf %420, %421 : vector<4x1xf32>
    %423 = vector.broadcast %415 : vector<4x1xf32> to vector<4x96xf32>
    %424 = arith.subf %411, %423 : vector<4x96xf32>
    %cst_96 = arith.constant 9.99999974E-6 : f32
    %425 = vector.broadcast %cst_96 : f32 to vector<4x1xf32>
    %426 = arith.addf %422, %425 : vector<4x1xf32>
    %427 = math.rsqrt %426 : vector<4x1xf32>
    %428 = vector.broadcast %427 : vector<4x1xf32> to vector<4x96xf32>
    %429 = arith.mulf %424, %428 : vector<4x96xf32>
    %430 = arith.mulf %429, %87 : vector<4x96xf32>
    %431 = arith.addf %430, %89 : vector<4x96xf32>
    %432 = vector.extract_strided_slice %84 {offsets = [0, 0], sizes = [4, 64], strides = [1, 1]} : vector<4x96xf32> to vector<4x64xf32>
    %433 = vector.extract_strided_slice %431 {offsets = [0, 0], sizes = [4, 64], strides = [1, 1]} : vector<4x96xf32> to vector<4x64xf32>
    %434 = arith.addf %432, %433 : vector<4x64xf32>
    %435 = arith.negf %434 : vector<4x64xf32>
    %436 = math.exp %435 : vector<4x64xf32>
    %cst_97 = arith.constant 1.000000e+00 : f32
    %437 = vector.broadcast %cst_97 : f32 to vector<4x64xf32>
    %438 = arith.addf %437, %436 : vector<4x64xf32>
    %439 = arith.divf %437, %438 : vector<4x64xf32>
    %440 = vector.extract_strided_slice %439 {offsets = [0, 0], sizes = [4, 32], strides = [1, 1]} : vector<4x64xf32> to vector<4x32xf32>
    %441 = vector.extract_strided_slice %439 {offsets = [0, 32], sizes = [4, 32], strides = [1, 1]} : vector<4x64xf32> to vector<4x32xf32>
    %442 = vector.extract_strided_slice %84 {offsets = [0, 64], sizes = [4, 32], strides = [1, 1]} : vector<4x96xf32> to vector<4x32xf32>
    %443 = vector.extract_strided_slice %431 {offsets = [0, 64], sizes = [4, 32], strides = [1, 1]} : vector<4x96xf32> to vector<4x32xf32>
    %444 = arith.mulf %440, %443 : vector<4x32xf32>
    %445 = arith.addf %442, %444 : vector<4x32xf32>
    %446 = math.tanh %445 : vector<4x32xf32>
    %cst_98 = arith.constant 1.000000e+00 : f32
    %447 = vector.broadcast %cst_98 : f32 to vector<4x32xf32>
    %448 = arith.subf %447, %441 : vector<4x32xf32>
    %449 = arith.mulf %448, %446 : vector<4x32xf32>
    %450 = arith.mulf %441, %406 : vector<4x32xf32>
    %451 = arith.addf %449, %450 : vector<4x32xf32>
    %452 = vector.extract_strided_slice %136 {offsets = [0, 0], sizes = [2, 32], strides = [1, 1]} : vector<4x32xf32> to vector<2x32xf32>
    %453 = vector.extract_strided_slice %451 {offsets = [2, 0], sizes = [2, 32], strides = [1, 1]} : vector<4x32xf32> to vector<2x32xf32>
    %454 = tpu.concatenate %452, %453 in 1 : vector<2x32xf32>, vector<2x32xf32> -> vector<2x64xf32>
    %455 = vector.extract_strided_slice %181 {offsets = [0, 0], sizes = [2, 32], strides = [1, 1]} : vector<4x32xf32> to vector<2x32xf32>
    %456 = vector.extract_strided_slice %406 {offsets = [2, 0], sizes = [2, 32], strides = [1, 1]} : vector<4x32xf32> to vector<2x32xf32>
    %457 = tpu.concatenate %455, %456 in 1 : vector<2x32xf32>, vector<2x32xf32> -> vector<2x64xf32>
    %458 = vector.extract_strided_slice %226 {offsets = [0, 0], sizes = [2, 32], strides = [1, 1]} : vector<4x32xf32> to vector<2x32xf32>
    %459 = vector.extract_strided_slice %361 {offsets = [2, 0], sizes = [2, 32], strides = [1, 1]} : vector<4x32xf32> to vector<2x32xf32>
    %460 = tpu.concatenate %458, %459 in 1 : vector<2x32xf32>, vector<2x32xf32> -> vector<2x64xf32>
    %461 = vector.extract_strided_slice %271 {offsets = [0, 0], sizes = [2, 32], strides = [1, 1]} : vector<4x32xf32> to vector<2x32xf32>
    %462 = vector.extract_strided_slice %316 {offsets = [2, 0], sizes = [2, 32], strides = [1, 1]} : vector<4x32xf32> to vector<2x32xf32>
    %463 = tpu.concatenate %461, %462 in 1 : vector<2x32xf32>, vector<2x32xf32> -> vector<2x64xf32>
    %464 = vector.extract_strided_slice %316 {offsets = [0, 0], sizes = [2, 32], strides = [1, 1]} : vector<4x32xf32> to vector<2x32xf32>
    %465 = vector.extract_strided_slice %271 {offsets = [2, 0], sizes = [2, 32], strides = [1, 1]} : vector<4x32xf32> to vector<2x32xf32>
    %466 = tpu.concatenate %464, %465 in 1 : vector<2x32xf32>, vector<2x32xf32> -> vector<2x64xf32>
    %467 = vector.extract_strided_slice %361 {offsets = [0, 0], sizes = [2, 32], strides = [1, 1]} : vector<4x32xf32> to vector<2x32xf32>
    %468 = vector.extract_strided_slice %226 {offsets = [2, 0], sizes = [2, 32], strides = [1, 1]} : vector<4x32xf32> to vector<2x32xf32>
    %469 = tpu.concatenate %467, %468 in 1 : vector<2x32xf32>, vector<2x32xf32> -> vector<2x64xf32>
    %470 = vector.extract_strided_slice %406 {offsets = [0, 0], sizes = [2, 32], strides = [1, 1]} : vector<4x32xf32> to vector<2x32xf32>
    %471 = vector.extract_strided_slice %181 {offsets = [2, 0], sizes = [2, 32], strides = [1, 1]} : vector<4x32xf32> to vector<2x32xf32>
    %472 = tpu.concatenate %470, %471 in 1 : vector<2x32xf32>, vector<2x32xf32> -> vector<2x64xf32>
    %473 = vector.extract_strided_slice %451 {offsets = [0, 0], sizes = [2, 32], strides = [1, 1]} : vector<4x32xf32> to vector<2x32xf32>
    %474 = vector.extract_strided_slice %136 {offsets = [2, 0], sizes = [2, 32], strides = [1, 1]} : vector<4x32xf32> to vector<2x32xf32>
    %475 = tpu.concatenate %473, %474 in 1 : vector<2x32xf32>, vector<2x32xf32> -> vector<2x64xf32>
    %476 = tpu.concatenate %454, %457, %460, %463, %466, %469, %472, %475 in 0 : vector<2x64xf32>, vector<2x64xf32>, vector<2x64xf32>, vector<2x64xf32>, vector<2x64xf32>, vector<2x64xf32>, vector<2x64xf32>, vector<2x64xf32> -> vector<16x64xf32>
    %477 = arith.truncf %476 : vector<16x64xf32> to vector<16x64xbf16>
    %c0_99 = arith.constant 0 : index
    %c0_100 = arith.constant 0 : index
    %478 = vector.load %arg7[%c0_99, %c0_100] : memref<64x192xbf16, #tpu.memory_space<vmem>>, vector<64x192xbf16>
    %cst_101 = arith.constant dense<0.000000e+00> : vector<16x192xf32>
    %479 = tpu.matmul %477, %478, %cst_101 {dimension_numbers = #tpu.dot_dimension_numbers<[1], [0], [0], [1], [0, 0, 1, 1], [], []>} : vector<16x64xbf16>, vector<64x192xbf16>, vector<16x192xf32> -> vector<16x192xf32>
    %480 = vector.extract_strided_slice %479 {offsets = [0, 0], sizes = [16, 96], strides = [1, 1]} : vector<16x192xf32> to vector<16x96xf32>
    %c0_102 = arith.constant 0 : index
    %c0_103 = arith.constant 0 : index
    %c0_104 = arith.constant 0 : index
    %481 = vector.load %arg9[%c0_102, %c0_103, %c0_104] : memref<2x2x96xf32, #tpu.memory_space<vmem>>, vector<1x1x96xf32>
    %482 = vector.shape_cast %481 : vector<1x1x96xf32> to vector<1x96xf32>
    %c0_105 = arith.constant 0 : index
    %c1_106 = arith.constant 1 : index
    %c0_107 = arith.constant 0 : index
    %483 = vector.load %arg9[%c0_105, %c1_106, %c0_107] : memref<2x2x96xf32, #tpu.memory_space<vmem>>, vector<1x1x96xf32>
    %484 = vector.shape_cast %483 : vector<1x1x96xf32> to vector<1x96xf32>
    %cst_108 = arith.constant dense<0.000000e+00> : vector<16xf32>
    %485 = vector.multi_reduction <add>, %480, %cst_108 [1] : vector<16x96xf32> to vector<16xf32>
    %486 = vector.shape_cast %485 : vector<16xf32> to vector<16x1xf32>
    %cst_109 = arith.constant 9.600000e+01 : f32
    %487 = vector.broadcast %cst_109 : f32 to vector<16x1xf32>
    %488 = arith.divf %486, %487 : vector<16x1xf32>
    %489 = vector.broadcast %488 : vector<16x1xf32> to vector<16x96xf32>
    %490 = arith.subf %480, %489 : vector<16x96xf32>
    %491 = arith.mulf %490, %490 : vector<16x96xf32>
    %cst_110 = arith.constant dense<0.000000e+00> : vector<16xf32>
    %492 = vector.multi_reduction <add>, %491, %cst_110 [1] : vector<16x96xf32> to vector<16xf32>
    %493 = vector.shape_cast %492 : vector<16xf32> to vector<16x1xf32>
    %cst_111 = arith.constant 9.600000e+01 : f32
    %494 = vector.broadcast %cst_111 : f32 to vector<16x1xf32>
    %495 = arith.divf %493, %494 : vector<16x1xf32>
    %496 = vector.broadcast %488 : vector<16x1xf32> to vector<16x96xf32>
    %497 = arith.subf %480, %496 : vector<16x96xf32>
    %cst_112 = arith.constant 9.99999974E-6 : f32
    %498 = vector.broadcast %cst_112 : f32 to vector<16x1xf32>
    %499 = arith.addf %495, %498 : vector<16x1xf32>
    %500 = math.rsqrt %499 : vector<16x1xf32>
    %501 = vector.broadcast %500 : vector<16x1xf32> to vector<16x96xf32>
    %502 = arith.mulf %497, %501 : vector<16x96xf32>
    %503 = vector.broadcast %482 : vector<1x96xf32> to vector<16x96xf32>
    %504 = arith.mulf %502, %503 : vector<16x96xf32>
    %505 = vector.broadcast %484 : vector<1x96xf32> to vector<16x96xf32>
    %506 = arith.addf %504, %505 : vector<16x96xf32>
    %507 = vector.extract_strided_slice %479 {offsets = [0, 96], sizes = [16, 96], strides = [1, 1]} : vector<16x192xf32> to vector<16x96xf32>
    %c1_113 = arith.constant 1 : index
    %c0_114 = arith.constant 0 : index
    %c0_115 = arith.constant 0 : index
    %508 = vector.load %arg9[%c1_113, %c0_114, %c0_115] : memref<2x2x96xf32, #tpu.memory_space<vmem>>, vector<1x1x96xf32>
    %509 = vector.shape_cast %508 : vector<1x1x96xf32> to vector<1x96xf32>
    %c1_116 = arith.constant 1 : index
    %c1_117 = arith.constant 1 : index
    %c0_118 = arith.constant 0 : index
    %510 = vector.load %arg9[%c1_116, %c1_117, %c0_118] : memref<2x2x96xf32, #tpu.memory_space<vmem>>, vector<1x1x96xf32>
    %511 = vector.shape_cast %510 : vector<1x1x96xf32> to vector<1x96xf32>
    %cst_119 = arith.constant dense<0.000000e+00> : vector<16xf32>
    %512 = vector.multi_reduction <add>, %507, %cst_119 [1] : vector<16x96xf32> to vector<16xf32>
    %513 = vector.shape_cast %512 : vector<16xf32> to vector<16x1xf32>
    %cst_120 = arith.constant 9.600000e+01 : f32
    %514 = vector.broadcast %cst_120 : f32 to vector<16x1xf32>
    %515 = arith.divf %513, %514 : vector<16x1xf32>
    %516 = vector.broadcast %515 : vector<16x1xf32> to vector<16x96xf32>
    %517 = arith.subf %507, %516 : vector<16x96xf32>
    %518 = arith.mulf %517, %517 : vector<16x96xf32>
    %cst_121 = arith.constant dense<0.000000e+00> : vector<16xf32>
    %519 = vector.multi_reduction <add>, %518, %cst_121 [1] : vector<16x96xf32> to vector<16xf32>
    %520 = vector.shape_cast %519 : vector<16xf32> to vector<16x1xf32>
    %cst_122 = arith.constant 9.600000e+01 : f32
    %521 = vector.broadcast %cst_122 : f32 to vector<16x1xf32>
    %522 = arith.divf %520, %521 : vector<16x1xf32>
    %523 = vector.broadcast %515 : vector<16x1xf32> to vector<16x96xf32>
    %524 = arith.subf %507, %523 : vector<16x96xf32>
    %cst_123 = arith.constant 9.99999974E-6 : f32
    %525 = vector.broadcast %cst_123 : f32 to vector<16x1xf32>
    %526 = arith.addf %522, %525 : vector<16x1xf32>
    %527 = math.rsqrt %526 : vector<16x1xf32>
    %528 = vector.broadcast %527 : vector<16x1xf32> to vector<16x96xf32>
    %529 = arith.mulf %524, %528 : vector<16x96xf32>
    %530 = vector.broadcast %509 : vector<1x96xf32> to vector<16x96xf32>
    %531 = arith.mulf %529, %530 : vector<16x96xf32>
    %532 = vector.broadcast %511 : vector<1x96xf32> to vector<16x96xf32>
    %533 = arith.addf %531, %532 : vector<16x96xf32>
    %534 = vector.extract_strided_slice %506 {offsets = [0, 0], sizes = [2, 96], strides = [1, 1]} : vector<16x96xf32> to vector<2x96xf32>
    %535 = vector.extract_strided_slice %533 {offsets = [14, 0], sizes = [2, 96], strides = [1, 1]} : vector<16x96xf32> to vector<2x96xf32>
    %536 = tpu.concatenate %534, %535 in 0 : vector<2x96xf32>, vector<2x96xf32> -> vector<4x96xf32>
    %537 = vector.extract_strided_slice %506 {offsets = [2, 0], sizes = [2, 96], strides = [1, 1]} : vector<16x96xf32> to vector<2x96xf32>
    %538 = vector.extract_strided_slice %533 {offsets = [12, 0], sizes = [2, 96], strides = [1, 1]} : vector<16x96xf32> to vector<2x96xf32>
    %539 = tpu.concatenate %537, %538 in 0 : vector<2x96xf32>, vector<2x96xf32> -> vector<4x96xf32>
    %540 = vector.extract_strided_slice %506 {offsets = [4, 0], sizes = [2, 96], strides = [1, 1]} : vector<16x96xf32> to vector<2x96xf32>
    %541 = vector.extract_strided_slice %533 {offsets = [10, 0], sizes = [2, 96], strides = [1, 1]} : vector<16x96xf32> to vector<2x96xf32>
    %542 = tpu.concatenate %540, %541 in 0 : vector<2x96xf32>, vector<2x96xf32> -> vector<4x96xf32>
    %543 = vector.extract_strided_slice %506 {offsets = [6, 0], sizes = [2, 96], strides = [1, 1]} : vector<16x96xf32> to vector<2x96xf32>
    %544 = vector.extract_strided_slice %533 {offsets = [8, 0], sizes = [2, 96], strides = [1, 1]} : vector<16x96xf32> to vector<2x96xf32>
    %545 = tpu.concatenate %543, %544 in 0 : vector<2x96xf32>, vector<2x96xf32> -> vector<4x96xf32>
    %546 = vector.extract_strided_slice %506 {offsets = [8, 0], sizes = [2, 96], strides = [1, 1]} : vector<16x96xf32> to vector<2x96xf32>
    %547 = vector.extract_strided_slice %533 {offsets = [6, 0], sizes = [2, 96], strides = [1, 1]} : vector<16x96xf32> to vector<2x96xf32>
    %548 = tpu.concatenate %546, %547 in 0 : vector<2x96xf32>, vector<2x96xf32> -> vector<4x96xf32>
    %549 = vector.extract_strided_slice %506 {offsets = [10, 0], sizes = [2, 96], strides = [1, 1]} : vector<16x96xf32> to vector<2x96xf32>
    %550 = vector.extract_strided_slice %533 {offsets = [4, 0], sizes = [2, 96], strides = [1, 1]} : vector<16x96xf32> to vector<2x96xf32>
    %551 = tpu.concatenate %549, %550 in 0 : vector<2x96xf32>, vector<2x96xf32> -> vector<4x96xf32>
    %552 = vector.extract_strided_slice %506 {offsets = [12, 0], sizes = [2, 96], strides = [1, 1]} : vector<16x96xf32> to vector<2x96xf32>
    %553 = vector.extract_strided_slice %533 {offsets = [2, 0], sizes = [2, 96], strides = [1, 1]} : vector<16x96xf32> to vector<2x96xf32>
    %554 = tpu.concatenate %552, %553 in 0 : vector<2x96xf32>, vector<2x96xf32> -> vector<4x96xf32>
    %555 = vector.extract_strided_slice %506 {offsets = [14, 0], sizes = [2, 96], strides = [1, 1]} : vector<16x96xf32> to vector<2x96xf32>
    %556 = vector.extract_strided_slice %533 {offsets = [0, 0], sizes = [2, 96], strides = [1, 1]} : vector<16x96xf32> to vector<2x96xf32>
    %557 = tpu.concatenate %555, %556 in 0 : vector<2x96xf32>, vector<2x96xf32> -> vector<4x96xf32>
    %c0_124 = arith.constant 0 : index
    %c0_125 = arith.constant 0 : index
    %558 = vector.load %arg8[%c0_124, %c0_125] : memref<32x192xbf16, #tpu.memory_space<vmem>>, vector<32x192xbf16>
    %c0_126 = arith.constant 0 : index
    %c0_127 = arith.constant 0 : index
    %c0_128 = arith.constant 0 : index
    %559 = vector.load %arg10[%c0_126, %c0_127, %c0_128] : memref<2x4x96xf32, #tpu.memory_space<vmem>>, vector<1x4x96xf32>
    %560 = vector.shape_cast %559 : vector<1x4x96xf32> to vector<4x96xf32>
    %c1_129 = arith.constant 1 : index
    %c0_130 = arith.constant 0 : index
    %c0_131 = arith.constant 0 : index
    %561 = vector.load %arg10[%c1_129, %c0_130, %c0_131] : memref<2x4x96xf32, #tpu.memory_space<vmem>>, vector<1x4x96xf32>
    %562 = vector.shape_cast %561 : vector<1x4x96xf32> to vector<4x96xf32>
    %c1_132 = arith.constant 1 : index
    %c0_133 = arith.constant 0 : index
    %c0_134 = arith.constant 0 : index
    %563 = vector.load %arg11[%c1_132, %c0_133, %c0_134] : memref<2x4x32xf32, #tpu.memory_space<vmem>>, vector<1x4x32xf32>
    %564 = vector.shape_cast %563 : vector<1x4x32xf32> to vector<4x32xf32>
    %565 = arith.truncf %564 : vector<4x32xf32> to vector<4x32xbf16>
    %cst_135 = arith.constant dense<0.000000e+00> : vector<4x192xf32>
    %566 = tpu.matmul %565, %558, %cst_135 {dimension_numbers = #tpu.dot_dimension_numbers<[1], [0], [0], [1], [0, 0, 1, 1], [], []>} : vector<4x32xbf16>, vector<32x192xbf16>, vector<4x192xf32> -> vector<4x192xf32>
    %567 = vector.extract_strided_slice %566 {offsets = [0, 0], sizes = [4, 96], strides = [1, 1]} : vector<4x192xf32> to vector<4x96xf32>
    %568 = vector.extract_strided_slice %566 {offsets = [0, 96], sizes = [4, 96], strides = [1, 1]} : vector<4x192xf32> to vector<4x96xf32>
    %569 = arith.select %2, %567, %568 : vector<4x96xi1>, vector<4x96xf32>
    %cst_136 = arith.constant dense<0.000000e+00> : vector<4xf32>
    %570 = vector.multi_reduction <add>, %569, %cst_136 [1] : vector<4x96xf32> to vector<4xf32>
    %571 = vector.shape_cast %570 : vector<4xf32> to vector<4x1xf32>
    %cst_137 = arith.constant 9.600000e+01 : f32
    %572 = vector.broadcast %cst_137 : f32 to vector<4x1xf32>
    %573 = arith.divf %571, %572 : vector<4x1xf32>
    %574 = vector.broadcast %573 : vector<4x1xf32> to vector<4x96xf32>
    %575 = arith.subf %569, %574 : vector<4x96xf32>
    %576 = arith.mulf %575, %575 : vector<4x96xf32>
    %cst_138 = arith.constant dense<0.000000e+00> : vector<4xf32>
    %577 = vector.multi_reduction <add>, %576, %cst_138 [1] : vector<4x96xf32> to vector<4xf32>
    %578 = vector.shape_cast %577 : vector<4xf32> to vector<4x1xf32>
    %cst_139 = arith.constant 9.600000e+01 : f32
    %579 = vector.broadcast %cst_139 : f32 to vector<4x1xf32>
    %580 = arith.divf %578, %579 : vector<4x1xf32>
    %581 = vector.broadcast %573 : vector<4x1xf32> to vector<4x96xf32>
    %582 = arith.subf %569, %581 : vector<4x96xf32>
    %cst_140 = arith.constant 9.99999974E-6 : f32
    %583 = vector.broadcast %cst_140 : f32 to vector<4x1xf32>
    %584 = arith.addf %580, %583 : vector<4x1xf32>
    %585 = math.rsqrt %584 : vector<4x1xf32>
    %586 = vector.broadcast %585 : vector<4x1xf32> to vector<4x96xf32>
    %587 = arith.mulf %582, %586 : vector<4x96xf32>
    %588 = arith.mulf %587, %560 : vector<4x96xf32>
    %589 = arith.addf %588, %562 : vector<4x96xf32>
    %590 = vector.extract_strided_slice %536 {offsets = [0, 0], sizes = [4, 64], strides = [1, 1]} : vector<4x96xf32> to vector<4x64xf32>
    %591 = vector.extract_strided_slice %589 {offsets = [0, 0], sizes = [4, 64], strides = [1, 1]} : vector<4x96xf32> to vector<4x64xf32>
    %592 = arith.addf %590, %591 : vector<4x64xf32>
    %593 = arith.negf %592 : vector<4x64xf32>
    %594 = math.exp %593 : vector<4x64xf32>
    %cst_141 = arith.constant 1.000000e+00 : f32
    %595 = vector.broadcast %cst_141 : f32 to vector<4x64xf32>
    %596 = arith.addf %595, %594 : vector<4x64xf32>
    %597 = arith.divf %595, %596 : vector<4x64xf32>
    %598 = vector.extract_strided_slice %597 {offsets = [0, 0], sizes = [4, 32], strides = [1, 1]} : vector<4x64xf32> to vector<4x32xf32>
    %599 = vector.extract_strided_slice %597 {offsets = [0, 32], sizes = [4, 32], strides = [1, 1]} : vector<4x64xf32> to vector<4x32xf32>
    %600 = vector.extract_strided_slice %536 {offsets = [0, 64], sizes = [4, 32], strides = [1, 1]} : vector<4x96xf32> to vector<4x32xf32>
    %601 = vector.extract_strided_slice %589 {offsets = [0, 64], sizes = [4, 32], strides = [1, 1]} : vector<4x96xf32> to vector<4x32xf32>
    %602 = arith.mulf %598, %601 : vector<4x32xf32>
    %603 = arith.addf %600, %602 : vector<4x32xf32>
    %604 = math.tanh %603 : vector<4x32xf32>
    %cst_142 = arith.constant 1.000000e+00 : f32
    %605 = vector.broadcast %cst_142 : f32 to vector<4x32xf32>
    %606 = arith.subf %605, %599 : vector<4x32xf32>
    %607 = arith.mulf %606, %604 : vector<4x32xf32>
    %608 = arith.mulf %599, %564 : vector<4x32xf32>
    %609 = arith.addf %607, %608 : vector<4x32xf32>
    %610 = arith.truncf %609 : vector<4x32xf32> to vector<4x32xbf16>
    %cst_143 = arith.constant dense<0.000000e+00> : vector<4x192xf32>
    %611 = tpu.matmul %610, %558, %cst_143 {dimension_numbers = #tpu.dot_dimension_numbers<[1], [0], [0], [1], [0, 0, 1, 1], [], []>} : vector<4x32xbf16>, vector<32x192xbf16>, vector<4x192xf32> -> vector<4x192xf32>
    %612 = vector.extract_strided_slice %611 {offsets = [0, 0], sizes = [4, 96], strides = [1, 1]} : vector<4x192xf32> to vector<4x96xf32>
    %613 = vector.extract_strided_slice %611 {offsets = [0, 96], sizes = [4, 96], strides = [1, 1]} : vector<4x192xf32> to vector<4x96xf32>
    %614 = arith.select %2, %612, %613 : vector<4x96xi1>, vector<4x96xf32>
    %cst_144 = arith.constant dense<0.000000e+00> : vector<4xf32>
    %615 = vector.multi_reduction <add>, %614, %cst_144 [1] : vector<4x96xf32> to vector<4xf32>
    %616 = vector.shape_cast %615 : vector<4xf32> to vector<4x1xf32>
    %cst_145 = arith.constant 9.600000e+01 : f32
    %617 = vector.broadcast %cst_145 : f32 to vector<4x1xf32>
    %618 = arith.divf %616, %617 : vector<4x1xf32>
    %619 = vector.broadcast %618 : vector<4x1xf32> to vector<4x96xf32>
    %620 = arith.subf %614, %619 : vector<4x96xf32>
    %621 = arith.mulf %620, %620 : vector<4x96xf32>
    %cst_146 = arith.constant dense<0.000000e+00> : vector<4xf32>
    %622 = vector.multi_reduction <add>, %621, %cst_146 [1] : vector<4x96xf32> to vector<4xf32>
    %623 = vector.shape_cast %622 : vector<4xf32> to vector<4x1xf32>
    %cst_147 = arith.constant 9.600000e+01 : f32
    %624 = vector.broadcast %cst_147 : f32 to vector<4x1xf32>
    %625 = arith.divf %623, %624 : vector<4x1xf32>
    %626 = vector.broadcast %618 : vector<4x1xf32> to vector<4x96xf32>
    %627 = arith.subf %614, %626 : vector<4x96xf32>
    %cst_148 = arith.constant 9.99999974E-6 : f32
    %628 = vector.broadcast %cst_148 : f32 to vector<4x1xf32>
    %629 = arith.addf %625, %628 : vector<4x1xf32>
    %630 = math.rsqrt %629 : vector<4x1xf32>
    %631 = vector.broadcast %630 : vector<4x1xf32> to vector<4x96xf32>
    %632 = arith.mulf %627, %631 : vector<4x96xf32>
    %633 = arith.mulf %632, %560 : vector<4x96xf32>
    %634 = arith.addf %633, %562 : vector<4x96xf32>
    %635 = vector.extract_strided_slice %539 {offsets = [0, 0], sizes = [4, 64], strides = [1, 1]} : vector<4x96xf32> to vector<4x64xf32>
    %636 = vector.extract_strided_slice %634 {offsets = [0, 0], sizes = [4, 64], strides = [1, 1]} : vector<4x96xf32> to vector<4x64xf32>
    %637 = arith.addf %635, %636 : vector<4x64xf32>
    %638 = arith.negf %637 : vector<4x64xf32>
    %639 = math.exp %638 : vector<4x64xf32>
    %cst_149 = arith.constant 1.000000e+00 : f32
    %640 = vector.broadcast %cst_149 : f32 to vector<4x64xf32>
    %641 = arith.addf %640, %639 : vector<4x64xf32>
    %642 = arith.divf %640, %641 : vector<4x64xf32>
    %643 = vector.extract_strided_slice %642 {offsets = [0, 0], sizes = [4, 32], strides = [1, 1]} : vector<4x64xf32> to vector<4x32xf32>
    %644 = vector.extract_strided_slice %642 {offsets = [0, 32], sizes = [4, 32], strides = [1, 1]} : vector<4x64xf32> to vector<4x32xf32>
    %645 = vector.extract_strided_slice %539 {offsets = [0, 64], sizes = [4, 32], strides = [1, 1]} : vector<4x96xf32> to vector<4x32xf32>
    %646 = vector.extract_strided_slice %634 {offsets = [0, 64], sizes = [4, 32], strides = [1, 1]} : vector<4x96xf32> to vector<4x32xf32>
    %647 = arith.mulf %643, %646 : vector<4x32xf32>
    %648 = arith.addf %645, %647 : vector<4x32xf32>
    %649 = math.tanh %648 : vector<4x32xf32>
    %cst_150 = arith.constant 1.000000e+00 : f32
    %650 = vector.broadcast %cst_150 : f32 to vector<4x32xf32>
    %651 = arith.subf %650, %644 : vector<4x32xf32>
    %652 = arith.mulf %651, %649 : vector<4x32xf32>
    %653 = arith.mulf %644, %609 : vector<4x32xf32>
    %654 = arith.addf %652, %653 : vector<4x32xf32>
    %655 = arith.truncf %654 : vector<4x32xf32> to vector<4x32xbf16>
    %cst_151 = arith.constant dense<0.000000e+00> : vector<4x192xf32>
    %656 = tpu.matmul %655, %558, %cst_151 {dimension_numbers = #tpu.dot_dimension_numbers<[1], [0], [0], [1], [0, 0, 1, 1], [], []>} : vector<4x32xbf16>, vector<32x192xbf16>, vector<4x192xf32> -> vector<4x192xf32>
    %657 = vector.extract_strided_slice %656 {offsets = [0, 0], sizes = [4, 96], strides = [1, 1]} : vector<4x192xf32> to vector<4x96xf32>
    %658 = vector.extract_strided_slice %656 {offsets = [0, 96], sizes = [4, 96], strides = [1, 1]} : vector<4x192xf32> to vector<4x96xf32>
    %659 = arith.select %2, %657, %658 : vector<4x96xi1>, vector<4x96xf32>
    %cst_152 = arith.constant dense<0.000000e+00> : vector<4xf32>
    %660 = vector.multi_reduction <add>, %659, %cst_152 [1] : vector<4x96xf32> to vector<4xf32>
    %661 = vector.shape_cast %660 : vector<4xf32> to vector<4x1xf32>
    %cst_153 = arith.constant 9.600000e+01 : f32
    %662 = vector.broadcast %cst_153 : f32 to vector<4x1xf32>
    %663 = arith.divf %661, %662 : vector<4x1xf32>
    %664 = vector.broadcast %663 : vector<4x1xf32> to vector<4x96xf32>
    %665 = arith.subf %659, %664 : vector<4x96xf32>
    %666 = arith.mulf %665, %665 : vector<4x96xf32>
    %cst_154 = arith.constant dense<0.000000e+00> : vector<4xf32>
    %667 = vector.multi_reduction <add>, %666, %cst_154 [1] : vector<4x96xf32> to vector<4xf32>
    %668 = vector.shape_cast %667 : vector<4xf32> to vector<4x1xf32>
    %cst_155 = arith.constant 9.600000e+01 : f32
    %669 = vector.broadcast %cst_155 : f32 to vector<4x1xf32>
    %670 = arith.divf %668, %669 : vector<4x1xf32>
    %671 = vector.broadcast %663 : vector<4x1xf32> to vector<4x96xf32>
    %672 = arith.subf %659, %671 : vector<4x96xf32>
    %cst_156 = arith.constant 9.99999974E-6 : f32
    %673 = vector.broadcast %cst_156 : f32 to vector<4x1xf32>
    %674 = arith.addf %670, %673 : vector<4x1xf32>
    %675 = math.rsqrt %674 : vector<4x1xf32>
    %676 = vector.broadcast %675 : vector<4x1xf32> to vector<4x96xf32>
    %677 = arith.mulf %672, %676 : vector<4x96xf32>
    %678 = arith.mulf %677, %560 : vector<4x96xf32>
    %679 = arith.addf %678, %562 : vector<4x96xf32>
    %680 = vector.extract_strided_slice %542 {offsets = [0, 0], sizes = [4, 64], strides = [1, 1]} : vector<4x96xf32> to vector<4x64xf32>
    %681 = vector.extract_strided_slice %679 {offsets = [0, 0], sizes = [4, 64], strides = [1, 1]} : vector<4x96xf32> to vector<4x64xf32>
    %682 = arith.addf %680, %681 : vector<4x64xf32>
    %683 = arith.negf %682 : vector<4x64xf32>
    %684 = math.exp %683 : vector<4x64xf32>
    %cst_157 = arith.constant 1.000000e+00 : f32
    %685 = vector.broadcast %cst_157 : f32 to vector<4x64xf32>
    %686 = arith.addf %685, %684 : vector<4x64xf32>
    %687 = arith.divf %685, %686 : vector<4x64xf32>
    %688 = vector.extract_strided_slice %687 {offsets = [0, 0], sizes = [4, 32], strides = [1, 1]} : vector<4x64xf32> to vector<4x32xf32>
    %689 = vector.extract_strided_slice %687 {offsets = [0, 32], sizes = [4, 32], strides = [1, 1]} : vector<4x64xf32> to vector<4x32xf32>
    %690 = vector.extract_strided_slice %542 {offsets = [0, 64], sizes = [4, 32], strides = [1, 1]} : vector<4x96xf32> to vector<4x32xf32>
    %691 = vector.extract_strided_slice %679 {offsets = [0, 64], sizes = [4, 32], strides = [1, 1]} : vector<4x96xf32> to vector<4x32xf32>
    %692 = arith.mulf %688, %691 : vector<4x32xf32>
    %693 = arith.addf %690, %692 : vector<4x32xf32>
    %694 = math.tanh %693 : vector<4x32xf32>
    %cst_158 = arith.constant 1.000000e+00 : f32
    %695 = vector.broadcast %cst_158 : f32 to vector<4x32xf32>
    %696 = arith.subf %695, %689 : vector<4x32xf32>
    %697 = arith.mulf %696, %694 : vector<4x32xf32>
    %698 = arith.mulf %689, %654 : vector<4x32xf32>
    %699 = arith.addf %697, %698 : vector<4x32xf32>
    %700 = arith.truncf %699 : vector<4x32xf32> to vector<4x32xbf16>
    %cst_159 = arith.constant dense<0.000000e+00> : vector<4x192xf32>
    %701 = tpu.matmul %700, %558, %cst_159 {dimension_numbers = #tpu.dot_dimension_numbers<[1], [0], [0], [1], [0, 0, 1, 1], [], []>} : vector<4x32xbf16>, vector<32x192xbf16>, vector<4x192xf32> -> vector<4x192xf32>
    %702 = vector.extract_strided_slice %701 {offsets = [0, 0], sizes = [4, 96], strides = [1, 1]} : vector<4x192xf32> to vector<4x96xf32>
    %703 = vector.extract_strided_slice %701 {offsets = [0, 96], sizes = [4, 96], strides = [1, 1]} : vector<4x192xf32> to vector<4x96xf32>
    %704 = arith.select %2, %702, %703 : vector<4x96xi1>, vector<4x96xf32>
    %cst_160 = arith.constant dense<0.000000e+00> : vector<4xf32>
    %705 = vector.multi_reduction <add>, %704, %cst_160 [1] : vector<4x96xf32> to vector<4xf32>
    %706 = vector.shape_cast %705 : vector<4xf32> to vector<4x1xf32>
    %cst_161 = arith.constant 9.600000e+01 : f32
    %707 = vector.broadcast %cst_161 : f32 to vector<4x1xf32>
    %708 = arith.divf %706, %707 : vector<4x1xf32>
    %709 = vector.broadcast %708 : vector<4x1xf32> to vector<4x96xf32>
    %710 = arith.subf %704, %709 : vector<4x96xf32>
    %711 = arith.mulf %710, %710 : vector<4x96xf32>
    %cst_162 = arith.constant dense<0.000000e+00> : vector<4xf32>
    %712 = vector.multi_reduction <add>, %711, %cst_162 [1] : vector<4x96xf32> to vector<4xf32>
    %713 = vector.shape_cast %712 : vector<4xf32> to vector<4x1xf32>
    %cst_163 = arith.constant 9.600000e+01 : f32
    %714 = vector.broadcast %cst_163 : f32 to vector<4x1xf32>
    %715 = arith.divf %713, %714 : vector<4x1xf32>
    %716 = vector.broadcast %708 : vector<4x1xf32> to vector<4x96xf32>
    %717 = arith.subf %704, %716 : vector<4x96xf32>
    %cst_164 = arith.constant 9.99999974E-6 : f32
    %718 = vector.broadcast %cst_164 : f32 to vector<4x1xf32>
    %719 = arith.addf %715, %718 : vector<4x1xf32>
    %720 = math.rsqrt %719 : vector<4x1xf32>
    %721 = vector.broadcast %720 : vector<4x1xf32> to vector<4x96xf32>
    %722 = arith.mulf %717, %721 : vector<4x96xf32>
    %723 = arith.mulf %722, %560 : vector<4x96xf32>
    %724 = arith.addf %723, %562 : vector<4x96xf32>
    %725 = vector.extract_strided_slice %545 {offsets = [0, 0], sizes = [4, 64], strides = [1, 1]} : vector<4x96xf32> to vector<4x64xf32>
    %726 = vector.extract_strided_slice %724 {offsets = [0, 0], sizes = [4, 64], strides = [1, 1]} : vector<4x96xf32> to vector<4x64xf32>
    %727 = arith.addf %725, %726 : vector<4x64xf32>
    %728 = arith.negf %727 : vector<4x64xf32>
    %729 = math.exp %728 : vector<4x64xf32>
    %cst_165 = arith.constant 1.000000e+00 : f32
    %730 = vector.broadcast %cst_165 : f32 to vector<4x64xf32>
    %731 = arith.addf %730, %729 : vector<4x64xf32>
    %732 = arith.divf %730, %731 : vector<4x64xf32>
    %733 = vector.extract_strided_slice %732 {offsets = [0, 0], sizes = [4, 32], strides = [1, 1]} : vector<4x64xf32> to vector<4x32xf32>
    %734 = vector.extract_strided_slice %732 {offsets = [0, 32], sizes = [4, 32], strides = [1, 1]} : vector<4x64xf32> to vector<4x32xf32>
    %735 = vector.extract_strided_slice %545 {offsets = [0, 64], sizes = [4, 32], strides = [1, 1]} : vector<4x96xf32> to vector<4x32xf32>
    %736 = vector.extract_strided_slice %724 {offsets = [0, 64], sizes = [4, 32], strides = [1, 1]} : vector<4x96xf32> to vector<4x32xf32>
    %737 = arith.mulf %733, %736 : vector<4x32xf32>
    %738 = arith.addf %735, %737 : vector<4x32xf32>
    %739 = math.tanh %738 : vector<4x32xf32>
    %cst_166 = arith.constant 1.000000e+00 : f32
    %740 = vector.broadcast %cst_166 : f32 to vector<4x32xf32>
    %741 = arith.subf %740, %734 : vector<4x32xf32>
    %742 = arith.mulf %741, %739 : vector<4x32xf32>
    %743 = arith.mulf %734, %699 : vector<4x32xf32>
    %744 = arith.addf %742, %743 : vector<4x32xf32>
    %745 = arith.truncf %744 : vector<4x32xf32> to vector<4x32xbf16>
    %cst_167 = arith.constant dense<0.000000e+00> : vector<4x192xf32>
    %746 = tpu.matmul %745, %558, %cst_167 {dimension_numbers = #tpu.dot_dimension_numbers<[1], [0], [0], [1], [0, 0, 1, 1], [], []>} : vector<4x32xbf16>, vector<32x192xbf16>, vector<4x192xf32> -> vector<4x192xf32>
    %747 = vector.extract_strided_slice %746 {offsets = [0, 0], sizes = [4, 96], strides = [1, 1]} : vector<4x192xf32> to vector<4x96xf32>
    %748 = vector.extract_strided_slice %746 {offsets = [0, 96], sizes = [4, 96], strides = [1, 1]} : vector<4x192xf32> to vector<4x96xf32>
    %749 = arith.select %2, %747, %748 : vector<4x96xi1>, vector<4x96xf32>
    %cst_168 = arith.constant dense<0.000000e+00> : vector<4xf32>
    %750 = vector.multi_reduction <add>, %749, %cst_168 [1] : vector<4x96xf32> to vector<4xf32>
    %751 = vector.shape_cast %750 : vector<4xf32> to vector<4x1xf32>
    %cst_169 = arith.constant 9.600000e+01 : f32
    %752 = vector.broadcast %cst_169 : f32 to vector<4x1xf32>
    %753 = arith.divf %751, %752 : vector<4x1xf32>
    %754 = vector.broadcast %753 : vector<4x1xf32> to vector<4x96xf32>
    %755 = arith.subf %749, %754 : vector<4x96xf32>
    %756 = arith.mulf %755, %755 : vector<4x96xf32>
    %cst_170 = arith.constant dense<0.000000e+00> : vector<4xf32>
    %757 = vector.multi_reduction <add>, %756, %cst_170 [1] : vector<4x96xf32> to vector<4xf32>
    %758 = vector.shape_cast %757 : vector<4xf32> to vector<4x1xf32>
    %cst_171 = arith.constant 9.600000e+01 : f32
    %759 = vector.broadcast %cst_171 : f32 to vector<4x1xf32>
    %760 = arith.divf %758, %759 : vector<4x1xf32>
    %761 = vector.broadcast %753 : vector<4x1xf32> to vector<4x96xf32>
    %762 = arith.subf %749, %761 : vector<4x96xf32>
    %cst_172 = arith.constant 9.99999974E-6 : f32
    %763 = vector.broadcast %cst_172 : f32 to vector<4x1xf32>
    %764 = arith.addf %760, %763 : vector<4x1xf32>
    %765 = math.rsqrt %764 : vector<4x1xf32>
    %766 = vector.broadcast %765 : vector<4x1xf32> to vector<4x96xf32>
    %767 = arith.mulf %762, %766 : vector<4x96xf32>
    %768 = arith.mulf %767, %560 : vector<4x96xf32>
    %769 = arith.addf %768, %562 : vector<4x96xf32>
    %770 = vector.extract_strided_slice %548 {offsets = [0, 0], sizes = [4, 64], strides = [1, 1]} : vector<4x96xf32> to vector<4x64xf32>
    %771 = vector.extract_strided_slice %769 {offsets = [0, 0], sizes = [4, 64], strides = [1, 1]} : vector<4x96xf32> to vector<4x64xf32>
    %772 = arith.addf %770, %771 : vector<4x64xf32>
    %773 = arith.negf %772 : vector<4x64xf32>
    %774 = math.exp %773 : vector<4x64xf32>
    %cst_173 = arith.constant 1.000000e+00 : f32
    %775 = vector.broadcast %cst_173 : f32 to vector<4x64xf32>
    %776 = arith.addf %775, %774 : vector<4x64xf32>
    %777 = arith.divf %775, %776 : vector<4x64xf32>
    %778 = vector.extract_strided_slice %777 {offsets = [0, 0], sizes = [4, 32], strides = [1, 1]} : vector<4x64xf32> to vector<4x32xf32>
    %779 = vector.extract_strided_slice %777 {offsets = [0, 32], sizes = [4, 32], strides = [1, 1]} : vector<4x64xf32> to vector<4x32xf32>
    %780 = vector.extract_strided_slice %548 {offsets = [0, 64], sizes = [4, 32], strides = [1, 1]} : vector<4x96xf32> to vector<4x32xf32>
    %781 = vector.extract_strided_slice %769 {offsets = [0, 64], sizes = [4, 32], strides = [1, 1]} : vector<4x96xf32> to vector<4x32xf32>
    %782 = arith.mulf %778, %781 : vector<4x32xf32>
    %783 = arith.addf %780, %782 : vector<4x32xf32>
    %784 = math.tanh %783 : vector<4x32xf32>
    %cst_174 = arith.constant 1.000000e+00 : f32
    %785 = vector.broadcast %cst_174 : f32 to vector<4x32xf32>
    %786 = arith.subf %785, %779 : vector<4x32xf32>
    %787 = arith.mulf %786, %784 : vector<4x32xf32>
    %788 = arith.mulf %779, %744 : vector<4x32xf32>
    %789 = arith.addf %787, %788 : vector<4x32xf32>
    %790 = arith.truncf %789 : vector<4x32xf32> to vector<4x32xbf16>
    %cst_175 = arith.constant dense<0.000000e+00> : vector<4x192xf32>
    %791 = tpu.matmul %790, %558, %cst_175 {dimension_numbers = #tpu.dot_dimension_numbers<[1], [0], [0], [1], [0, 0, 1, 1], [], []>} : vector<4x32xbf16>, vector<32x192xbf16>, vector<4x192xf32> -> vector<4x192xf32>
    %792 = vector.extract_strided_slice %791 {offsets = [0, 0], sizes = [4, 96], strides = [1, 1]} : vector<4x192xf32> to vector<4x96xf32>
    %793 = vector.extract_strided_slice %791 {offsets = [0, 96], sizes = [4, 96], strides = [1, 1]} : vector<4x192xf32> to vector<4x96xf32>
    %794 = arith.select %2, %792, %793 : vector<4x96xi1>, vector<4x96xf32>
    %cst_176 = arith.constant dense<0.000000e+00> : vector<4xf32>
    %795 = vector.multi_reduction <add>, %794, %cst_176 [1] : vector<4x96xf32> to vector<4xf32>
    %796 = vector.shape_cast %795 : vector<4xf32> to vector<4x1xf32>
    %cst_177 = arith.constant 9.600000e+01 : f32
    %797 = vector.broadcast %cst_177 : f32 to vector<4x1xf32>
    %798 = arith.divf %796, %797 : vector<4x1xf32>
    %799 = vector.broadcast %798 : vector<4x1xf32> to vector<4x96xf32>
    %800 = arith.subf %794, %799 : vector<4x96xf32>
    %801 = arith.mulf %800, %800 : vector<4x96xf32>
    %cst_178 = arith.constant dense<0.000000e+00> : vector<4xf32>
    %802 = vector.multi_reduction <add>, %801, %cst_178 [1] : vector<4x96xf32> to vector<4xf32>
    %803 = vector.shape_cast %802 : vector<4xf32> to vector<4x1xf32>
    %cst_179 = arith.constant 9.600000e+01 : f32
    %804 = vector.broadcast %cst_179 : f32 to vector<4x1xf32>
    %805 = arith.divf %803, %804 : vector<4x1xf32>
    %806 = vector.broadcast %798 : vector<4x1xf32> to vector<4x96xf32>
    %807 = arith.subf %794, %806 : vector<4x96xf32>
    %cst_180 = arith.constant 9.99999974E-6 : f32
    %808 = vector.broadcast %cst_180 : f32 to vector<4x1xf32>
    %809 = arith.addf %805, %808 : vector<4x1xf32>
    %810 = math.rsqrt %809 : vector<4x1xf32>
    %811 = vector.broadcast %810 : vector<4x1xf32> to vector<4x96xf32>
    %812 = arith.mulf %807, %811 : vector<4x96xf32>
    %813 = arith.mulf %812, %560 : vector<4x96xf32>
    %814 = arith.addf %813, %562 : vector<4x96xf32>
    %815 = vector.extract_strided_slice %551 {offsets = [0, 0], sizes = [4, 64], strides = [1, 1]} : vector<4x96xf32> to vector<4x64xf32>
    %816 = vector.extract_strided_slice %814 {offsets = [0, 0], sizes = [4, 64], strides = [1, 1]} : vector<4x96xf32> to vector<4x64xf32>
    %817 = arith.addf %815, %816 : vector<4x64xf32>
    %818 = arith.negf %817 : vector<4x64xf32>
    %819 = math.exp %818 : vector<4x64xf32>
    %cst_181 = arith.constant 1.000000e+00 : f32
    %820 = vector.broadcast %cst_181 : f32 to vector<4x64xf32>
    %821 = arith.addf %820, %819 : vector<4x64xf32>
    %822 = arith.divf %820, %821 : vector<4x64xf32>
    %823 = vector.extract_strided_slice %822 {offsets = [0, 0], sizes = [4, 32], strides = [1, 1]} : vector<4x64xf32> to vector<4x32xf32>
    %824 = vector.extract_strided_slice %822 {offsets = [0, 32], sizes = [4, 32], strides = [1, 1]} : vector<4x64xf32> to vector<4x32xf32>
    %825 = vector.extract_strided_slice %551 {offsets = [0, 64], sizes = [4, 32], strides = [1, 1]} : vector<4x96xf32> to vector<4x32xf32>
    %826 = vector.extract_strided_slice %814 {offsets = [0, 64], sizes = [4, 32], strides = [1, 1]} : vector<4x96xf32> to vector<4x32xf32>
    %827 = arith.mulf %823, %826 : vector<4x32xf32>
    %828 = arith.addf %825, %827 : vector<4x32xf32>
    %829 = math.tanh %828 : vector<4x32xf32>
    %cst_182 = arith.constant 1.000000e+00 : f32
    %830 = vector.broadcast %cst_182 : f32 to vector<4x32xf32>
    %831 = arith.subf %830, %824 : vector<4x32xf32>
    %832 = arith.mulf %831, %829 : vector<4x32xf32>
    %833 = arith.mulf %824, %789 : vector<4x32xf32>
    %834 = arith.addf %832, %833 : vector<4x32xf32>
    %835 = arith.truncf %834 : vector<4x32xf32> to vector<4x32xbf16>
    %cst_183 = arith.constant dense<0.000000e+00> : vector<4x192xf32>
    %836 = tpu.matmul %835, %558, %cst_183 {dimension_numbers = #tpu.dot_dimension_numbers<[1], [0], [0], [1], [0, 0, 1, 1], [], []>} : vector<4x32xbf16>, vector<32x192xbf16>, vector<4x192xf32> -> vector<4x192xf32>
    %837 = vector.extract_strided_slice %836 {offsets = [0, 0], sizes = [4, 96], strides = [1, 1]} : vector<4x192xf32> to vector<4x96xf32>
    %838 = vector.extract_strided_slice %836 {offsets = [0, 96], sizes = [4, 96], strides = [1, 1]} : vector<4x192xf32> to vector<4x96xf32>
    %839 = arith.select %2, %837, %838 : vector<4x96xi1>, vector<4x96xf32>
    %cst_184 = arith.constant dense<0.000000e+00> : vector<4xf32>
    %840 = vector.multi_reduction <add>, %839, %cst_184 [1] : vector<4x96xf32> to vector<4xf32>
    %841 = vector.shape_cast %840 : vector<4xf32> to vector<4x1xf32>
    %cst_185 = arith.constant 9.600000e+01 : f32
    %842 = vector.broadcast %cst_185 : f32 to vector<4x1xf32>
    %843 = arith.divf %841, %842 : vector<4x1xf32>
    %844 = vector.broadcast %843 : vector<4x1xf32> to vector<4x96xf32>
    %845 = arith.subf %839, %844 : vector<4x96xf32>
    %846 = arith.mulf %845, %845 : vector<4x96xf32>
    %cst_186 = arith.constant dense<0.000000e+00> : vector<4xf32>
    %847 = vector.multi_reduction <add>, %846, %cst_186 [1] : vector<4x96xf32> to vector<4xf32>
    %848 = vector.shape_cast %847 : vector<4xf32> to vector<4x1xf32>
    %cst_187 = arith.constant 9.600000e+01 : f32
    %849 = vector.broadcast %cst_187 : f32 to vector<4x1xf32>
    %850 = arith.divf %848, %849 : vector<4x1xf32>
    %851 = vector.broadcast %843 : vector<4x1xf32> to vector<4x96xf32>
    %852 = arith.subf %839, %851 : vector<4x96xf32>
    %cst_188 = arith.constant 9.99999974E-6 : f32
    %853 = vector.broadcast %cst_188 : f32 to vector<4x1xf32>
    %854 = arith.addf %850, %853 : vector<4x1xf32>
    %855 = math.rsqrt %854 : vector<4x1xf32>
    %856 = vector.broadcast %855 : vector<4x1xf32> to vector<4x96xf32>
    %857 = arith.mulf %852, %856 : vector<4x96xf32>
    %858 = arith.mulf %857, %560 : vector<4x96xf32>
    %859 = arith.addf %858, %562 : vector<4x96xf32>
    %860 = vector.extract_strided_slice %554 {offsets = [0, 0], sizes = [4, 64], strides = [1, 1]} : vector<4x96xf32> to vector<4x64xf32>
    %861 = vector.extract_strided_slice %859 {offsets = [0, 0], sizes = [4, 64], strides = [1, 1]} : vector<4x96xf32> to vector<4x64xf32>
    %862 = arith.addf %860, %861 : vector<4x64xf32>
    %863 = arith.negf %862 : vector<4x64xf32>
    %864 = math.exp %863 : vector<4x64xf32>
    %cst_189 = arith.constant 1.000000e+00 : f32
    %865 = vector.broadcast %cst_189 : f32 to vector<4x64xf32>
    %866 = arith.addf %865, %864 : vector<4x64xf32>
    %867 = arith.divf %865, %866 : vector<4x64xf32>
    %868 = vector.extract_strided_slice %867 {offsets = [0, 0], sizes = [4, 32], strides = [1, 1]} : vector<4x64xf32> to vector<4x32xf32>
    %869 = vector.extract_strided_slice %867 {offsets = [0, 32], sizes = [4, 32], strides = [1, 1]} : vector<4x64xf32> to vector<4x32xf32>
    %870 = vector.extract_strided_slice %554 {offsets = [0, 64], sizes = [4, 32], strides = [1, 1]} : vector<4x96xf32> to vector<4x32xf32>
    %871 = vector.extract_strided_slice %859 {offsets = [0, 64], sizes = [4, 32], strides = [1, 1]} : vector<4x96xf32> to vector<4x32xf32>
    %872 = arith.mulf %868, %871 : vector<4x32xf32>
    %873 = arith.addf %870, %872 : vector<4x32xf32>
    %874 = math.tanh %873 : vector<4x32xf32>
    %cst_190 = arith.constant 1.000000e+00 : f32
    %875 = vector.broadcast %cst_190 : f32 to vector<4x32xf32>
    %876 = arith.subf %875, %869 : vector<4x32xf32>
    %877 = arith.mulf %876, %874 : vector<4x32xf32>
    %878 = arith.mulf %869, %834 : vector<4x32xf32>
    %879 = arith.addf %877, %878 : vector<4x32xf32>
    %880 = arith.truncf %879 : vector<4x32xf32> to vector<4x32xbf16>
    %cst_191 = arith.constant dense<0.000000e+00> : vector<4x192xf32>
    %881 = tpu.matmul %880, %558, %cst_191 {dimension_numbers = #tpu.dot_dimension_numbers<[1], [0], [0], [1], [0, 0, 1, 1], [], []>} : vector<4x32xbf16>, vector<32x192xbf16>, vector<4x192xf32> -> vector<4x192xf32>
    %882 = vector.extract_strided_slice %881 {offsets = [0, 0], sizes = [4, 96], strides = [1, 1]} : vector<4x192xf32> to vector<4x96xf32>
    %883 = vector.extract_strided_slice %881 {offsets = [0, 96], sizes = [4, 96], strides = [1, 1]} : vector<4x192xf32> to vector<4x96xf32>
    %884 = arith.select %2, %882, %883 : vector<4x96xi1>, vector<4x96xf32>
    %cst_192 = arith.constant dense<0.000000e+00> : vector<4xf32>
    %885 = vector.multi_reduction <add>, %884, %cst_192 [1] : vector<4x96xf32> to vector<4xf32>
    %886 = vector.shape_cast %885 : vector<4xf32> to vector<4x1xf32>
    %cst_193 = arith.constant 9.600000e+01 : f32
    %887 = vector.broadcast %cst_193 : f32 to vector<4x1xf32>
    %888 = arith.divf %886, %887 : vector<4x1xf32>
    %889 = vector.broadcast %888 : vector<4x1xf32> to vector<4x96xf32>
    %890 = arith.subf %884, %889 : vector<4x96xf32>
    %891 = arith.mulf %890, %890 : vector<4x96xf32>
    %cst_194 = arith.constant dense<0.000000e+00> : vector<4xf32>
    %892 = vector.multi_reduction <add>, %891, %cst_194 [1] : vector<4x96xf32> to vector<4xf32>
    %893 = vector.shape_cast %892 : vector<4xf32> to vector<4x1xf32>
    %cst_195 = arith.constant 9.600000e+01 : f32
    %894 = vector.broadcast %cst_195 : f32 to vector<4x1xf32>
    %895 = arith.divf %893, %894 : vector<4x1xf32>
    %896 = vector.broadcast %888 : vector<4x1xf32> to vector<4x96xf32>
    %897 = arith.subf %884, %896 : vector<4x96xf32>
    %cst_196 = arith.constant 9.99999974E-6 : f32
    %898 = vector.broadcast %cst_196 : f32 to vector<4x1xf32>
    %899 = arith.addf %895, %898 : vector<4x1xf32>
    %900 = math.rsqrt %899 : vector<4x1xf32>
    %901 = vector.broadcast %900 : vector<4x1xf32> to vector<4x96xf32>
    %902 = arith.mulf %897, %901 : vector<4x96xf32>
    %903 = arith.mulf %902, %560 : vector<4x96xf32>
    %904 = arith.addf %903, %562 : vector<4x96xf32>
    %905 = vector.extract_strided_slice %557 {offsets = [0, 0], sizes = [4, 64], strides = [1, 1]} : vector<4x96xf32> to vector<4x64xf32>
    %906 = vector.extract_strided_slice %904 {offsets = [0, 0], sizes = [4, 64], strides = [1, 1]} : vector<4x96xf32> to vector<4x64xf32>
    %907 = arith.addf %905, %906 : vector<4x64xf32>
    %908 = arith.negf %907 : vector<4x64xf32>
    %909 = math.exp %908 : vector<4x64xf32>
    %cst_197 = arith.constant 1.000000e+00 : f32
    %910 = vector.broadcast %cst_197 : f32 to vector<4x64xf32>
    %911 = arith.addf %910, %909 : vector<4x64xf32>
    %912 = arith.divf %910, %911 : vector<4x64xf32>
    %913 = vector.extract_strided_slice %912 {offsets = [0, 0], sizes = [4, 32], strides = [1, 1]} : vector<4x64xf32> to vector<4x32xf32>
    %914 = vector.extract_strided_slice %912 {offsets = [0, 32], sizes = [4, 32], strides = [1, 1]} : vector<4x64xf32> to vector<4x32xf32>
    %915 = vector.extract_strided_slice %557 {offsets = [0, 64], sizes = [4, 32], strides = [1, 1]} : vector<4x96xf32> to vector<4x32xf32>
    %916 = vector.extract_strided_slice %904 {offsets = [0, 64], sizes = [4, 32], strides = [1, 1]} : vector<4x96xf32> to vector<4x32xf32>
    %917 = arith.mulf %913, %916 : vector<4x32xf32>
    %918 = arith.addf %915, %917 : vector<4x32xf32>
    %919 = math.tanh %918 : vector<4x32xf32>
    %cst_198 = arith.constant 1.000000e+00 : f32
    %920 = vector.broadcast %cst_198 : f32 to vector<4x32xf32>
    %921 = arith.subf %920, %914 : vector<4x32xf32>
    %922 = arith.mulf %921, %919 : vector<4x32xf32>
    %923 = arith.mulf %914, %879 : vector<4x32xf32>
    %924 = arith.addf %922, %923 : vector<4x32xf32>
    %925 = arith.addf %136, %609 : vector<4x32xf32>
    %926 = arith.addf %181, %654 : vector<4x32xf32>
    %927 = arith.addf %226, %699 : vector<4x32xf32>
    %928 = arith.addf %271, %744 : vector<4x32xf32>
    %929 = arith.addf %316, %789 : vector<4x32xf32>
    %930 = arith.addf %361, %834 : vector<4x32xf32>
    %931 = arith.addf %406, %879 : vector<4x32xf32>
    %932 = arith.addf %451, %924 : vector<4x32xf32>
    %933 = vector.extract_strided_slice %925 {offsets = [0, 0], sizes = [2, 32], strides = [1, 1]} : vector<4x32xf32> to vector<2x32xf32>
    %934 = vector.extract_strided_slice %932 {offsets = [2, 0], sizes = [2, 32], strides = [1, 1]} : vector<4x32xf32> to vector<2x32xf32>
    %935 = arith.addf %933, %934 : vector<2x32xf32>
    %cst_199 = arith.constant 2.500000e-01 : f32
    %936 = vector.broadcast %cst_199 : f32 to vector<2x32xf32>
    %937 = arith.mulf %935, %936 : vector<2x32xf32>
    %938 = vector.extract_strided_slice %926 {offsets = [0, 0], sizes = [2, 32], strides = [1, 1]} : vector<4x32xf32> to vector<2x32xf32>
    %939 = vector.extract_strided_slice %931 {offsets = [2, 0], sizes = [2, 32], strides = [1, 1]} : vector<4x32xf32> to vector<2x32xf32>
    %940 = arith.addf %938, %939 : vector<2x32xf32>
    %cst_200 = arith.constant 2.500000e-01 : f32
    %941 = vector.broadcast %cst_200 : f32 to vector<2x32xf32>
    %942 = arith.mulf %940, %941 : vector<2x32xf32>
    %943 = vector.extract_strided_slice %927 {offsets = [0, 0], sizes = [2, 32], strides = [1, 1]} : vector<4x32xf32> to vector<2x32xf32>
    %944 = vector.extract_strided_slice %930 {offsets = [2, 0], sizes = [2, 32], strides = [1, 1]} : vector<4x32xf32> to vector<2x32xf32>
    %945 = arith.addf %943, %944 : vector<2x32xf32>
    %cst_201 = arith.constant 2.500000e-01 : f32
    %946 = vector.broadcast %cst_201 : f32 to vector<2x32xf32>
    %947 = arith.mulf %945, %946 : vector<2x32xf32>
    %948 = vector.extract_strided_slice %928 {offsets = [0, 0], sizes = [2, 32], strides = [1, 1]} : vector<4x32xf32> to vector<2x32xf32>
    %949 = vector.extract_strided_slice %929 {offsets = [2, 0], sizes = [2, 32], strides = [1, 1]} : vector<4x32xf32> to vector<2x32xf32>
    %950 = arith.addf %948, %949 : vector<2x32xf32>
    %cst_202 = arith.constant 2.500000e-01 : f32
    %951 = vector.broadcast %cst_202 : f32 to vector<2x32xf32>
    %952 = arith.mulf %950, %951 : vector<2x32xf32>
    %953 = vector.extract_strided_slice %929 {offsets = [0, 0], sizes = [2, 32], strides = [1, 1]} : vector<4x32xf32> to vector<2x32xf32>
    %954 = vector.extract_strided_slice %928 {offsets = [2, 0], sizes = [2, 32], strides = [1, 1]} : vector<4x32xf32> to vector<2x32xf32>
    %955 = arith.addf %953, %954 : vector<2x32xf32>
    %cst_203 = arith.constant 2.500000e-01 : f32
    %956 = vector.broadcast %cst_203 : f32 to vector<2x32xf32>
    %957 = arith.mulf %955, %956 : vector<2x32xf32>
    %958 = vector.extract_strided_slice %930 {offsets = [0, 0], sizes = [2, 32], strides = [1, 1]} : vector<4x32xf32> to vector<2x32xf32>
    %959 = vector.extract_strided_slice %927 {offsets = [2, 0], sizes = [2, 32], strides = [1, 1]} : vector<4x32xf32> to vector<2x32xf32>
    %960 = arith.addf %958, %959 : vector<2x32xf32>
    %cst_204 = arith.constant 2.500000e-01 : f32
    %961 = vector.broadcast %cst_204 : f32 to vector<2x32xf32>
    %962 = arith.mulf %960, %961 : vector<2x32xf32>
    %963 = vector.extract_strided_slice %931 {offsets = [0, 0], sizes = [2, 32], strides = [1, 1]} : vector<4x32xf32> to vector<2x32xf32>
    %964 = vector.extract_strided_slice %926 {offsets = [2, 0], sizes = [2, 32], strides = [1, 1]} : vector<4x32xf32> to vector<2x32xf32>
    %965 = arith.addf %963, %964 : vector<2x32xf32>
    %cst_205 = arith.constant 2.500000e-01 : f32
    %966 = vector.broadcast %cst_205 : f32 to vector<2x32xf32>
    %967 = arith.mulf %965, %966 : vector<2x32xf32>
    %968 = vector.extract_strided_slice %932 {offsets = [0, 0], sizes = [2, 32], strides = [1, 1]} : vector<4x32xf32> to vector<2x32xf32>
    %969 = vector.extract_strided_slice %925 {offsets = [2, 0], sizes = [2, 32], strides = [1, 1]} : vector<4x32xf32> to vector<2x32xf32>
    %970 = arith.addf %968, %969 : vector<2x32xf32>
    %cst_206 = arith.constant 2.500000e-01 : f32
    %971 = vector.broadcast %cst_206 : f32 to vector<2x32xf32>
    %972 = arith.mulf %970, %971 : vector<2x32xf32>
    %973 = tpu.concatenate %937, %942, %947, %952, %957, %962, %967, %972 in 1 : vector<2x32xf32>, vector<2x32xf32>, vector<2x32xf32>, vector<2x32xf32>, vector<2x32xf32>, vector<2x32xf32>, vector<2x32xf32>, vector<2x32xf32> -> vector<2x256xf32>
    %c0_207 = arith.constant 0 : index
    %c0_208 = arith.constant 0 : index
    %974 = vector.load %arg12[%c0_207, %c0_208] : memref<2x256xf32, #tpu.memory_space<vmem>>, vector<2x256xf32>
    tpu.vector_store %arg12[%c0_207, %c0_208], %973 {strides = array<i32>} : memref<2x256xf32, #tpu.memory_space<vmem>>, vector<2x256xf32>,
    %c0_209 = arith.constant 0 : index
    %c0_210 = arith.constant 0 : index
    %975 = vector.load %arg1[%c0_209, %c0_210] : memref<2x1xi32, #tpu.memory_space<vmem>>, vector<2x1xi32>
    %cst_211 = arith.constant 0.000000e+00 : f32
    %976 = vector.broadcast %cst_211 : f32 to vector<2x32xf32>
    %c0_i32 = arith.constant 0 : i32
    %977 = vector.broadcast %c0_i32 : i32 to vector<2x1xi32>
    %978 = arith.cmpi eq, %975, %977 : vector<2x1xi32>
    %979 = vector.extract_strided_slice %925 {offsets = [0, 0], sizes = [2, 32], strides = [1, 1]} : vector<4x32xf32> to vector<2x32xf32>
    %cst_212 = arith.constant 5.000000e-01 : f32
    %980 = vector.broadcast %cst_212 : f32 to vector<2x32xf32>
    %981 = arith.mulf %979, %980 : vector<2x32xf32>
    %cst_213 = arith.constant 0.000000e+00 : f32
    %982 = vector.shape_cast %978 : vector<2x1xi1> to vector<2x1xi1>
    %983 = vector.broadcast %982 : vector<2x1xi1> to vector<2x32xi1>
    %984 = vector.broadcast %cst_213 : f32 to vector<2x32xf32>
    %985 = arith.select %983, %981, %984 : vector<2x32xi1>, vector<2x32xf32>
    %986 = arith.addf %976, %985 : vector<2x32xf32>
    %c1_i32 = arith.constant 1 : i32
    %987 = vector.broadcast %c1_i32 : i32 to vector<2x1xi32>
    %988 = arith.cmpi eq, %975, %987 : vector<2x1xi32>
    %989 = vector.extract_strided_slice %926 {offsets = [0, 0], sizes = [2, 32], strides = [1, 1]} : vector<4x32xf32> to vector<2x32xf32>
    %cst_214 = arith.constant 5.000000e-01 : f32
    %990 = vector.broadcast %cst_214 : f32 to vector<2x32xf32>
    %991 = arith.mulf %989, %990 : vector<2x32xf32>
    %cst_215 = arith.constant 0.000000e+00 : f32
    %992 = vector.shape_cast %988 : vector<2x1xi1> to vector<2x1xi1>
    %993 = vector.broadcast %992 : vector<2x1xi1> to vector<2x32xi1>
    %994 = vector.broadcast %cst_215 : f32 to vector<2x32xf32>
    %995 = arith.select %993, %991, %994 : vector<2x32xi1>, vector<2x32xf32>
    %996 = arith.addf %986, %995 : vector<2x32xf32>
    %c2_i32_216 = arith.constant 2 : i32
    %997 = vector.broadcast %c2_i32_216 : i32 to vector<2x1xi32>
    %998 = arith.cmpi eq, %975, %997 : vector<2x1xi32>
    %999 = vector.extract_strided_slice %927 {offsets = [0, 0], sizes = [2, 32], strides = [1, 1]} : vector<4x32xf32> to vector<2x32xf32>
    %cst_217 = arith.constant 5.000000e-01 : f32
    %1000 = vector.broadcast %cst_217 : f32 to vector<2x32xf32>
    %1001 = arith.mulf %999, %1000 : vector<2x32xf32>
    %cst_218 = arith.constant 0.000000e+00 : f32
    %1002 = vector.shape_cast %998 : vector<2x1xi1> to vector<2x1xi1>
    %1003 = vector.broadcast %1002 : vector<2x1xi1> to vector<2x32xi1>
    %1004 = vector.broadcast %cst_218 : f32 to vector<2x32xf32>
    %1005 = arith.select %1003, %1001, %1004 : vector<2x32xi1>, vector<2x32xf32>
    %1006 = arith.addf %996, %1005 : vector<2x32xf32>
    %c3_i32 = arith.constant 3 : i32
    %1007 = vector.broadcast %c3_i32 : i32 to vector<2x1xi32>
    %1008 = arith.cmpi eq, %975, %1007 : vector<2x1xi32>
    %1009 = vector.extract_strided_slice %928 {offsets = [0, 0], sizes = [2, 32], strides = [1, 1]} : vector<4x32xf32> to vector<2x32xf32>
    %cst_219 = arith.constant 5.000000e-01 : f32
    %1010 = vector.broadcast %cst_219 : f32 to vector<2x32xf32>
    %1011 = arith.mulf %1009, %1010 : vector<2x32xf32>
    %cst_220 = arith.constant 0.000000e+00 : f32
    %1012 = vector.shape_cast %1008 : vector<2x1xi1> to vector<2x1xi1>
    %1013 = vector.broadcast %1012 : vector<2x1xi1> to vector<2x32xi1>
    %1014 = vector.broadcast %cst_220 : f32 to vector<2x32xf32>
    %1015 = arith.select %1013, %1011, %1014 : vector<2x32xi1>, vector<2x32xf32>
    %1016 = arith.addf %1006, %1015 : vector<2x32xf32>
    %c4_i32 = arith.constant 4 : i32
    %1017 = vector.broadcast %c4_i32 : i32 to vector<2x1xi32>
    %1018 = arith.cmpi eq, %975, %1017 : vector<2x1xi32>
    %1019 = vector.extract_strided_slice %929 {offsets = [0, 0], sizes = [2, 32], strides = [1, 1]} : vector<4x32xf32> to vector<2x32xf32>
    %cst_221 = arith.constant 5.000000e-01 : f32
    %1020 = vector.broadcast %cst_221 : f32 to vector<2x32xf32>
    %1021 = arith.mulf %1019, %1020 : vector<2x32xf32>
    %cst_222 = arith.constant 0.000000e+00 : f32
    %1022 = vector.shape_cast %1018 : vector<2x1xi1> to vector<2x1xi1>
    %1023 = vector.broadcast %1022 : vector<2x1xi1> to vector<2x32xi1>
    %1024 = vector.broadcast %cst_222 : f32 to vector<2x32xf32>
    %1025 = arith.select %1023, %1021, %1024 : vector<2x32xi1>, vector<2x32xf32>
    %1026 = arith.addf %1016, %1025 : vector<2x32xf32>
    %c5_i32 = arith.constant 5 : i32
    %1027 = vector.broadcast %c5_i32 : i32 to vector<2x1xi32>
    %1028 = arith.cmpi eq, %975, %1027 : vector<2x1xi32>
    %1029 = vector.extract_strided_slice %930 {offsets = [0, 0], sizes = [2, 32], strides = [1, 1]} : vector<4x32xf32> to vector<2x32xf32>
    %cst_223 = arith.constant 5.000000e-01 : f32
    %1030 = vector.broadcast %cst_223 : f32 to vector<2x32xf32>
    %1031 = arith.mulf %1029, %1030 : vector<2x32xf32>
    %cst_224 = arith.constant 0.000000e+00 : f32
    %1032 = vector.shape_cast %1028 : vector<2x1xi1> to vector<2x1xi1>
    %1033 = vector.broadcast %1032 : vector<2x1xi1> to vector<2x32xi1>
    %1034 = vector.broadcast %cst_224 : f32 to vector<2x32xf32>
    %1035 = arith.select %1033, %1031, %1034 : vector<2x32xi1>, vector<2x32xf32>
    %1036 = arith.addf %1026, %1035 : vector<2x32xf32>
    %c6_i32 = arith.constant 6 : i32
    %1037 = vector.broadcast %c6_i32 : i32 to vector<2x1xi32>
    %1038 = arith.cmpi eq, %975, %1037 : vector<2x1xi32>
    %1039 = vector.extract_strided_slice %931 {offsets = [0, 0], sizes = [2, 32], strides = [1, 1]} : vector<4x32xf32> to vector<2x32xf32>
    %cst_225 = arith.constant 5.000000e-01 : f32
    %1040 = vector.broadcast %cst_225 : f32 to vector<2x32xf32>
    %1041 = arith.mulf %1039, %1040 : vector<2x32xf32>
    %cst_226 = arith.constant 0.000000e+00 : f32
    %1042 = vector.shape_cast %1038 : vector<2x1xi1> to vector<2x1xi1>
    %1043 = vector.broadcast %1042 : vector<2x1xi1> to vector<2x32xi1>
    %1044 = vector.broadcast %cst_226 : f32 to vector<2x32xf32>
    %1045 = arith.select %1043, %1041, %1044 : vector<2x32xi1>, vector<2x32xf32>
    %1046 = arith.addf %1036, %1045 : vector<2x32xf32>
    %c7_i32 = arith.constant 7 : i32
    %1047 = vector.broadcast %c7_i32 : i32 to vector<2x1xi32>
    %1048 = arith.cmpi eq, %975, %1047 : vector<2x1xi32>
    %1049 = vector.extract_strided_slice %932 {offsets = [0, 0], sizes = [2, 32], strides = [1, 1]} : vector<4x32xf32> to vector<2x32xf32>
    %cst_227 = arith.constant 5.000000e-01 : f32
    %1050 = vector.broadcast %cst_227 : f32 to vector<2x32xf32>
    %1051 = arith.mulf %1049, %1050 : vector<2x32xf32>
    %cst_228 = arith.constant 0.000000e+00 : f32
    %1052 = vector.shape_cast %1048 : vector<2x1xi1> to vector<2x1xi1>
    %1053 = vector.broadcast %1052 : vector<2x1xi1> to vector<2x32xi1>
    %1054 = vector.broadcast %cst_228 : f32 to vector<2x32xf32>
    %1055 = arith.select %1053, %1051, %1054 : vector<2x32xi1>, vector<2x32xf32>
    %1056 = arith.addf %1046, %1055 : vector<2x32xf32>
    %1057 = vector.extract_strided_slice %932 {offsets = [2, 0], sizes = [2, 32], strides = [1, 1]} : vector<4x32xf32> to vector<2x32xf32>
    %cst_229 = arith.constant 5.000000e-01 : f32
    %1058 = vector.broadcast %cst_229 : f32 to vector<2x32xf32>
    %1059 = arith.mulf %1057, %1058 : vector<2x32xf32>
    %1060 = arith.addf %1059, %1056 : vector<2x32xf32>
    %cst_230 = arith.constant 5.000000e-01 : f32
    %1061 = vector.broadcast %cst_230 : f32 to vector<2x32xf32>
    %1062 = arith.mulf %1060, %1061 : vector<2x32xf32>
    %c0_231 = arith.constant 0 : index
    %c0_232 = arith.constant 0 : index
    %1063 = vector.load %arg13[%c0_231, %c0_232] : memref<2x32xf32, #tpu.memory_space<vmem>>, vector<2x32xf32>
    tpu.vector_store %arg13[%c0_231, %c0_232], %1062 {strides = array<i32>} : memref<2x32xf32, #tpu.memory_space<vmem>>, vector<2x32xf32>,
    return
  }
  func.func @transform_0(%arg0: i32) -> (i32, i32) {
    %c0_i32 = arith.constant 0 : i32
    %c0_i32_0 = arith.constant 0 : i32
    %c0_i32_1 = arith.constant 0 : i32
    return %c0_i32, %c0_i32_0 : i32, i32
  }
  func.func @transform_1(%arg0: i32) -> (i32, i32) {
    %c0_i32 = arith.constant 0 : i32
    %c0_i32_0 = arith.constant 0 : i32
    %c0_i32_1 = arith.constant 0 : i32
    return %c0_i32, %c0_i32_0 : i32, i32
  }
  func.func @transform_2(%arg0: i32) -> (i32, i32) {
    %c0_i32 = arith.constant 0 : i32
    %c0_i32_0 = arith.constant 0 : i32
    %c0_i32_1 = arith.constant 0 : i32
    return %c0_i32, %c0_i32_0 : i32, i32
  }
  func.func @transform_3(%arg0: i32) -> (i32, i32) {
    %c0_i32 = arith.constant 0 : i32
    %c0_i32_0 = arith.constant 0 : i32
    %c0_i32_1 = arith.constant 0 : i32
    return %c0_i32, %c0_i32_0 : i32, i32
  }
  func.func @transform_4(%arg0: i32) -> (i32, i32, i32) {
    %c0_i32 = arith.constant 0 : i32
    %c0_i32_0 = arith.constant 0 : i32
    %c0_i32_1 = arith.constant 0 : i32
    %c0_i32_2 = arith.constant 0 : i32
    return %c0_i32, %c0_i32_0, %c0_i32_1 : i32, i32, i32
  }
  func.func @transform_5(%arg0: i32) -> (i32, i32, i32) {
    %c0_i32 = arith.constant 0 : i32
    %c0_i32_0 = arith.constant 0 : i32
    %c0_i32_1 = arith.constant 0 : i32
    %c0_i32_2 = arith.constant 0 : i32
    return %c0_i32, %c0_i32_0, %c0_i32_1 : i32, i32, i32
  }
  func.func @transform_6(%arg0: i32) -> (i32, i32) {
    %c0_i32 = arith.constant 0 : i32
    %c0_i32_0 = arith.constant 0 : i32
    %c0_i32_1 = arith.constant 0 : i32
    return %c0_i32, %c0_i32_0 : i32, i32
  }
  func.func @transform_7(%arg0: i32) -> (i32, i32) {
    %c0_i32 = arith.constant 0 : i32
    %c0_i32_0 = arith.constant 0 : i32
    %c0_i32_1 = arith.constant 0 : i32
    return %c0_i32, %c0_i32_0 : i32, i32
  }
  func.func @transform_8(%arg0: i32) -> (i32, i32, i32) {
    %c0_i32 = arith.constant 0 : i32
    %c0_i32_0 = arith.constant 0 : i32
    %c0_i32_1 = arith.constant 0 : i32
    %c0_i32_2 = arith.constant 0 : i32
    return %c0_i32, %c0_i32_0, %c0_i32_1 : i32, i32, i32
  }
  func.func @transform_9(%arg0: i32) -> (i32, i32, i32) {
    %c0_i32 = arith.constant 0 : i32
    %c0_i32_0 = arith.constant 0 : i32
    %c0_i32_1 = arith.constant 0 : i32
    %c0_i32_2 = arith.constant 0 : i32
    return %c0_i32, %c0_i32_0, %c0_i32_1 : i32, i32, i32
  }
  func.func @transform_10(%arg0: i32) -> (i32, i32, i32) {
    %c0_i32 = arith.constant 0 : i32
    %c0_i32_0 = arith.constant 0 : i32
    %c0_i32_1 = arith.constant 0 : i32
    %c0_i32_2 = arith.constant 0 : i32
    return %c0_i32, %c0_i32_0, %c0_i32_1 : i32, i32, i32
  }
  func.func @transform_11(%arg0: i32) -> (i32, i32) {
    %c0_i32 = arith.constant 0 : i32
    %c0_i32_0 = arith.constant 0 : i32
    %c0_i32_1 = arith.constant 0 : i32
    return %c0_i32, %c0_i32_0 : i32, i32
  }
  func.func @transform_12(%arg0: i32) -> (i32, i32) {
    %c0_i32 = arith.constant 0 : i32
    %c0_i32_0 = arith.constant 0 : i32
    %c0_i32_1 = arith.constant 0 : i32
    return %c0_i32, %c0_i32_0 : i32, i32
  }
}

</mosaic_0001>

<llo_original>
// kernel: tpu_custom_call.1
$region0: #{tpu_custom_call.1}
  #allocation0 [shape = 'u32[]', space=smem, size = 0x4, offset = 0x4, fixed_abs, tag = 'smem constant byte address 0x4 - core index']
  #allocation1 [shape = 'u32[144,128]{1,0:T(1,128)}', space=vmem, size = 0x12000, scoped, tag = 'internal scratch']
  %s0 = inlined_call_operand.vmem [shape: s32[2,1], index: 0, kind: input, shape index: {}]
  %s1 = inlined_call_operand.vmem [shape: f32[16,300], index: 1, kind: input, shape index: {}]
  %s2 = inlined_call_operand.vmem [shape: bf16[300,192], index: 2, kind: input, shape index: {}]
  %s3 = inlined_call_operand.vmem [shape: bf16[32,192], index: 3, kind: input, shape index: {}]
  %s4 = inlined_call_operand.vmem [shape: f32[2,2,96], index: 4, kind: input, shape index: {}]
  %s5 = inlined_call_operand.vmem [shape: f32[2,4,96], index: 5, kind: input, shape index: {}]
  %s6 = inlined_call_operand.vmem [shape: bf16[64,192], index: 6, kind: input, shape index: {}]
  %s7 = inlined_call_operand.vmem [shape: bf16[32,192], index: 7, kind: input, shape index: {}]
  %s8 = inlined_call_operand.vmem [shape: f32[2,2,96], index: 8, kind: input, shape index: {}]
  %s9 = inlined_call_operand.vmem [shape: f32[2,4,96], index: 9, kind: input, shape index: {}]
  %s10 = inlined_call_operand.vmem [shape: f32[2,4,32], index: 10, kind: input, shape index: {}]
  %s11 = inlined_call_operand.hbm [shape: f32[2,256], index: 11, kind: output, shape index: {0}]
  %s12 = inlined_call_operand.hbm [shape: f32[2,32], index: 12, kind: output, shape index: {1}]
  %13 = xla_tuple %s11, %s12
  %s14 = sld [smem:[#allocation0]]
  $region62: #{tpu_custom_call.1} parent=0
    _
  %s16 = ssub.s32 1, %s14
  %s17 = scalar_select 0, %s16, %s14
  $region1: #{tpu_custom_call.1} parent=0
    #allocation2 [shape = 'u8[2048]{0}', space=vmem, size = 0x800, scoped, tag = 'output window, operand 0, single buffered']
    #allocation3 [shape = 's32[1]{0}', space=sflag, size = 0x4, scoped, tag = 'scoped memory for tpu_custom_call.1']
    #allocation4 [shape = 'u8[1024]{0}', space=vmem, size = 0x400, scoped, tag = 'output window, operand 1, single buffered']
    #allocation5 [shape = 's32[1]{0}', space=sflag, size = 0x4, scoped, tag = 'scoped memory for tpu_custom_call.1']
    %18 = vsyncpa [#allocation3], 0
    %19 = vsyncpa [#allocation5], 0
    // Predicated region
    $region2: #{tpu_custom_call.1} parent=1 // pred_check
      _
    $region3: #{tpu_custom_call.1} parent=1 // pred_check_branch
      %21 = sbr.rel (0) target = $region5
    $region4: #{tpu_custom_call.1} parent=1 // pred_region
      _
    $region5: #{tpu_custom_call.1} parent=1 // pred_fallthru
      _
    // Predicated region
    $region6: #{tpu_custom_call.1} parent=1 // pred_check
      _
    $region7: #{tpu_custom_call.1} parent=1 // pred_check_branch
      %23 = sbr.rel (0) target = $region9
    $region8: #{tpu_custom_call.1} parent=1 // pred_region
      _
    $region9: #{tpu_custom_call.1} parent=1 // pred_fallthru
      _
    // Predicated region
    $region10: #{tpu_custom_call.1} parent=1 // pred_check
      _
    $region11: #{tpu_custom_call.1} parent=1 // pred_check_branch
      %25 = sbr.rel (0) target = $region13
    $region12: #{tpu_custom_call.1} parent=1 // pred_region
      _
    $region13: #{tpu_custom_call.1} parent=1 // pred_fallthru
      _
    // Predicated region
    $region14: #{tpu_custom_call.1} parent=1 // pred_check
      _
    $region15: #{tpu_custom_call.1} parent=1 // pred_check_branch
      %27 = sbr.rel (0) target = $region17
    $region16: #{tpu_custom_call.1} parent=1 // pred_region
      _
    $region17: #{tpu_custom_call.1} parent=1 // pred_fallthru
      _
    // Predicated region
    $region18: #{tpu_custom_call.1} parent=1 // pred_check
      _
    $region19: #{tpu_custom_call.1} parent=1 // pred_check_branch
      %29 = sbr.rel (0) target = $region21
    $region20: #{tpu_custom_call.1} parent=1 // pred_region
      _
    $region21: #{tpu_custom_call.1} parent=1 // pred_fallthru
      _
    // Predicated region
    $region22: #{tpu_custom_call.1} parent=1 // pred_check
      _
    $region23: #{tpu_custom_call.1} parent=1 // pred_check_branch
      %31 = sbr.rel (0) target = $region25
    $region24: #{tpu_custom_call.1} parent=1 // pred_region
      _
    $region25: #{tpu_custom_call.1} parent=1 // pred_fallthru
      _
    // Predicated region
    $region26: #{tpu_custom_call.1} parent=1 // pred_check
      _
    $region27: #{tpu_custom_call.1} parent=1 // pred_check_branch
      %33 = sbr.rel (0) target = $region29
    $region28: #{tpu_custom_call.1} parent=1 // pred_region
      _
    $region29: #{tpu_custom_call.1} parent=1 // pred_fallthru
      _
    // Predicated region
    $region30: #{tpu_custom_call.1} parent=1 // pred_check
      _
    $region31: #{tpu_custom_call.1} parent=1 // pred_check_branch
      %35 = sbr.rel (0) target = $region33
    $region32: #{tpu_custom_call.1} parent=1 // pred_region
      _
    $region33: #{tpu_custom_call.1} parent=1 // pred_fallthru
      _
    // Predicated region
    $region34: #{tpu_custom_call.1} parent=1 // pred_check
      _
    $region35: #{tpu_custom_call.1} parent=1 // pred_check_branch
      %37 = sbr.rel (0) target = $region37
    $region36: #{tpu_custom_call.1} parent=1 // pred_region
      _
    $region37: #{tpu_custom_call.1} parent=1 // pred_fallthru
      _
    // Predicated region
    $region38: #{tpu_custom_call.1} parent=1 // pred_check
      _
    $region39: #{tpu_custom_call.1} parent=1 // pred_check_branch
      %39 = sbr.rel (0) target = $region41
    $region40: #{tpu_custom_call.1} parent=1 // pred_region
      _
    $region41: #{tpu_custom_call.1} parent=1 // pred_fallthru
      _
    // Predicated region
    $region42: #{tpu_custom_call.1} parent=1 // pred_check
      _
    $region43: #{tpu_custom_call.1} parent=1 // pred_check_branch
      %41 = sbr.rel (0) target = $region45
    $region44: #{tpu_custom_call.1} parent=1 // pred_region
      _
    $region45: #{tpu_custom_call.1} parent=1 // pred_fallthru
      _
    %v43 = vlaneseq
    %v44 = vshrl.u32 %v43, 7
    %vm45 = vcmp.lt.s32.totalorder %v44, 2
    %v46 = vld [vmem:[%s1] sm:$0xff]
    %v47 = vld [vmem:[%s1 + $0x8] sm:$0xff]
    %v48 = vld [vmem:[%s1 + $0x10] sm:$0xff]
    %v49 = vld [vmem:[%s1 + $0x18] sm:$0xff]
    %v50 = vld [vmem:[%s1 + $0x20] sm:$0xff]
    %v51 = vld [vmem:[%s1 + $0x28] sm:$0xff]
    %v52 = vpack.c.bf16 %v49, %v46
    %v53 = vpack.c.bf16 %v50, %v47
    %v54 = vpack.c.bf16 %v51, %v48
    %v55 = vld [vmem:[%s2] sm:$0xff]
    %v56 = vld [vmem:[%s2 + $0x8] sm:$0xff]
    %v57 = vld [vmem:[%s2 + $0x10] sm:$0xff]
    %v58 = vld [vmem:[%s2 + $0x18] sm:$0xff]
    %v59 = vld [vmem:[%s2 + $0x20] sm:$0xff]
    %v60 = vld [vmem:[%s2 + $0x28] sm:$0xff]
    %v61 = vld [vmem:[%s2 + $0x30] sm:$0xff]
    %v62 = vld [vmem:[%s2 + $0x38] sm:$0xff]
    %v63 = vld [vmem:[%s2 + $0x40] sm:$0xff]
    %v64 = vld [vmem:[%s2 + $0x48] sm:$0xff]
    %v65 = vld [vmem:[%s2 + $0x50] sm:$0xff]
    %v66 = vld [vmem:[%s2 + $0x58] sm:$0xff]
    %v67 = vld [vmem:[%s2 + $0x60] sm:$0xff]
    %v68 = vld [vmem:[%s2 + $0x68] sm:$0xff]
    %v69 = vld [vmem:[%s2 + $0x70] sm:$0xff]
    %v70 = vld [vmem:[%s2 + $0x78] sm:$0xff]
    %v71 = vld [vmem:[%s2 + $0x80] sm:$0xff]
    %v72 = vld [vmem:[%s2 + $0x88] sm:$0xff]
    %v73 = vld [vmem:[%s2 + $0x90] sm:$0xff]
    %v74 = vld [vmem:[%s2 + $0x98] sm:$0xff]
    %v75 = vld [vmem:[%s2 + $0xa0] sm:$0xff]
    %v76 = vld [vmem:[%s2 + $0xa8] sm:$0xff]
    %v77 = vld [vmem:[%s2 + $0xb0] sm:$0xff]
    %v78 = vld [vmem:[%s2 + $0xb8] sm:$0xff]
    %v79 = vld [vmem:[%s2 + $0xc0] sm:$0xff]
    %v80 = vld [vmem:[%s2 + $0xc8] sm:$0xff]
    %v81 = vld [vmem:[%s2 + $0xd0] sm:$0xff]
    %v82 = vld [vmem:[%s2 + $0xd8] sm:$0xff]
    %v83 = vld [vmem:[%s2 + $0xe0] sm:$0xff]
    %v84 = vld [vmem:[%s2 + $0xe8] sm:$0xff]
    %v85 = vld [vmem:[%s2 + $0xf0] sm:$0xff]
    %v86 = vld [vmem:[%s2 + $0xf8] sm:$0xff]
    %v87 = vld [vmem:[%s2 + $0x100] sm:$0xff]
    %v88 = vld [vmem:[%s2 + $0x108] sm:$0xff]
    %v89 = vld [vmem:[%s2 + $0x110] sm:$0xff]
    %v90 = vld [vmem:[%s2 + $0x118] sm:$0xff]
    %v91 = vld [vmem:[%s2 + $0x120] sm:$0xff]
    %v92 = vld [vmem:[%s2 + $0x128] sm:$0x33]
    %v131 = vunpack.c.l.b16 %v55
    %v132 = vunpack.c.h.b16 %v55
    %v133 = vunpack.c.l.b16 %v56
    %v134 = vunpack.c.h.b16 %v56
    %v135 = vunpack.c.l.b16 %v57
    %v136 = vunpack.c.h.b16 %v57
    %v137 = vunpack.c.l.b16 %v58
    %v138 = vunpack.c.h.b16 %v58
    %v139 = vunpack.c.l.b16 %v59
    %v140 = vunpack.c.h.b16 %v59
    %v141 = vunpack.c.l.b16 %v60
    %v142 = vunpack.c.h.b16 %v60
    %v143 = vunpack.c.l.b16 %v61
    %v144 = vunpack.c.h.b16 %v61
    %v145 = vunpack.c.l.b16 %v62
    %v146 = vunpack.c.h.b16 %v62
    %v147 = vunpack.c.l.b16 %v63
    %v148 = vunpack.c.h.b16 %v63
    %v149 = vunpack.c.l.b16 %v64
    %v150 = vunpack.c.h.b16 %v64
    %v151 = vunpack.c.l.b16 %v65
    %v152 = vunpack.c.h.b16 %v65
    %v153 = vunpack.c.l.b16 %v66
    %v154 = vunpack.c.h.b16 %v66
    %v155 = vunpack.c.l.b16 %v67
    %v156 = vunpack.c.h.b16 %v67
    %v157 = vunpack.c.l.b16 %v68
    %v158 = vunpack.c.h.b16 %v68
    %v159 = vunpack.c.l.b16 %v69
    %v160 = vunpack.c.h.b16 %v69
    %v161 = vunpack.c.l.b16 %v70
    %v162 = vunpack.c.h.b16 %v70
    %v163 = vunpack.c.l.b16 %v71
    %v164 = vunpack.c.h.b16 %v71
    %v165 = vunpack.c.l.b16 %v72
    %v166 = vunpack.c.h.b16 %v72
    %v167 = vunpack.c.l.b16 %v73
    %v168 = vunpack.c.h.b16 %v73
    %v169 = vunpack.c.l.b16 %v74
    %v170 = vunpack.c.h.b16 %v74
    %v171 = vunpack.c.l.b16 %v75
    %v172 = vunpack.c.h.b16 %v75
    %v173 = vunpack.c.l.b16 %v76
    %v174 = vunpack.c.h.b16 %v76
    %v175 = vunpack.c.l.b16 %v77
    %v176 = vunpack.c.h.b16 %v77
    %v177 = vunpack.c.l.b16 %v78
    %v178 = vunpack.c.h.b16 %v78
    %v179 = vunpack.c.l.b16 %v79
    %v180 = vunpack.c.h.b16 %v79
    %v181 = vunpack.c.l.b16 %v80
    %v182 = vunpack.c.h.b16 %v80
    %v183 = vunpack.c.l.b16 %v81
    %v184 = vunpack.c.h.b16 %v81
    %v185 = vunpack.c.l.b16 %v82
    %v186 = vunpack.c.h.b16 %v82
    %v187 = vunpack.c.l.b16 %v83
    %v188 = vunpack.c.h.b16 %v83
    %v189 = vunpack.c.l.b16 %v84
    %v190 = vunpack.c.h.b16 %v84
    %v191 = vunpack.c.l.b16 %v85
    %v192 = vunpack.c.h.b16 %v85
    %v193 = vunpack.c.l.b16 %v86
    %v194 = vunpack.c.h.b16 %v86
    %v195 = vunpack.c.l.b16 %v87
    %v196 = vunpack.c.h.b16 %v87
    %v197 = vunpack.c.l.b16 %v88
    %v198 = vunpack.c.h.b16 %v88
    %v199 = vunpack.c.l.b16 %v89
    %v200 = vunpack.c.h.b16 %v89
    %v201 = vunpack.c.l.b16 %v90
    %v202 = vunpack.c.h.b16 %v90
    %v203 = vunpack.c.l.b16 %v91
    %v204 = vunpack.c.h.b16 %v91
    %v205 = vunpack.c.l.b16 %v92
    %v206 = vunpack.c.h.b16 %v92
    %v207 = vpack.c.b16 %v133, %v131
    %v208 = vpack.c.b16 %v134, %v132
    %v209 = vpack.c.b16 %v137, %v135
    %v210 = vpack.c.b16 %v138, %v136
    %v211 = vpack.c.b16 %v141, %v139
    %v212 = vpack.c.b16 %v142, %v140
    %v213 = vpack.c.b16 %v145, %v143
    %v214 = vpack.c.b16 %v146, %v144
    %v215 = vpack.c.b16 %v149, %v147
    %v216 = vpack.c.b16 %v150, %v148
    %v217 = vpack.c.b16 %v153, %v151
    %v218 = vpack.c.b16 %v154, %v152
    %v219 = vpack.c.b16 %v157, %v155
    %v220 = vpack.c.b16 %v158, %v156
    %v221 = vpack.c.b16 %v161, %v159
    %v222 = vpack.c.b16 %v162, %v160
    %v223 = vpack.c.b16 %v165, %v163
    %v224 = vpack.c.b16 %v166, %v164
    %v225 = vpack.c.b16 %v169, %v167
    %v226 = vpack.c.b16 %v170, %v168
    %v227 = vpack.c.b16 %v173, %v171
    %v228 = vpack.c.b16 %v174, %v172
    %v229 = vpack.c.b16 %v177, %v175
    %v230 = vpack.c.b16 %v178, %v176
    %v231 = vpack.c.b16 %v181, %v179
    %v232 = vpack.c.b16 %v182, %v180
    %v233 = vpack.c.b16 %v185, %v183
    %v234 = vpack.c.b16 %v186, %v184
    %v235 = vpack.c.b16 %v189, %v187
    %v236 = vpack.c.b16 %v190, %v188
    %v237 = vpack.c.b16 %v193, %v191
    %v238 = vpack.c.b16 %v194, %v192
    %v239 = vpack.c.b16 %v197, %v195
    %v240 = vpack.c.b16 %v198, %v196
    %v241 = vpack.c.b16 %v201, %v199
    %v242 = vpack.c.b16 %v202, %v200
    %v243 = vpack.c.b16 %v205, %v203
    %v244 = vpack.c.b16 %v206, %v204
    %vm281 = vcmask 359424
    %v283 = vsel %vm281, %v54, 0
    %vm285 = vcmask 1045504
    %v287 = vsel %vm285, %v243, 0
    %v290 = vsel %vm285, %v244, 0
    %292 = vmatprep.subr.bf16.mxu0 %v208
    %293 = vmatpush1.bf16.msra.mxu0 %v207
    %294 = vmatprep.subr.bf16.mxu0 %v210
    %295 = vmatpush1.bf16.msra.mxu0 %v209
    %296 = vmatprep.subr.bf16.mxu0 %v212
    %297 = vmatpush1.bf16.msra.mxu0 %v211
    %298 = vmatprep.subr.bf16.mxu0 %v214
    %299 = vmatpush1.bf16.msra.mxu0 %v213
    %300 = vmatprep.subr.bf16.mxu0 %v216
    %301 = vmatpush1.bf16.msra.mxu0 %v215
    %302 = vmatprep.subr.bf16.mxu0 %v218
    %303 = vmatpush1.bf16.msra.mxu0 %v217
    %304 = vmatprep.subr.bf16.mxu0 %v220
    %305 = vmatpush1.bf16.msra.mxu0 %v219
    %306 = vmatprep.subr.bf16.mxu0 %v222
    %307 = vmatpush1.bf16.msra.mxu0 %v221
    %308 = vmatprep.subr.bf16.mxu0 %v224
    %309 = vmatpush1.bf16.msra.mxu0 %v223
    %310 = vmatprep.subr.bf16.mxu0 %v226
    %311 = vmatpush1.bf16.msra.mxu0 %v225
    %312 = vmatprep.subr.bf16.mxu0 %v228
    %313 = vmatpush1.bf16.msra.mxu0 %v227
    %314 = vmatprep.subr.bf16.mxu0 %v230
    %315 = vmatpush1.bf16.msra.mxu0 %v229
    %316 = vmatprep.subr.bf16.mxu0 %v232
    %317 = vmatpush1.bf16.msra.mxu0 %v231
    %318 = vmatprep.subr.bf16.mxu0 %v234
    %319 = vmatpush1.bf16.msra.mxu0 %v233
    %320 = vmatprep.subr.bf16.mxu0 %v236
    %321 = vmatpush1.bf16.msra.mxu0 %v235
    %322 = vmatprep.subr.bf16.mxu0 %v238
    %323 = vmatpush1.bf16.msra.mxu0 %v237
    %324 = vmatprep.mubr.bf16.mxu0 %v53
    %325 = vmatmul.mubr.bf16.gmra.mrb[0].mxu0 %v52
    %v326 = vpop.f32.mrb[0].mxu0
    %v327 = vadd.f32 0.0, %v326
    %v328 = vpop.f32.mrb[0].mxu0
    %v329 = vadd.f32 0.0, %v328
    %v330 = vpop.f32.mrb[0].mxu0
    %v331 = vadd.f32 0.0, %v330
    %v332 = vpop.f32.mrb[0].mxu0
    %v333 = vadd.f32 0.0, %v332
    %334 = vdwg.mxu0
    %335 = vmatprep.subr.bf16.mxu0 %v240
    %336 = vmatpush1.bf16.msra.mxu0 %v239
    %337 = vmatprep.subr.bf16.mxu0 %v242
    %338 = vmatpush1.bf16.msra.mxu0 %v241
    %339 = vmatprep.subr.bf16.mxu0 %v290
    %340 = vmatpush1.bf16.msra.mxu0 %v287
    %341 = vmatprep.subr.bf16.mxu0 0
    %342 = vmatpush1.bf16.msra.mxu0 0
    %343 = vmatprep.subr.bf16.mxu0 0
    %344 = vmatpush1.bf16.msra.mxu0 0
    %345 = vmatprep.subr.bf16.mxu0 0
    %346 = vmatpush1.bf16.msra.mxu0 0
    %347 = vmatprep.subr.bf16.mxu0 0
    %348 = vmatpush1.bf16.msra.mxu0 0
    %349 = vmatprep.subr.bf16.mxu0 0
    %350 = vmatpush1.bf16.msra.mxu0 0
    %351 = vmatprep.subr.bf16.mxu0 0
    %352 = vmatpush1.bf16.msra.mxu0 0
    %353 = vmatprep.subr.bf16.mxu0 0
    %354 = vmatpush1.bf16.msra.mxu0 0
    %355 = vmatprep.subr.bf16.mxu0 0
    %356 = vmatpush1.bf16.msra.mxu0 0
    %357 = vmatprep.subr.bf16.mxu0 0
    %358 = vmatpush1.bf16.msra.mxu0 0
    %359 = vmatprep.subr.bf16.mxu0 0
    %360 = vmatpush1.bf16.msra.mxu0 0
    %361 = vmatprep.subr.bf16.mxu0 0
    %362 = vmatpush1.bf16.msra.mxu0 0
    %363 = vmatprep.subr.bf16.mxu0 0
    %364 = vmatpush1.bf16.msra.mxu0 0
    %365 = vmatprep.subr.bf16.mxu0 0
    %366 = vmatpush1.bf16.msra.mxu0 0
    %367 = vmatprep.mubr.bf16.mxu0 0
    %368 = vmatmul.mubr.bf16.gmra.mrb[0].mxu0 %v283
    %v369 = vpop.f32.mrb[0].mxu0
    %v370 = vadd.f32 %v327, %v369
    %v371 = vpop.f32.mrb[0].mxu0
    %v372 = vadd.f32 %v329, %v371
    %v373 = vpop.f32.mrb[0].mxu0
    %v374 = vadd.f32 %v331, %v373
    %v375 = vpop.f32.mrb[0].mxu0
    %v376 = vadd.f32 %v333, %v375
    %377 = vdwg.mxu0
    %v378 = vld [vmem:[%s4] sm:$0x1]
    %v379 = vld [vmem:[%s4 + $0x1] sm:$0x1]
    %vm380 = vcmask 785408
    %v381 = vsel %vm380, %v370, 0.0
    %382 = vadd.xlane.f32.xlu0 %v381
    %v383 = vpop.xlane.xlu0 %382
    %v384 = vsel %vm380, %v374, 0.0
    %385 = vadd.xlane.f32.xlu0 %v384
    %v386 = vpop.xlane.xlu0 %385
    %v387 = vrcp.pop 96.0
    %v388 = vmul.f32 %v383, %v387
    %v389 = vmul.f32 %v386, %v387
    %v390 = vsub.f32 %v370, %v388
    %v391 = vsub.f32 %v374, %v389
    %v392 = vmul.f32 %v390, %v390
    %v393 = vmul.f32 %v391, %v391
    %v394 = vsel %vm380, %v392, 0.0
    %395 = vadd.xlane.f32.xlu0 %v394
    %v396 = vpop.xlane.xlu0 %395
    %v397 = vsel %vm380, %v393, 0.0
    %398 = vadd.xlane.f32.xlu0 %v397
    %v399 = vpop.xlane.xlu0 %398
    %v400 = vmul.f32 %v396, %v387
    %v401 = vmul.f32 %v399, %v387
    %v402 = vadd.f32 %v400, 1e-05
    %v403 = vadd.f32 %v401, 1e-05
    %v404 = vrsqrt.pop %v402
    %v405 = vrsqrt.pop %v403
    %v406 = vmul.f32 %v390, %v404
    %v407 = vmul.f32 %v391, %v405
    %v408 = vlaneseq
    %v409 = vshrl.u32 %v408, 7
    %v410 = vsub.s32 0, %v409
    %v411 = vrot.slane %v378, %v410
    %v412 = vmul.f32 %v406, %v411
    %v413 = vmul.f32 %v407, %v411
    %v414 = vlaneseq
    %v415 = vshrl.u32 %v414, 7
    %v416 = vsub.s32 0, %v415
    %v417 = vrot.slane %v379, %v416
    %v418 = vadd.f32 %v412, %v417
    %v419 = vadd.f32 %v413, %v417
    %s420 = scalar_lea.vmem %s4, 2
    %v421 = vld [vmem:[%s420] sm:$0x1]
    %v422 = vld [vmem:[%s420 + $0x1] sm:$0x1]
    %427 = vrot.lane.b32.xlu0 %v370, 32
    %v428 = vpop.permute.xlu0 %427
    %429 = vrot.lane.b32.xlu0 %v372, 32
    %v430 = vpop.permute.xlu0 %429
    %431 = vrot.lane.b32.xlu0 %v374, 32
    %v432 = vpop.permute.xlu0 %431
    %433 = vrot.lane.b32.xlu0 %v376, 32
    %v434 = vpop.permute.xlu0 %433
    %vm435 = vcmask 261120
    %v436 = vsel %vm435, %v428, %v430
    %v437 = vsel %vm435, %v432, %v434
    %v440 = vsel %vm380, %v436, 0.0
    %441 = vadd.xlane.f32.xlu0 %v440
    %v442 = vpop.xlane.xlu0 %441
    %v443 = vsel %vm380, %v437, 0.0
    %444 = vadd.xlane.f32.xlu0 %v443
    %v445 = vpop.xlane.xlu0 %444
    %v446 = vmul.f32 %v442, %v387
    %v447 = vmul.f32 %v445, %v387
    %v448 = vsub.f32 %v370, %v446
    %v449 = vsub.f32 %v372, %v446
    %v450 = vsub.f32 %v374, %v447
    %v451 = vsub.f32 %v376, %v447
    %v452 = vmul.f32 %v448, %v448
    %v453 = vmul.f32 %v449, %v449
    %v454 = vmul.f32 %v450, %v450
    %v455 = vmul.f32 %v451, %v451
    %460 = vrot.lane.b32.xlu0 %v452, 32
    %v461 = vpop.permute.xlu0 %460
    %462 = vrot.lane.b32.xlu0 %v453, 32
    %v463 = vpop.permute.xlu0 %462
    %464 = vrot.lane.b32.xlu0 %v454, 32
    %v465 = vpop.permute.xlu0 %464
    %466 = vrot.lane.b32.xlu0 %v455, 32
    %v467 = vpop.permute.xlu0 %466
    %v468 = vsel %vm435, %v461, %v463
    %v469 = vsel %vm435, %v465, %v467
    %v472 = vsel %vm380, %v468, 0.0
    %473 = vadd.xlane.f32.xlu0 %v472
    %v474 = vpop.xlane.xlu0 %473
    %v475 = vsel %vm380, %v469, 0.0
    %476 = vadd.xlane.f32.xlu0 %v475
    %v477 = vpop.xlane.xlu0 %476
    %v478 = vmul.f32 %v474, %v387
    %v479 = vmul.f32 %v477, %v387
    %v480 = vadd.f32 %v478, 1e-05
    %v481 = vadd.f32 %v479, 1e-05
    %v482 = vrsqrt.pop %v480
    %v483 = vrsqrt.pop %v481
    %v484 = vmul.f32 %v448, %v482
    %v485 = vmul.f32 %v449, %v482
    %v486 = vmul.f32 %v450, %v483
    %v487 = vmul.f32 %v451, %v483
    %v488 = vlaneseq
    %v489 = vshrl.u32 %v488, 7
    %v490 = vsub.s32 0, %v489
    %v491 = vrot.slane %v421, %v490
    %493 = vrot.lane.b32.xlu0 %v491, 96
    %v494 = vpop.permute.xlu0 %493
    %v496 = vmul.f32 %v484, %v494
    %v497 = vmul.f32 %v485, %v494
    %v498 = vmul.f32 %v486, %v494
    %v499 = vmul.f32 %v487, %v494
    %v500 = vlaneseq
    %v501 = vshrl.u32 %v500, 7
    %v502 = vsub.s32 0, %v501
    %v503 = vrot.slane %v422, %v502
    %505 = vrot.lane.b32.xlu0 %v503, 96
    %v506 = vpop.permute.xlu0 %505
    %v508 = vadd.f32 %v496, %v506
    %v509 = vadd.f32 %v497, %v506
    %v510 = vadd.f32 %v498, %v506
    %v511 = vadd.f32 %v499, %v506
    %v514 = vrot.slane %v510, 4
    %v515 = vrot.slane %v511, 4
    %516 = vrot.lane.b32.xlu0 %v514, 32
    %v517 = vpop.permute.xlu0 %516
    %518 = vrot.lane.b32.xlu0 %v515, 32
    %v519 = vpop.permute.xlu0 %518
    %v520 = vsel %vm435, %v517, %v519
    %vm522 = vcmask 1041408
    %v523 = vsel %vm522, %v418, %v520
    %v525 = vrot.slane %v418, 2
    %v527 = vrot.slane %v510, 2
    %v528 = vrot.slane %v511, 2
    %529 = vrot.lane.b32.xlu0 %v527, 32
    %v530 = vpop.permute.xlu0 %529
    %531 = vrot.lane.b32.xlu0 %v528, 32
    %v532 = vpop.permute.xlu0 %531
    %v533 = vsel %vm435, %v530, %v532
    %v535 = vsel %vm522, %v525, %v533
    %v536 = vrot.slane %v418, 4
    %538 = vrot.lane.b32.xlu0 %v510, 32
    %v539 = vpop.permute.xlu0 %538
    %540 = vrot.lane.b32.xlu0 %v511, 32
    %v541 = vpop.permute.xlu0 %540
    %v542 = vsel %vm435, %v539, %v541
    %v544 = vsel %vm522, %v536, %v542
    %v545 = vrot.slane %v418, 6
    %v547 = vrot.slane %v510, 6
    %v548 = vrot.slane %v511, 6
    %549 = vrot.lane.b32.xlu0 %v547, 32
    %v550 = vpop.permute.xlu0 %549
    %551 = vrot.lane.b32.xlu0 %v548, 32
    %v552 = vpop.permute.xlu0 %551
    %v553 = vsel %vm435, %v550, %v552
    %v555 = vsel %vm522, %v545, %v553
    %v558 = vrot.slane %v508, 4
    %v559 = vrot.slane %v509, 4
    %560 = vrot.lane.b32.xlu0 %v558, 32
    %v561 = vpop.permute.xlu0 %560
    %562 = vrot.lane.b32.xlu0 %v559, 32
    %v563 = vpop.permute.xlu0 %562
    %v564 = vsel %vm435, %v561, %v563
    %v566 = vsel %vm522, %v419, %v564
    %v568 = vrot.slane %v419, 2
    %v570 = vrot.slane %v508, 2
    %v571 = vrot.slane %v509, 2
    %572 = vrot.lane.b32.xlu0 %v570, 32
    %v573 = vpop.permute.xlu0 %572
    %574 = vrot.lane.b32.xlu0 %v571, 32
    %v575 = vpop.permute.xlu0 %574
    %v576 = vsel %vm435, %v573, %v575
    %v578 = vsel %vm522, %v568, %v576
    %v579 = vrot.slane %v419, 4
    %581 = vrot.lane.b32.xlu0 %v508, 32
    %v582 = vpop.permute.xlu0 %581
    %583 = vrot.lane.b32.xlu0 %v509, 32
    %v584 = vpop.permute.xlu0 %583
    %v585 = vsel %vm435, %v582, %v584
    %v587 = vsel %vm522, %v579, %v585
    %v588 = vrot.slane %v419, 6
    %v590 = vrot.slane %v508, 6
    %v591 = vrot.slane %v509, 6
    %592 = vrot.lane.b32.xlu0 %v590, 32
    %v593 = vpop.permute.xlu0 %592
    %594 = vrot.lane.b32.xlu0 %v591, 32
    %v595 = vpop.permute.xlu0 %594
    %v596 = vsel %vm435, %v593, %v595
    %v598 = vsel %vm522, %v588, %v596
    %v599 = vld [vmem:[%s3] sm:$0xff]
    %v600 = vld [vmem:[%s3 + $0x8] sm:$0xff]
    %v601 = vld [vmem:[%s3 + $0x10] sm:$0xff]
    %v602 = vld [vmem:[%s3 + $0x18] sm:$0xff]
    %v603 = vld [vmem:[%s5] sm:$0xf]
    %s604 = scalar_lea.vmem %s5, 4
    %v605 = vld [vmem:[%s604] sm:$0xf]
    %v606 = vld [vmem:[%s10] sm:$0xf]
    %v607 = vpack.c.bf16 %v606, %v606
    %v612 = vunpack.c.l.b16 %v599
    %v613 = vunpack.c.h.b16 %v599
    %v614 = vunpack.c.l.b16 %v600
    %v615 = vunpack.c.h.b16 %v600
    %v616 = vunpack.c.l.b16 %v601
    %v617 = vunpack.c.h.b16 %v601
    %v618 = vunpack.c.l.b16 %v602
    %v619 = vunpack.c.h.b16 %v602
    %v620 = vpack.c.b16 %v614, %v612
    %v621 = vpack.c.b16 %v615, %v613
    %v622 = vpack.c.b16 %v618, %v616
    %v623 = vpack.c.b16 %v619, %v617
    %v629 = vsel %vm435, %v607, 0
    %631 = vmatprep.subr.bf16.mxu0 %v621
    %632 = vmatpush1.bf16.msra.mxu0 %v620
    %633 = vmatprep.subr.bf16.mxu0 %v623
    %634 = vmatpush1.bf16.msra.mxu0 %v622
    %635 = vmatprep.subr.bf16.mxu0 0
    %636 = vmatpush1.bf16.msra.mxu0 0
    %637 = vmatprep.subr.bf16.mxu0 0
    %638 = vmatpush1.bf16.msra.mxu0 0
    %639 = vmatprep.subr.bf16.mxu0 0
    %640 = vmatpush1.bf16.msra.mxu0 0
    %641 = vmatprep.subr.bf16.mxu0 0
    %642 = vmatpush1.bf16.msra.mxu0 0
    %643 = vmatprep.subr.bf16.mxu0 0
    %644 = vmatpush1.bf16.msra.mxu0 0
    %645 = vmatprep.subr.bf16.mxu0 0
    %646 = vmatpush1.bf16.msra.mxu0 0
    %647 = vmatprep.subr.bf16.mxu0 0
    %648 = vmatpush1.bf16.msra.mxu0 0
    %649 = vmatprep.subr.bf16.mxu0 0
    %650 = vmatpush1.bf16.msra.mxu0 0
    %651 = vmatprep.subr.bf16.mxu0 0
    %652 = vmatpush1.bf16.msra.mxu0 0
    %653 = vmatprep.subr.bf16.mxu0 0
    %654 = vmatpush1.bf16.msra.mxu0 0
    %655 = vmatprep.subr.bf16.mxu0 0
    %656 = vmatpush1.bf16.msra.mxu0 0
    %657 = vmatprep.subr.bf16.mxu0 0
    %658 = vmatpush1.bf16.msra.mxu0 0
    %659 = vmatprep.subr.bf16.mxu0 0
    %660 = vmatpush1.bf16.msra.mxu0 0
    %661 = vmatprep.subr.bf16.mxu0 0
    %662 = vmatpush1.bf16.msra.mxu0 0
    %663 = vmatprep.mubr.bf16.mxu0 0
    %664 = vmatmul.mubr.bf16.gmra.mrb[0].mxu0 %v629
    %v665 = vpop.f32.mrb[0].mxu0
    %v666 = vadd.f32 0.0, %v665
    %v667 = vpop.f32.mrb[0].mxu0
    %v668 = vadd.f32 0.0, %v667
    %v669 = vpop.f32.mrb[0].mxu0
    %v670 = vpop.f32.mrb[0].mxu0
    %671 = vdwg.mxu0
    %674 = vrot.lane.b32.xlu0 %v666, 32
    %v675 = vpop.permute.xlu0 %674
    %676 = vrot.lane.b32.xlu0 %v668, 32
    %v677 = vpop.permute.xlu0 %676
    %v678 = vsel %vm435, %v675, %v677
    %v680 = vsel %vm45, %v666, %v678
    %vm681 = vcmask 781312
    %v682 = vsel %vm681, %v680, 0.0
    %683 = vadd.xlane.f32.xlu0 %v682
    %v684 = vpop.xlane.xlu0 %683
    %v685 = vmul.f32 %v684, %v387
    %v686 = vsub.f32 %v680, %v685
    %v687 = vmul.f32 %v686, %v686
    %v688 = vsel %vm681, %v687, 0.0
    %689 = vadd.xlane.f32.xlu0 %v688
    %v690 = vpop.xlane.xlu0 %689
    %v691 = vmul.f32 %v690, %v387
    %v692 = vadd.f32 %v691, 1e-05
    %v693 = vrsqrt.pop %v692
    %v694 = vmul.f32 %v686, %v693
    %v695 = vmul.f32 %v694, %v603
    %v696 = vadd.f32 %v695, %v605
    %v697 = vadd.f32 %v523, %v696
    %v698 = vxor.u32 %v697, 2147483648
    %v699 = vmul.f32 %v698, 1.442695
    %v700 = vpow.pop %v699
    %v701 = vadd.f32 %v700, 1.0
    %v702 = vrcp.pop %v701
    %v703 = vmul.f32 1.0, %v702
    %705 = vrot.lane.b32.xlu0 %v696, 64
    %v706 = vpop.permute.xlu0 %705
    %v708 = vmul.f32 %v703, %v706
    %710 = vrot.lane.b32.xlu0 %v708, 64
    %v711 = vpop.permute.xlu0 %710
    %v713 = vadd.f32 %v523, %v711
    %v714 = vtanh.pop %v713
    %v715 = vsub.f32 1.0, %v703
    %717 = vrot.lane.b32.xlu0 %v714, 96
    %v718 = vpop.permute.xlu0 %717
    %v720 = vmul.f32 %v715, %v718
    %722 = vrot.lane.b32.xlu0 %v606, 32
    %v723 = vpop.permute.xlu0 %722
    %v725 = vmul.f32 %v703, %v723
    %v726 = vadd.f32 %v720, %v725
    %v727 = vpack.c.bf16 %v726, %v726
    %729 = vrot.lane.b32.xlu0 %v727, 96
    %v730 = vpop.permute.xlu0 %729
    %v732 = vsel %vm435, %v730, 0
    %734 = vmatprep.subr.bf16.mxu0 %v621
    %735 = vmatpush1.bf16.msra.mxu0 %v620
    %736 = vmatprep.subr.bf16.mxu0 %v623
    %737 = vmatpush1.bf16.msra.mxu0 %v622
    %738 = vmatprep.subr.bf16.mxu0 0
    %739 = vmatpush1.bf16.msra.mxu0 0
    %740 = vmatprep.subr.bf16.mxu0 0
    %741 = vmatpush1.bf16.msra.mxu0 0
    %742 = vmatprep.subr.bf16.mxu0 0
    %743 = vmatpush1.bf16.msra.mxu0 0
    %744 = vmatprep.subr.bf16.mxu0 0
    %745 = vmatpush1.bf16.msra.mxu0 0
    %746 = vmatprep.subr.bf16.mxu0 0
    %747 = vmatpush1.bf16.msra.mxu0 0
    %748 = vmatprep.subr.bf16.mxu0 0
    %749 = vmatpush1.bf16.msra.mxu0 0
    %750 = vmatprep.subr.bf16.mxu0 0
    %751 = vmatpush1.bf16.msra.mxu0 0
    %752 = vmatprep.subr.bf16.mxu0 0
    %753 = vmatpush1.bf16.msra.mxu0 0
    %754 = vmatprep.subr.bf16.mxu0 0
    %755 = vmatpush1.bf16.msra.mxu0 0
    %756 = vmatprep.subr.bf16.mxu0 0
    %757 = vmatpush1.bf16.msra.mxu0 0
    %758 = vmatprep.subr.bf16.mxu0 0
    %759 = vmatpush1.bf16.msra.mxu0 0
    %760 = vmatprep.subr.bf16.mxu0 0
    %761 = vmatpush1.bf16.msra.mxu0 0
    %762 = vmatprep.subr.bf16.mxu0 0
    %763 = vmatpush1.bf16.msra.mxu0 0
    %764 = vmatprep.subr.bf16.mxu0 0
    %765 = vmatpush1.bf16.msra.mxu0 0
    %766 = vmatprep.mubr.bf16.mxu0 0
    %767 = vmatmul.mubr.bf16.gmra.mrb[0].mxu0 %v732
    %v768 = vpop.f32.mrb[0].mxu0
    %v769 = vadd.f32 0.0, %v768
    %v770 = vpop.f32.mrb[0].mxu0
    %v771 = vadd.f32 0.0, %v770
    %v772 = vpop.f32.mrb[0].mxu0
    %v773 = vpop.f32.mrb[0].mxu0
    %774 = vdwg.mxu0
    %777 = vrot.lane.b32.xlu0 %v769, 32
    %v778 = vpop.permute.xlu0 %777
    %779 = vrot.lane.b32.xlu0 %v771, 32
    %v780 = vpop.permute.xlu0 %779
    %v781 = vsel %vm435, %v778, %v780
    %v783 = vsel %vm45, %v769, %v781
    %v784 = vsel %vm681, %v783, 0.0
    %785 = vadd.xlane.f32.xlu0 %v784
    %v786 = vpop.xlane.xlu0 %785
    %v787 = vmul.f32 %v786, %v387
    %v788 = vsub.f32 %v783, %v787
    %v789 = vmul.f32 %v788, %v788
    %v790 = vsel %vm681, %v789, 0.0
    %791 = vadd.xlane.f32.xlu0 %v790
    %v792 = vpop.xlane.xlu0 %791
    %v793 = vmul.f32 %v792, %v387
    %v794 = vadd.f32 %v793, 1e-05
    %v795 = vrsqrt.pop %v794
    %v796 = vmul.f32 %v788, %v795
    %v797 = vmul.f32 %v796, %v603
    %v798 = vadd.f32 %v797, %v605
    %v799 = vadd.f32 %v535, %v798
    %v800 = vxor.u32 %v799, 2147483648
    %v801 = vmul.f32 %v800, 1.442695
    %v802 = vpow.pop %v801
    %v803 = vadd.f32 %v802, 1.0
    %v804 = vrcp.pop %v803
    %v805 = vmul.f32 1.0, %v804
    %807 = vrot.lane.b32.xlu0 %v798, 64
    %v808 = vpop.permute.xlu0 %807
    %v810 = vmul.f32 %v805, %v808
    %812 = vrot.lane.b32.xlu0 %v810, 64
    %v813 = vpop.permute.xlu0 %812
    %v815 = vadd.f32 %v535, %v813
    %v816 = vtanh.pop %v815
    %v817 = vsub.f32 1.0, %v805
    %819 = vrot.lane.b32.xlu0 %v816, 96
    %v820 = vpop.permute.xlu0 %819
    %v822 = vmul.f32 %v817, %v820
    %v823 = vmul.f32 %v805, %v726
    %v824 = vadd.f32 %v822, %v823
    %v825 = vpack.c.bf16 %v824, %v824
    %827 = vrot.lane.b32.xlu0 %v825, 96
    %v828 = vpop.permute.xlu0 %827
    %v830 = vsel %vm435, %v828, 0
    %832 = vmatprep.subr.bf16.mxu0 %v621
    %833 = vmatpush1.bf16.msra.mxu0 %v620
    %834 = vmatprep.subr.bf16.mxu0 %v623
    %835 = vmatpush1.bf16.msra.mxu0 %v622
    %836 = vmatprep.subr.bf16.mxu0 0
    %837 = vmatpush1.bf16.msra.mxu0 0
    %838 = vmatprep.subr.bf16.mxu0 0
    %839 = vmatpush1.bf16.msra.mxu0 0
    %840 = vmatprep.subr.bf16.mxu0 0
    %841 = vmatpush1.bf16.msra.mxu0 0
    %842 = vmatprep.subr.bf16.mxu0 0
    %843 = vmatpush1.bf16.msra.mxu0 0
    %844 = vmatprep.subr.bf16.mxu0 0
    %845 = vmatpush1.bf16.msra.mxu0 0
    %846 = vmatprep.subr.bf16.mxu0 0
    %847 = vmatpush1.bf16.msra.mxu0 0
    %848 = vmatprep.subr.bf16.mxu0 0
    %849 = vmatpush1.bf16.msra.mxu0 0
    %850 = vmatprep.subr.bf16.mxu0 0
    %851 = vmatpush1.bf16.msra.mxu0 0
    %852 = vmatprep.subr.bf16.mxu0 0
    %853 = vmatpush1.bf16.msra.mxu0 0
    %854 = vmatprep.subr.bf16.mxu0 0
    %855 = vmatpush1.bf16.msra.mxu0 0
    %856 = vmatprep.subr.bf16.mxu0 0
    %857 = vmatpush1.bf16.msra.mxu0 0
    %858 = vmatprep.subr.bf16.mxu0 0
    %859 = vmatpush1.bf16.msra.mxu0 0
    %860 = vmatprep.subr.bf16.mxu0 0
    %861 = vmatpush1.bf16.msra.mxu0 0
    %862 = vmatprep.subr.bf16.mxu0 0
    %863 = vmatpush1.bf16.msra.mxu0 0
    %864 = vmatprep.mubr.bf16.mxu0 0
    %865 = vmatmul.mubr.bf16.gmra.mrb[0].mxu0 %v830
    %v866 = vpop.f32.mrb[0].mxu0
    %v867 = vadd.f32 0.0, %v866
    %v868 = vpop.f32.mrb[0].mxu0
    %v869 = vadd.f32 0.0, %v868
    %v870 = vpop.f32.mrb[0].mxu0
    %v871 = vpop.f32.mrb[0].mxu0
    %872 = vdwg.mxu0
    %875 = vrot.lane.b32.xlu0 %v867, 32
    %v876 = vpop.permute.xlu0 %875
    %877 = vrot.lane.b32.xlu0 %v869, 32
    %v878 = vpop.permute.xlu0 %877
    %v879 = vsel %vm435, %v876, %v878
    %v881 = vsel %vm45, %v867, %v879
    %v882 = vsel %vm681, %v881, 0.0
    %883 = vadd.xlane.f32.xlu0 %v882
    %v884 = vpop.xlane.xlu0 %883
    %v885 = vmul.f32 %v884, %v387
    %v886 = vsub.f32 %v881, %v885
    %v887 = vmul.f32 %v886, %v886
    %v888 = vsel %vm681, %v887, 0.0
    %889 = vadd.xlane.f32.xlu0 %v888
    %v890 = vpop.xlane.xlu0 %889
    %v891 = vmul.f32 %v890, %v387
    %v892 = vadd.f32 %v891, 1e-05
    %v893 = vrsqrt.pop %v892
    %v894 = vmul.f32 %v886, %v893
    %v895 = vmul.f32 %v894, %v603
    %v896 = vadd.f32 %v895, %v605
    %v897 = vadd.f32 %v544, %v896
    %v898 = vxor.u32 %v897, 2147483648
    %v899 = vmul.f32 %v898, 1.442695
    %v900 = vpow.pop %v899
    %v901 = vadd.f32 %v900, 1.0
    %v902 = vrcp.pop %v901
    %v903 = vmul.f32 1.0, %v902
    %905 = vrot.lane.b32.xlu0 %v896, 64
    %v906 = vpop.permute.xlu0 %905
    %v908 = vmul.f32 %v903, %v906
    %910 = vrot.lane.b32.xlu0 %v908, 64
    %v911 = vpop.permute.xlu0 %910
    %v913 = vadd.f32 %v544, %v911
    %v914 = vtanh.pop %v913
    %v915 = vsub.f32 1.0, %v903
    %917 = vrot.lane.b32.xlu0 %v914, 96
    %v918 = vpop.permute.xlu0 %917
    %v920 = vmul.f32 %v915, %v918
    %v921 = vmul.f32 %v903, %v824
    %v922 = vadd.f32 %v920, %v921
    %v923 = vpack.c.bf16 %v922, %v922
    %925 = vrot.lane.b32.xlu0 %v923, 96
    %v926 = vpop.permute.xlu0 %925
    %v928 = vsel %vm435, %v926, 0
    %930 = vmatprep.subr.bf16.mxu0 %v621
    %931 = vmatpush1.bf16.msra.mxu0 %v620
    %932 = vmatprep.subr.bf16.mxu0 %v623
    %933 = vmatpush1.bf16.msra.mxu0 %v622
    %934 = vmatprep.subr.bf16.mxu0 0
    %935 = vmatpush1.bf16.msra.mxu0 0
    %936 = vmatprep.subr.bf16.mxu0 0
    %937 = vmatpush1.bf16.msra.mxu0 0
    %938 = vmatprep.subr.bf16.mxu0 0
    %939 = vmatpush1.bf16.msra.mxu0 0
    %940 = vmatprep.subr.bf16.mxu0 0
    %941 = vmatpush1.bf16.msra.mxu0 0
    %942 = vmatprep.subr.bf16.mxu0 0
    %943 = vmatpush1.bf16.msra.mxu0 0
    %944 = vmatprep.subr.bf16.mxu0 0
    %945 = vmatpush1.bf16.msra.mxu0 0
    %946 = vmatprep.subr.bf16.mxu0 0
    %947 = vmatpush1.bf16.msra.mxu0 0
    %948 = vmatprep.subr.bf16.mxu0 0
    %949 = vmatpush1.bf16.msra.mxu0 0
    %950 = vmatprep.subr.bf16.mxu0 0
    %951 = vmatpush1.bf16.msra.mxu0 0
    %952 = vmatprep.subr.bf16.mxu0 0
    %953 = vmatpush1.bf16.msra.mxu0 0
    %954 = vmatprep.subr.bf16.mxu0 0
    %955 = vmatpush1.bf16.msra.mxu0 0
    %956 = vmatprep.subr.bf16.mxu0 0
    %957 = vmatpush1.bf16.msra.mxu0 0
    %958 = vmatprep.subr.bf16.mxu0 0
    %959 = vmatpush1.bf16.msra.mxu0 0
    %960 = vmatprep.subr.bf16.mxu0 0
    %961 = vmatpush1.bf16.msra.mxu0 0
    %962 = vmatprep.mubr.bf16.mxu0 0
    %963 = vmatmul.mubr.bf16.gmra.mrb[0].mxu0 %v928
    %v964 = vpop.f32.mrb[0].mxu0
    %v965 = vadd.f32 0.0, %v964
    %v966 = vpop.f32.mrb[0].mxu0
    %v967 = vadd.f32 0.0, %v966
    %v968 = vpop.f32.mrb[0].mxu0
    %v969 = vpop.f32.mrb[0].mxu0
    %970 = vdwg.mxu0
    %973 = vrot.lane.b32.xlu0 %v965, 32
    %v974 = vpop.permute.xlu0 %973
    %975 = vrot.lane.b32.xlu0 %v967, 32
    %v976 = vpop.permute.xlu0 %975
    %v977 = vsel %vm435, %v974, %v976
    %v979 = vsel %vm45, %v965, %v977
    %v980 = vsel %vm681, %v979, 0.0
    %981 = vadd.xlane.f32.xlu0 %v980
    %v982 = vpop.xlane.xlu0 %981
    %v983 = vmul.f32 %v982, %v387
    %v984 = vsub.f32 %v979, %v983
    %v985 = vmul.f32 %v984, %v984
    %v986 = vsel %vm681, %v985, 0.0
    %987 = vadd.xlane.f32.xlu0 %v986
    %v988 = vpop.xlane.xlu0 %987
    %v989 = vmul.f32 %v988, %v387
    %v990 = vadd.f32 %v989, 1e-05
    %v991 = vrsqrt.pop %v990
    %v992 = vmul.f32 %v984, %v991
    %v993 = vmul.f32 %v992, %v603
    %v994 = vadd.f32 %v993, %v605
    %v995 = vadd.f32 %v555, %v994
    %v996 = vxor.u32 %v995, 2147483648
    %v997 = vmul.f32 %v996, 1.442695
    %v998 = vpow.pop %v997
    %v999 = vadd.f32 %v998, 1.0
    %v1000 = vrcp.pop %v999
    %v1001 = vmul.f32 1.0, %v1000
    %1003 = vrot.lane.b32.xlu0 %v994, 64
    %v1004 = vpop.permute.xlu0 %1003
    %v1006 = vmul.f32 %v1001, %v1004
    %1008 = vrot.lane.b32.xlu0 %v1006, 64
    %v1009 = vpop.permute.xlu0 %1008
    %v1011 = vadd.f32 %v555, %v1009
    %v1012 = vtanh.pop %v1011
    %v1013 = vsub.f32 1.0, %v1001
    %1015 = vrot.lane.b32.xlu0 %v1012, 96
    %v1016 = vpop.permute.xlu0 %1015
    %v1018 = vmul.f32 %v1013, %v1016
    %v1019 = vmul.f32 %v1001, %v922
    %v1020 = vadd.f32 %v1018, %v1019
    %v1021 = vpack.c.bf16 %v1020, %v1020
    %1023 = vrot.lane.b32.xlu0 %v1021, 96
    %v1024 = vpop.permute.xlu0 %1023
    %v1026 = vsel %vm435, %v1024, 0
    %1028 = vmatprep.subr.bf16.mxu0 %v621
    %1029 = vmatpush1.bf16.msra.mxu0 %v620
    %1030 = vmatprep.subr.bf16.mxu0 %v623
    %1031 = vmatpush1.bf16.msra.mxu0 %v622
    %1032 = vmatprep.subr.bf16.mxu0 0
    %1033 = vmatpush1.bf16.msra.mxu0 0
    %1034 = vmatprep.subr.bf16.mxu0 0
    %1035 = vmatpush1.bf16.msra.mxu0 0
    %1036 = vmatprep.subr.bf16.mxu0 0
    %1037 = vmatpush1.bf16.msra.mxu0 0
    %1038 = vmatprep.subr.bf16.mxu0 0
    %1039 = vmatpush1.bf16.msra.mxu0 0
    %1040 = vmatprep.subr.bf16.mxu0 0
    %1041 = vmatpush1.bf16.msra.mxu0 0
    %1042 = vmatprep.subr.bf16.mxu0 0
    %1043 = vmatpush1.bf16.msra.mxu0 0
    %1044 = vmatprep.subr.bf16.mxu0 0
    %1045 = vmatpush1.bf16.msra.mxu0 0
    %1046 = vmatprep.subr.bf16.mxu0 0
    %1047 = vmatpush1.bf16.msra.mxu0 0
    %1048 = vmatprep.subr.bf16.mxu0 0
    %1049 = vmatpush1.bf16.msra.mxu0 0
    %1050 = vmatprep.subr.bf16.mxu0 0
    %1051 = vmatpush1.bf16.msra.mxu0 0
    %1052 = vmatprep.subr.bf16.mxu0 0
    %1053 = vmatpush1.bf16.msra.mxu0 0
    %1054 = vmatprep.subr.bf16.mxu0 0
    %1055 = vmatpush1.bf16.msra.mxu0 0
    %1056 = vmatprep.subr.bf16.mxu0 0
    %1057 = vmatpush1.bf16.msra.mxu0 0
    %1058 = vmatprep.subr.bf16.mxu0 0
    %1059 = vmatpush1.bf16.msra.mxu0 0
    %1060 = vmatprep.mubr.bf16.mxu0 0
    %1061 = vmatmul.mubr.bf16.gmra.mrb[0].mxu0 %v1026
    %v1062 = vpop.f32.mrb[0].mxu0
    %v1063 = vadd.f32 0.0, %v1062
    %v1064 = vpop.f32.mrb[0].mxu0
    %v1065 = vadd.f32 0.0, %v1064
    %v1066 = vpop.f32.mrb[0].mxu0
    %v1067 = vpop.f32.mrb[0].mxu0
    %1068 = vdwg.mxu0
    %1071 = vrot.lane.b32.xlu0 %v1063, 32
    %v1072 = vpop.permute.xlu0 %1071
    %1073 = vrot.lane.b32.xlu0 %v1065, 32
    %v1074 = vpop.permute.xlu0 %1073
    %v1075 = vsel %vm435, %v1072, %v1074
    %v1077 = vsel %vm45, %v1063, %v1075
    %v1078 = vsel %vm681, %v1077, 0.0
    %1079 = vadd.xlane.f32.xlu0 %v1078
    %v1080 = vpop.xlane.xlu0 %1079
    %v1081 = vmul.f32 %v1080, %v387
    %v1082 = vsub.f32 %v1077, %v1081
    %v1083 = vmul.f32 %v1082, %v1082
    %v1084 = vsel %vm681, %v1083, 0.0
    %1085 = vadd.xlane.f32.xlu0 %v1084
    %v1086 = vpop.xlane.xlu0 %1085
    %v1087 = vmul.f32 %v1086, %v387
    %v1088 = vadd.f32 %v1087, 1e-05
    %v1089 = vrsqrt.pop %v1088
    %v1090 = vmul.f32 %v1082, %v1089
    %v1091 = vmul.f32 %v1090, %v603
    %v1092 = vadd.f32 %v1091, %v605
    %v1093 = vadd.f32 %v566, %v1092
    %v1094 = vxor.u32 %v1093, 2147483648
    %v1095 = vmul.f32 %v1094, 1.442695
    %v1096 = vpow.pop %v1095
    %v1097 = vadd.f32 %v1096, 1.0
    %v1098 = vrcp.pop %v1097
    %v1099 = vmul.f32 1.0, %v1098
    %1101 = vrot.lane.b32.xlu0 %v1092, 64
    %v1102 = vpop.permute.xlu0 %1101
    %v1104 = vmul.f32 %v1099, %v1102
    %1106 = vrot.lane.b32.xlu0 %v1104, 64
    %v1107 = vpop.permute.xlu0 %1106
    %v1109 = vadd.f32 %v566, %v1107
    %v1110 = vtanh.pop %v1109
    %v1111 = vsub.f32 1.0, %v1099
    %1113 = vrot.lane.b32.xlu0 %v1110, 96
    %v1114 = vpop.permute.xlu0 %1113
    %v1116 = vmul.f32 %v1111, %v1114
    %v1117 = vmul.f32 %v1099, %v1020
    %v1118 = vadd.f32 %v1116, %v1117
    %v1119 = vpack.c.bf16 %v1118, %v1118
    %1121 = vrot.lane.b32.xlu0 %v1119, 96
    %v1122 = vpop.permute.xlu0 %1121
    %v1124 = vsel %vm435, %v1122, 0
    %1126 = vmatprep.subr.bf16.mxu0 %v621
    %1127 = vmatpush1.bf16.msra.mxu0 %v620
    %1128 = vmatprep.subr.bf16.mxu0 %v623
    %1129 = vmatpush1.bf16.msra.mxu0 %v622
    %1130 = vmatprep.subr.bf16.mxu0 0
    %1131 = vmatpush1.bf16.msra.mxu0 0
    %1132 = vmatprep.subr.bf16.mxu0 0
    %1133 = vmatpush1.bf16.msra.mxu0 0
    %1134 = vmatprep.subr.bf16.mxu0 0
    %1135 = vmatpush1.bf16.msra.mxu0 0
    %1136 = vmatprep.subr.bf16.mxu0 0
    %1137 = vmatpush1.bf16.msra.mxu0 0
    %1138 = vmatprep.subr.bf16.mxu0 0
    %1139 = vmatpush1.bf16.msra.mxu0 0
    %1140 = vmatprep.subr.bf16.mxu0 0
    %1141 = vmatpush1.bf16.msra.mxu0 0
    %1142 = vmatprep.subr.bf16.mxu0 0
    %1143 = vmatpush1.bf16.msra.mxu0 0
    %1144 = vmatprep.subr.bf16.mxu0 0
    %1145 = vmatpush1.bf16.msra.mxu0 0
    %1146 = vmatprep.subr.bf16.mxu0 0
    %1147 = vmatpush1.bf16.msra.mxu0 0
    %1148 = vmatprep.subr.bf16.mxu0 0
    %1149 = vmatpush1.bf16.msra.mxu0 0
    %1150 = vmatprep.subr.bf16.mxu0 0
    %1151 = vmatpush1.bf16.msra.mxu0 0
    %1152 = vmatprep.subr.bf16.mxu0 0
    %1153 = vmatpush1.bf16.msra.mxu0 0
    %1154 = vmatprep.subr.bf16.mxu0 0
    %1155 = vmatpush1.bf16.msra.mxu0 0
    %1156 = vmatprep.subr.bf16.mxu0 0
    %1157 = vmatpush1.bf16.msra.mxu0 0
    %1158 = vmatprep.mubr.bf16.mxu0 0
    %1159 = vmatmul.mubr.bf16.gmra.mrb[0].mxu0 %v1124
    %v1160 = vpop.f32.mrb[0].mxu0
    %v1161 = vadd.f32 0.0, %v1160
    %v1162 = vpop.f32.mrb[0].mxu0
    %v1163 = vadd.f32 0.0, %v1162
    %v1164 = vpop.f32.mrb[0].mxu0
    %v1165 = vpop.f32.mrb[0].mxu0
    %1166 = vdwg.mxu0
    %1169 = vrot.lane.b32.xlu0 %v1161, 32
    %v1170 = vpop.permute.xlu0 %1169
    %1171 = vrot.lane.b32.xlu0 %v1163, 32
    %v1172 = vpop.permute.xlu0 %1171
    %v1173 = vsel %vm435, %v1170, %v1172
    %v1175 = vsel %vm45, %v1161, %v1173
    %v1176 = vsel %vm681, %v1175, 0.0
    %1177 = vadd.xlane.f32.xlu0 %v1176
    %v1178 = vpop.xlane.xlu0 %1177
    %v1179 = vmul.f32 %v1178, %v387
    %v1180 = vsub.f32 %v1175, %v1179
    %v1181 = vmul.f32 %v1180, %v1180
    %v1182 = vsel %vm681, %v1181, 0.0
    %1183 = vadd.xlane.f32.xlu0 %v1182
    %v1184 = vpop.xlane.xlu0 %1183
    %v1185 = vmul.f32 %v1184, %v387
    %v1186 = vadd.f32 %v1185, 1e-05
    %v1187 = vrsqrt.pop %v1186
    %v1188 = vmul.f32 %v1180, %v1187
    %v1189 = vmul.f32 %v1188, %v603
    %v1190 = vadd.f32 %v1189, %v605
    %v1191 = vadd.f32 %v578, %v1190
    %v1192 = vxor.u32 %v1191, 2147483648
    %v1193 = vmul.f32 %v1192, 1.442695
    %v1194 = vpow.pop %v1193
    %v1195 = vadd.f32 %v1194, 1.0
    %v1196 = vrcp.pop %v1195
    %v1197 = vmul.f32 1.0, %v1196
    %1199 = vrot.lane.b32.xlu0 %v1190, 64
    %v1200 = vpop.permute.xlu0 %1199
    %v1202 = vmul.f32 %v1197, %v1200
    %1204 = vrot.lane.b32.xlu0 %v1202, 64
    %v1205 = vpop.permute.xlu0 %1204
    %v1207 = vadd.f32 %v578, %v1205
    %v1208 = vtanh.pop %v1207
    %v1209 = vsub.f32 1.0, %v1197
    %1211 = vrot.lane.b32.xlu0 %v1208, 96
    %v1212 = vpop.permute.xlu0 %1211
    %v1214 = vmul.f32 %v1209, %v1212
    %v1215 = vmul.f32 %v1197, %v1118
    %v1216 = vadd.f32 %v1214, %v1215
    %v1217 = vpack.c.bf16 %v1216, %v1216
    %1219 = vrot.lane.b32.xlu0 %v1217, 96
    %v1220 = vpop.permute.xlu0 %1219
    %v1222 = vsel %vm435, %v1220, 0
    %1224 = vmatprep.subr.bf16.mxu0 %v621
    %1225 = vmatpush1.bf16.msra.mxu0 %v620
    %1226 = vmatprep.subr.bf16.mxu0 %v623
    %1227 = vmatpush1.bf16.msra.mxu0 %v622
    %1228 = vmatprep.subr.bf16.mxu0 0
    %1229 = vmatpush1.bf16.msra.mxu0 0
    %1230 = vmatprep.subr.bf16.mxu0 0
    %1231 = vmatpush1.bf16.msra.mxu0 0
    %1232 = vmatprep.subr.bf16.mxu0 0
    %1233 = vmatpush1.bf16.msra.mxu0 0
    %1234 = vmatprep.subr.bf16.mxu0 0
    %1235 = vmatpush1.bf16.msra.mxu0 0
    %1236 = vmatprep.subr.bf16.mxu0 0
    %1237 = vmatpush1.bf16.msra.mxu0 0
    %1238 = vmatprep.subr.bf16.mxu0 0
    %1239 = vmatpush1.bf16.msra.mxu0 0
    %1240 = vmatprep.subr.bf16.mxu0 0
    %1241 = vmatpush1.bf16.msra.mxu0 0
    %1242 = vmatprep.subr.bf16.mxu0 0
    %1243 = vmatpush1.bf16.msra.mxu0 0
    %1244 = vmatprep.subr.bf16.mxu0 0
    %1245 = vmatpush1.bf16.msra.mxu0 0
    %1246 = vmatprep.subr.bf16.mxu0 0
    %1247 = vmatpush1.bf16.msra.mxu0 0
    %1248 = vmatprep.subr.bf16.mxu0 0
    %1249 = vmatpush1.bf16.msra.mxu0 0
    %1250 = vmatprep.subr.bf16.mxu0 0
    %1251 = vmatpush1.bf16.msra.mxu0 0
    %1252 = vmatprep.subr.bf16.mxu0 0
    %1253 = vmatpush1.bf16.msra.mxu0 0
    %1254 = vmatprep.subr.bf16.mxu0 0
    %1255 = vmatpush1.bf16.msra.mxu0 0
    %1256 = vmatprep.mubr.bf16.mxu0 0
    %1257 = vmatmul.mubr.bf16.gmra.mrb[0].mxu0 %v1222
    %v1258 = vpop.f32.mrb[0].mxu0
    %v1259 = vadd.f32 0.0, %v1258
    %v1260 = vpop.f32.mrb[0].mxu0
    %v1261 = vadd.f32 0.0, %v1260
    %v1262 = vpop.f32.mrb[0].mxu0
    %v1263 = vpop.f32.mrb[0].mxu0
    %1264 = vdwg.mxu0
    %1267 = vrot.lane.b32.xlu0 %v1259, 32
    %v1268 = vpop.permute.xlu0 %1267
    %1269 = vrot.lane.b32.xlu0 %v1261, 32
    %v1270 = vpop.permute.xlu0 %1269
    %v1271 = vsel %vm435, %v1268, %v1270
    %v1273 = vsel %vm45, %v1259, %v1271
    %v1274 = vsel %vm681, %v1273, 0.0
    %1275 = vadd.xlane.f32.xlu0 %v1274
    %v1276 = vpop.xlane.xlu0 %1275
    %v1277 = vmul.f32 %v1276, %v387
    %v1278 = vsub.f32 %v1273, %v1277
    %v1279 = vmul.f32 %v1278, %v1278
    %v1280 = vsel %vm681, %v1279, 0.0
    %1281 = vadd.xlane.f32.xlu0 %v1280
    %v1282 = vpop.xlane.xlu0 %1281
    %v1283 = vmul.f32 %v1282, %v387
    %v1284 = vadd.f32 %v1283, 1e-05
    %v1285 = vrsqrt.pop %v1284
    %v1286 = vmul.f32 %v1278, %v1285
    %v1287 = vmul.f32 %v1286, %v603
    %v1288 = vadd.f32 %v1287, %v605
    %v1289 = vadd.f32 %v587, %v1288
    %v1290 = vxor.u32 %v1289, 2147483648
    %v1291 = vmul.f32 %v1290, 1.442695
    %v1292 = vpow.pop %v1291
    %v1293 = vadd.f32 %v1292, 1.0
    %v1294 = vrcp.pop %v1293
    %v1295 = vmul.f32 1.0, %v1294
    %1297 = vrot.lane.b32.xlu0 %v1288, 64
    %v1298 = vpop.permute.xlu0 %1297
    %v1300 = vmul.f32 %v1295, %v1298
    %1302 = vrot.lane.b32.xlu0 %v1300, 64
    %v1303 = vpop.permute.xlu0 %1302
    %v1305 = vadd.f32 %v587, %v1303
    %v1306 = vtanh.pop %v1305
    %v1307 = vsub.f32 1.0, %v1295
    %1309 = vrot.lane.b32.xlu0 %v1306, 96
    %v1310 = vpop.permute.xlu0 %1309
    %v1312 = vmul.f32 %v1307, %v1310
    %v1313 = vmul.f32 %v1295, %v1216
    %v1314 = vadd.f32 %v1312, %v1313
    %v1315 = vpack.c.bf16 %v1314, %v1314
    %1317 = vrot.lane.b32.xlu0 %v1315, 96
    %v1318 = vpop.permute.xlu0 %1317
    %v1320 = vsel %vm435, %v1318, 0
    %1322 = vmatprep.subr.bf16.mxu0 %v621
    %1323 = vmatpush1.bf16.msra.mxu0 %v620
    %1324 = vmatprep.subr.bf16.mxu0 %v623
    %1325 = vmatpush1.bf16.msra.mxu0 %v622
    %1326 = vmatprep.subr.bf16.mxu0 0
    %1327 = vmatpush1.bf16.msra.mxu0 0
    %1328 = vmatprep.subr.bf16.mxu0 0
    %1329 = vmatpush1.bf16.msra.mxu0 0
    %1330 = vmatprep.subr.bf16.mxu0 0
    %1331 = vmatpush1.bf16.msra.mxu0 0
    %1332 = vmatprep.subr.bf16.mxu0 0
    %1333 = vmatpush1.bf16.msra.mxu0 0
    %1334 = vmatprep.subr.bf16.mxu0 0
    %1335 = vmatpush1.bf16.msra.mxu0 0
    %1336 = vmatprep.subr.bf16.mxu0 0
    %1337 = vmatpush1.bf16.msra.mxu0 0
    %1338 = vmatprep.subr.bf16.mxu0 0
    %1339 = vmatpush1.bf16.msra.mxu0 0
    %1340 = vmatprep.subr.bf16.mxu0 0
    %1341 = vmatpush1.bf16.msra.mxu0 0
    %1342 = vmatprep.subr.bf16.mxu0 0
    %1343 = vmatpush1.bf16.msra.mxu0 0
    %1344 = vmatprep.subr.bf16.mxu0 0
    %1345 = vmatpush1.bf16.msra.mxu0 0
    %1346 = vmatprep.subr.bf16.mxu0 0
    %1347 = vmatpush1.bf16.msra.mxu0 0
    %1348 = vmatprep.subr.bf16.mxu0 0
    %1349 = vmatpush1.bf16.msra.mxu0 0
    %1350 = vmatprep.subr.bf16.mxu0 0
    %1351 = vmatpush1.bf16.msra.mxu0 0
    %1352 = vmatprep.subr.bf16.mxu0 0
    %1353 = vmatpush1.bf16.msra.mxu0 0
    %1354 = vmatprep.mubr.bf16.mxu0 0
    %1355 = vmatmul.mubr.bf16.gmra.mrb[0].mxu0 %v1320
    %v1356 = vpop.f32.mrb[0].mxu0
    %v1357 = vadd.f32 0.0, %v1356
    %v1358 = vpop.f32.mrb[0].mxu0
    %v1359 = vadd.f32 0.0, %v1358
    %v1360 = vpop.f32.mrb[0].mxu0
    %v1361 = vpop.f32.mrb[0].mxu0
    %1362 = vdwg.mxu0
    %1365 = vrot.lane.b32.xlu0 %v1357, 32
    %v1366 = vpop.permute.xlu0 %1365
    %1367 = vrot.lane.b32.xlu0 %v1359, 32
    %v1368 = vpop.permute.xlu0 %1367
    %v1369 = vsel %vm435, %v1366, %v1368
    %v1371 = vsel %vm45, %v1357, %v1369
    %v1372 = vsel %vm681, %v1371, 0.0
    %1373 = vadd.xlane.f32.xlu0 %v1372
    %v1374 = vpop.xlane.xlu0 %1373
    %v1375 = vmul.f32 %v1374, %v387
    %v1376 = vsub.f32 %v1371, %v1375
    %v1377 = vmul.f32 %v1376, %v1376
    %v1378 = vsel %vm681, %v1377, 0.0
    %1379 = vadd.xlane.f32.xlu0 %v1378
    %v1380 = vpop.xlane.xlu0 %1379
    %v1381 = vmul.f32 %v1380, %v387
    %v1382 = vadd.f32 %v1381, 1e-05
    %v1383 = vrsqrt.pop %v1382
    %v1384 = vmul.f32 %v1376, %v1383
    %v1385 = vmul.f32 %v1384, %v603
    %v1386 = vadd.f32 %v1385, %v605
    %v1387 = vadd.f32 %v598, %v1386
    %v1388 = vxor.u32 %v1387, 2147483648
    %v1389 = vmul.f32 %v1388, 1.442695
    %v1390 = vpow.pop %v1389
    %v1391 = vadd.f32 %v1390, 1.0
    %v1392 = vrcp.pop %v1391
    %v1393 = vmul.f32 1.0, %v1392
    %1395 = vrot.lane.b32.xlu0 %v1386, 64
    %v1396 = vpop.permute.xlu0 %1395
    %v1398 = vmul.f32 %v1393, %v1396
    %1400 = vrot.lane.b32.xlu0 %v1398, 64
    %v1401 = vpop.permute.xlu0 %1400
    %v1403 = vadd.f32 %v598, %v1401
    %v1404 = vtanh.pop %v1403
    %v1405 = vsub.f32 1.0, %v1393
    %1407 = vrot.lane.b32.xlu0 %v1404, 96
    %v1408 = vpop.permute.xlu0 %1407
    %v1410 = vmul.f32 %v1405, %v1408
    %v1411 = vmul.f32 %v1393, %v1314
    %v1412 = vadd.f32 %v1410, %v1411
    %1414 = vrot.lane.b32.xlu0 %v726, 96
    %v1415 = vpop.permute.xlu0 %1414
    %v1418 = vrot.slane %v1412, 2
    %v1420 = vsel %vm435, %v1415, %v1418
    %1422 = vrot.lane.b32.xlu0 %v824, 96
    %v1423 = vpop.permute.xlu0 %1422
    %v1426 = vrot.slane %v1314, 2
    %v1428 = vsel %vm435, %v1423, %v1426
    %1430 = vrot.lane.b32.xlu0 %v922, 96
    %v1431 = vpop.permute.xlu0 %1430
    %v1434 = vrot.slane %v1216, 2
    %v1436 = vsel %vm435, %v1431, %v1434
    %1438 = vrot.lane.b32.xlu0 %v1020, 96
    %v1439 = vpop.permute.xlu0 %1438
    %v1442 = vrot.slane %v1118, 2
    %v1444 = vsel %vm435, %v1439, %v1442
    %1445 = vrot.lane.b32.xlu0 %v1118, 96
    %v1446 = vpop.permute.xlu0 %1445
    %v1448 = vrot.slane %v1020, 2
    %v1450 = vsel %vm435, %v1446, %v1448
    %1451 = vrot.lane.b32.xlu0 %v1216, 96
    %v1452 = vpop.permute.xlu0 %1451
    %v1454 = vrot.slane %v922, 2
    %v1456 = vsel %vm435, %v1452, %v1454
    %1457 = vrot.lane.b32.xlu0 %v1314, 96
    %v1458 = vpop.permute.xlu0 %1457
    %v1460 = vrot.slane %v824, 2
    %v1462 = vsel %vm435, %v1458, %v1460
    %1463 = vrot.lane.b32.xlu0 %v1412, 96
    %v1464 = vpop.permute.xlu0 %1463
    %v1466 = vrot.slane %v726, 2
    %v1468 = vsel %vm435, %v1464, %v1466
    %v1470 = vrot.slane %v1428, 6
    %v1473 = vrot.slane %v1436, 4
    %v1476 = vrot.slane %v1444, 2
    %v1479 = vrot.slane %v1456, 6
    %v1482 = vrot.slane %v1462, 4
    %v1485 = vrot.slane %v1468, 2
    %v1487 = vsel %vm522, %v1420, %v1470
    %vm1488 = vcmask 1043456
    %v1489 = vsel %vm1488, %v1487, %v1473
    %v1490 = vsel %vm285, %v1489, %v1476
    %v1491 = vsel %vm522, %v1450, %v1479
    %v1492 = vsel %vm1488, %v1491, %v1482
    %v1493 = vsel %vm285, %v1492, %v1485
    %v1494 = vpack.c.bf16 %v1493, %v1490
    %v1495 = vld [vmem:[%s6] sm:$0xff]
    %v1496 = vld [vmem:[%s6 + $0x8] sm:$0xff]
    %v1497 = vld [vmem:[%s6 + $0x10] sm:$0xff]
    %v1498 = vld [vmem:[%s6 + $0x18] sm:$0xff]
    %v1499 = vld [vmem:[%s6 + $0x20] sm:$0xff]
    %v1500 = vld [vmem:[%s6 + $0x28] sm:$0xff]
    %v1501 = vld [vmem:[%s6 + $0x30] sm:$0xff]
    %v1502 = vld [vmem:[%s6 + $0x38] sm:$0xff]
    %v1511 = vunpack.c.l.b16 %v1495
    %v1512 = vunpack.c.h.b16 %v1495
    %v1513 = vunpack.c.l.b16 %v1496
    %v1514 = vunpack.c.h.b16 %v1496
    %v1515 = vunpack.c.l.b16 %v1497
    %v1516 = vunpack.c.h.b16 %v1497
    %v1517 = vunpack.c.l.b16 %v1498
    %v1518 = vunpack.c.h.b16 %v1498
    %v1519 = vunpack.c.l.b16 %v1499
    %v1520 = vunpack.c.h.b16 %v1499
    %v1521 = vunpack.c.l.b16 %v1500
    %v1522 = vunpack.c.h.b16 %v1500
    %v1523 = vunpack.c.l.b16 %v1501
    %v1524 = vunpack.c.h.b16 %v1501
    %v1525 = vunpack.c.l.b16 %v1502
    %v1526 = vunpack.c.h.b16 %v1502
    %v1527 = vpack.c.b16 %v1513, %v1511
    %v1528 = vpack.c.b16 %v1514, %v1512
    %v1529 = vpack.c.b16 %v1517, %v1515
    %v1530 = vpack.c.b16 %v1518, %v1516
    %v1531 = vpack.c.b16 %v1521, %v1519
    %v1532 = vpack.c.b16 %v1522, %v1520
    %v1533 = vpack.c.b16 %v1525, %v1523
    %v1534 = vpack.c.b16 %v1526, %v1524
    %vm1543 = vcmask 523264
    %v1545 = vsel %vm1543, %v1494, 0
    %1547 = vmatprep.subr.bf16.mxu0 %v1528
    %1548 = vmatpush1.bf16.msra.mxu0 %v1527
    %1549 = vmatprep.subr.bf16.mxu0 %v1530
    %1550 = vmatpush1.bf16.msra.mxu0 %v1529
    %1551 = vmatprep.subr.bf16.mxu0 %v1532
    %1552 = vmatpush1.bf16.msra.mxu0 %v1531
    %1553 = vmatprep.subr.bf16.mxu0 %v1534
    %1554 = vmatpush1.bf16.msra.mxu0 %v1533
    %1555 = vmatprep.subr.bf16.mxu0 0
    %1556 = vmatpush1.bf16.msra.mxu0 0
    %1557 = vmatprep.subr.bf16.mxu0 0
    %1558 = vmatpush1.bf16.msra.mxu0 0
    %1559 = vmatprep.subr.bf16.mxu0 0
    %1560 = vmatpush1.bf16.msra.mxu0 0
    %1561 = vmatprep.subr.bf16.mxu0 0
    %1562 = vmatpush1.bf16.msra.mxu0 0
    %1563 = vmatprep.subr.bf16.mxu0 0
    %1564 = vmatpush1.bf16.msra.mxu0 0
    %1565 = vmatprep.subr.bf16.mxu0 0
    %1566 = vmatpush1.bf16.msra.mxu0 0
    %1567 = vmatprep.subr.bf16.mxu0 0
    %1568 = vmatpush1.bf16.msra.mxu0 0
    %1569 = vmatprep.subr.bf16.mxu0 0
    %1570 = vmatpush1.bf16.msra.mxu0 0
    %1571 = vmatprep.subr.bf16.mxu0 0
    %1572 = vmatpush1.bf16.msra.mxu0 0
    %1573 = vmatprep.subr.bf16.mxu0 0
    %1574 = vmatpush1.bf16.msra.mxu0 0
    %1575 = vmatprep.subr.bf16.mxu0 0
    %1576 = vmatpush1.bf16.msra.mxu0 0
    %1577 = vmatprep.subr.bf16.mxu0 0
    %1578 = vmatpush1.bf16.msra.mxu0 0
    %1579 = vmatprep.mubr.bf16.mxu0 0
    %1580 = vmatmul.mubr.bf16.gmra.mrb[0].mxu0 %v1545
    %v1581 = vpop.f32.mrb[0].mxu0
    %v1582 = vadd.f32 0.0, %v1581
    %v1583 = vpop.f32.mrb[0].mxu0
    %v1584 = vadd.f32 0.0, %v1583
    %v1585 = vpop.f32.mrb[0].mxu0
    %v1586 = vadd.f32 0.0, %v1585
    %v1587 = vpop.f32.mrb[0].mxu0
    %v1588 = vadd.f32 0.0, %v1587
    %1589 = vdwg.mxu0
    %v1590 = vld [vmem:[%s8] sm:$0x1]
    %v1591 = vld [vmem:[%s8 + $0x1] sm:$0x1]
    %v1592 = vsel %vm380, %v1582, 0.0
    %1593 = vadd.xlane.f32.xlu0 %v1592
    %v1594 = vpop.xlane.xlu0 %1593
    %v1595 = vsel %vm380, %v1586, 0.0
    %1596 = vadd.xlane.f32.xlu0 %v1595
    %v1597 = vpop.xlane.xlu0 %1596
    %v1598 = vmul.f32 %v1594, %v387
    %v1599 = vmul.f32 %v1597, %v387
    %v1600 = vsub.f32 %v1582, %v1598
    %v1601 = vsub.f32 %v1586, %v1599
    %v1602 = vmul.f32 %v1600, %v1600
    %v1603 = vmul.f32 %v1601, %v1601
    %v1604 = vsel %vm380, %v1602, 0.0
    %1605 = vadd.xlane.f32.xlu0 %v1604
    %v1606 = vpop.xlane.xlu0 %1605
    %v1607 = vsel %vm380, %v1603, 0.0
    %1608 = vadd.xlane.f32.xlu0 %v1607
    %v1609 = vpop.xlane.xlu0 %1608
    %v1610 = vmul.f32 %v1606, %v387
    %v1611 = vmul.f32 %v1609, %v387
    %v1612 = vadd.f32 %v1610, 1e-05
    %v1613 = vadd.f32 %v1611, 1e-05
    %v1614 = vrsqrt.pop %v1612
    %v1615 = vrsqrt.pop %v1613
    %v1616 = vmul.f32 %v1600, %v1614
    %v1617 = vmul.f32 %v1601, %v1615
    %v1618 = vlaneseq
    %v1619 = vshrl.u32 %v1618, 7
    %v1620 = vsub.s32 0, %v1619
    %v1621 = vrot.slane %v1590, %v1620
    %v1622 = vmul.f32 %v1616, %v1621
    %v1623 = vmul.f32 %v1617, %v1621
    %v1624 = vlaneseq
    %v1625 = vshrl.u32 %v1624, 7
    %v1626 = vsub.s32 0, %v1625
    %v1627 = vrot.slane %v1591, %v1626
    %v1628 = vadd.f32 %v1622, %v1627
    %v1629 = vadd.f32 %v1623, %v1627
    %s1630 = scalar_lea.vmem %s8, 2
    %v1631 = vld [vmem:[%s1630] sm:$0x1]
    %v1632 = vld [vmem:[%s1630 + $0x1] sm:$0x1]
    %1637 = vrot.lane.b32.xlu0 %v1582, 32
    %v1638 = vpop.permute.xlu0 %1637
    %1639 = vrot.lane.b32.xlu0 %v1584, 32
    %v1640 = vpop.permute.xlu0 %1639
    %1641 = vrot.lane.b32.xlu0 %v1586, 32
    %v1642 = vpop.permute.xlu0 %1641
    %1643 = vrot.lane.b32.xlu0 %v1588, 32
    %v1644 = vpop.permute.xlu0 %1643
    %v1645 = vsel %vm435, %v1638, %v1640
    %v1646 = vsel %vm435, %v1642, %v1644
    %v1649 = vsel %vm380, %v1645, 0.0
    %1650 = vadd.xlane.f32.xlu0 %v1649
    %v1651 = vpop.xlane.xlu0 %1650
    %v1652 = vsel %vm380, %v1646, 0.0
    %1653 = vadd.xlane.f32.xlu0 %v1652
    %v1654 = vpop.xlane.xlu0 %1653
    %v1655 = vmul.f32 %v1651, %v387
    %v1656 = vmul.f32 %v1654, %v387
    %v1657 = vsub.f32 %v1582, %v1655
    %v1658 = vsub.f32 %v1584, %v1655
    %v1659 = vsub.f32 %v1586, %v1656
    %v1660 = vsub.f32 %v1588, %v1656
    %v1661 = vmul.f32 %v1657, %v1657
    %v1662 = vmul.f32 %v1658, %v1658
    %v1663 = vmul.f32 %v1659, %v1659
    %v1664 = vmul.f32 %v1660, %v1660
    %1669 = vrot.lane.b32.xlu0 %v1661, 32
    %v1670 = vpop.permute.xlu0 %1669
    %1671 = vrot.lane.b32.xlu0 %v1662, 32
    %v1672 = vpop.permute.xlu0 %1671
    %1673 = vrot.lane.b32.xlu0 %v1663, 32
    %v1674 = vpop.permute.xlu0 %1673
    %1675 = vrot.lane.b32.xlu0 %v1664, 32
    %v1676 = vpop.permute.xlu0 %1675
    %v1677 = vsel %vm435, %v1670, %v1672
    %v1678 = vsel %vm435, %v1674, %v1676
    %v1681 = vsel %vm380, %v1677, 0.0
    %1682 = vadd.xlane.f32.xlu0 %v1681
    %v1683 = vpop.xlane.xlu0 %1682
    %v1684 = vsel %vm380, %v1678, 0.0
    %1685 = vadd.xlane.f32.xlu0 %v1684
    %v1686 = vpop.xlane.xlu0 %1685
    %v1687 = vmul.f32 %v1683, %v387
    %v1688 = vmul.f32 %v1686, %v387
    %v1689 = vadd.f32 %v1687, 1e-05
    %v1690 = vadd.f32 %v1688, 1e-05
    %v1691 = vrsqrt.pop %v1689
    %v1692 = vrsqrt.pop %v1690
    %v1693 = vmul.f32 %v1657, %v1691
    %v1694 = vmul.f32 %v1658, %v1691
    %v1695 = vmul.f32 %v1659, %v1692
    %v1696 = vmul.f32 %v1660, %v1692
    %v1697 = vlaneseq
    %v1698 = vshrl.u32 %v1697, 7
    %v1699 = vsub.s32 0, %v1698
    %v1700 = vrot.slane %v1631, %v1699
    %1702 = vrot.lane.b32.xlu0 %v1700, 96
    %v1703 = vpop.permute.xlu0 %1702
    %v1705 = vmul.f32 %v1693, %v1703
    %v1706 = vmul.f32 %v1694, %v1703
    %v1707 = vmul.f32 %v1695, %v1703
    %v1708 = vmul.f32 %v1696, %v1703
    %v1709 = vlaneseq
    %v1710 = vshrl.u32 %v1709, 7
    %v1711 = vsub.s32 0, %v1710
    %v1712 = vrot.slane %v1632, %v1711
    %1714 = vrot.lane.b32.xlu0 %v1712, 96
    %v1715 = vpop.permute.xlu0 %1714
    %v1717 = vadd.f32 %v1705, %v1715
    %v1718 = vadd.f32 %v1706, %v1715
    %v1719 = vadd.f32 %v1707, %v1715
    %v1720 = vadd.f32 %v1708, %v1715
    %v1723 = vrot.slane %v1719, 4
    %v1724 = vrot.slane %v1720, 4
    %1725 = vrot.lane.b32.xlu0 %v1723, 32
    %v1726 = vpop.permute.xlu0 %1725
    %1727 = vrot.lane.b32.xlu0 %v1724, 32
    %v1728 = vpop.permute.xlu0 %1727
    %v1729 = vsel %vm435, %v1726, %v1728
    %v1731 = vsel %vm522, %v1628, %v1729
    %v1733 = vrot.slane %v1628, 2
    %v1735 = vrot.slane %v1719, 2
    %v1736 = vrot.slane %v1720, 2
    %1737 = vrot.lane.b32.xlu0 %v1735, 32
    %v1738 = vpop.permute.xlu0 %1737
    %1739 = vrot.lane.b32.xlu0 %v1736, 32
    %v1740 = vpop.permute.xlu0 %1739
    %v1741 = vsel %vm435, %v1738, %v1740
    %v1743 = vsel %vm522, %v1733, %v1741
    %v1744 = vrot.slane %v1628, 4
    %1746 = vrot.lane.b32.xlu0 %v1719, 32
    %v1747 = vpop.permute.xlu0 %1746
    %1748 = vrot.lane.b32.xlu0 %v1720, 32
    %v1749 = vpop.permute.xlu0 %1748
    %v1750 = vsel %vm435, %v1747, %v1749
    %v1752 = vsel %vm522, %v1744, %v1750
    %v1753 = vrot.slane %v1628, 6
    %v1755 = vrot.slane %v1719, 6
    %v1756 = vrot.slane %v1720, 6
    %1757 = vrot.lane.b32.xlu0 %v1755, 32
    %v1758 = vpop.permute.xlu0 %1757
    %1759 = vrot.lane.b32.xlu0 %v1756, 32
    %v1760 = vpop.permute.xlu0 %1759
    %v1761 = vsel %vm435, %v1758, %v1760
    %v1763 = vsel %vm522, %v1753, %v1761
    %v1766 = vrot.slane %v1717, 4
    %v1767 = vrot.slane %v1718, 4
    %1768 = vrot.lane.b32.xlu0 %v1766, 32
    %v1769 = vpop.permute.xlu0 %1768
    %1770 = vrot.lane.b32.xlu0 %v1767, 32
    %v1771 = vpop.permute.xlu0 %1770
    %v1772 = vsel %vm435, %v1769, %v1771
    %v1774 = vsel %vm522, %v1629, %v1772
    %v1776 = vrot.slane %v1629, 2
    %v1778 = vrot.slane %v1717, 2
    %v1779 = vrot.slane %v1718, 2
    %1780 = vrot.lane.b32.xlu0 %v1778, 32
    %v1781 = vpop.permute.xlu0 %1780
    %1782 = vrot.lane.b32.xlu0 %v1779, 32
    %v1783 = vpop.permute.xlu0 %1782
    %v1784 = vsel %vm435, %v1781, %v1783
    %v1786 = vsel %vm522, %v1776, %v1784
    %v1787 = vrot.slane %v1629, 4
    %1789 = vrot.lane.b32.xlu0 %v1717, 32
    %v1790 = vpop.permute.xlu0 %1789
    %1791 = vrot.lane.b32.xlu0 %v1718, 32
    %v1792 = vpop.permute.xlu0 %1791
    %v1793 = vsel %vm435, %v1790, %v1792
    %v1795 = vsel %vm522, %v1787, %v1793
    %v1796 = vrot.slane %v1629, 6
    %v1798 = vrot.slane %v1717, 6
    %v1799 = vrot.slane %v1718, 6
    %1800 = vrot.lane.b32.xlu0 %v1798, 32
    %v1801 = vpop.permute.xlu0 %1800
    %1802 = vrot.lane.b32.xlu0 %v1799, 32
    %v1803 = vpop.permute.xlu0 %1802
    %v1804 = vsel %vm435, %v1801, %v1803
    %v1806 = vsel %vm522, %v1796, %v1804
    %v1807 = vld [vmem:[%s7] sm:$0xff]
    %v1808 = vld [vmem:[%s7 + $0x8] sm:$0xff]
    %v1809 = vld [vmem:[%s7 + $0x10] sm:$0xff]
    %v1810 = vld [vmem:[%s7 + $0x18] sm:$0xff]
    %v1811 = vld [vmem:[%s9] sm:$0xf]
    %s1812 = scalar_lea.vmem %s9, 4
    %v1813 = vld [vmem:[%s1812] sm:$0xf]
    %s1814 = scalar_lea.vmem %s10, 4
    %v1815 = vld [vmem:[%s1814] sm:$0xf]
    %v1816 = vpack.c.bf16 %v1815, %v1815
    %v1821 = vunpack.c.l.b16 %v1807
    %v1822 = vunpack.c.h.b16 %v1807
    %v1823 = vunpack.c.l.b16 %v1808
    %v1824 = vunpack.c.h.b16 %v1808
    %v1825 = vunpack.c.l.b16 %v1809
    %v1826 = vunpack.c.h.b16 %v1809
    %v1827 = vunpack.c.l.b16 %v1810
    %v1828 = vunpack.c.h.b16 %v1810
    %v1829 = vpack.c.b16 %v1823, %v1821
    %v1830 = vpack.c.b16 %v1824, %v1822
    %v1831 = vpack.c.b16 %v1827, %v1825
    %v1832 = vpack.c.b16 %v1828, %v1826
    %v1838 = vsel %vm435, %v1816, 0
    %1840 = vmatprep.subr.bf16.mxu0 %v1830
    %1841 = vmatpush1.bf16.msra.mxu0 %v1829
    %1842 = vmatprep.subr.bf16.mxu0 %v1832
    %1843 = vmatpush1.bf16.msra.mxu0 %v1831
    %1844 = vmatprep.subr.bf16.mxu0 0
    %1845 = vmatpush1.bf16.msra.mxu0 0
    %1846 = vmatprep.subr.bf16.mxu0 0
    %1847 = vmatpush1.bf16.msra.mxu0 0
    %1848 = vmatprep.subr.bf16.mxu0 0
    %1849 = vmatpush1.bf16.msra.mxu0 0
    %1850 = vmatprep.subr.bf16.mxu0 0
    %1851 = vmatpush1.bf16.msra.mxu0 0
    %1852 = vmatprep.subr.bf16.mxu0 0
    %1853 = vmatpush1.bf16.msra.mxu0 0
    %1854 = vmatprep.subr.bf16.mxu0 0
    %1855 = vmatpush1.bf16.msra.mxu0 0
    %1856 = vmatprep.subr.bf16.mxu0 0
    %1857 = vmatpush1.bf16.msra.mxu0 0
    %1858 = vmatprep.subr.bf16.mxu0 0
    %1859 = vmatpush1.bf16.msra.mxu0 0
    %1860 = vmatprep.subr.bf16.mxu0 0
    %1861 = vmatpush1.bf16.msra.mxu0 0
    %1862 = vmatprep.subr.bf16.mxu0 0
    %1863 = vmatpush1.bf16.msra.mxu0 0
    %1864 = vmatprep.subr.bf16.mxu0 0
    %1865 = vmatpush1.bf16.msra.mxu0 0
    %1866 = vmatprep.subr.bf16.mxu0 0
    %1867 = vmatpush1.bf16.msra.mxu0 0
    %1868 = vmatprep.subr.bf16.mxu0 0
    %1869 = vmatpush1.bf16.msra.mxu0 0
    %1870 = vmatprep.subr.bf16.mxu0 0
    %1871 = vmatpush1.bf16.msra.mxu0 0
    %1872 = vmatprep.mubr.bf16.mxu0 0
    %1873 = vmatmul.mubr.bf16.gmra.mrb[0].mxu0 %v1838
    %v1874 = vpop.f32.mrb[0].mxu0
    %v1875 = vadd.f32 0.0, %v1874
    %v1876 = vpop.f32.mrb[0].mxu0
    %v1877 = vadd.f32 0.0, %v1876
    %v1878 = vpop.f32.mrb[0].mxu0
    %v1879 = vpop.f32.mrb[0].mxu0
    %1880 = vdwg.mxu0
    %1883 = vrot.lane.b32.xlu0 %v1875, 32
    %v1884 = vpop.permute.xlu0 %1883
    %1885 = vrot.lane.b32.xlu0 %v1877, 32
    %v1886 = vpop.permute.xlu0 %1885
    %v1887 = vsel %vm435, %v1884, %v1886
    %v1889 = vsel %vm45, %v1875, %v1887
    %v1890 = vsel %vm681, %v1889, 0.0
    %1891 = vadd.xlane.f32.xlu0 %v1890
    %v1892 = vpop.xlane.xlu0 %1891
    %v1893 = vmul.f32 %v1892, %v387
    %v1894 = vsub.f32 %v1889, %v1893
    %v1895 = vmul.f32 %v1894, %v1894
    %v1896 = vsel %vm681, %v1895, 0.0
    %1897 = vadd.xlane.f32.xlu0 %v1896
    %v1898 = vpop.xlane.xlu0 %1897
    %v1899 = vmul.f32 %v1898, %v387
    %v1900 = vadd.f32 %v1899, 1e-05
    %v1901 = vrsqrt.pop %v1900
    %v1902 = vmul.f32 %v1894, %v1901
    %v1903 = vmul.f32 %v1902, %v1811
    %v1904 = vadd.f32 %v1903, %v1813
    %v1905 = vadd.f32 %v1731, %v1904
    %v1906 = vxor.u32 %v1905, 2147483648
    %v1907 = vmul.f32 %v1906, 1.442695
    %v1908 = vpow.pop %v1907
    %v1909 = vadd.f32 %v1908, 1.0
    %v1910 = vrcp.pop %v1909
    %v1911 = vmul.f32 1.0, %v1910
    %1913 = vrot.lane.b32.xlu0 %v1904, 64
    %v1914 = vpop.permute.xlu0 %1913
    %v1916 = vmul.f32 %v1911, %v1914
    %1918 = vrot.lane.b32.xlu0 %v1916, 64
    %v1919 = vpop.permute.xlu0 %1918
    %v1921 = vadd.f32 %v1731, %v1919
    %v1922 = vtanh.pop %v1921
    %v1923 = vsub.f32 1.0, %v1911
    %1925 = vrot.lane.b32.xlu0 %v1922, 96
    %v1926 = vpop.permute.xlu0 %1925
    %v1928 = vmul.f32 %v1923, %v1926
    %1930 = vrot.lane.b32.xlu0 %v1815, 32
    %v1931 = vpop.permute.xlu0 %1930
    %v1933 = vmul.f32 %v1911, %v1931
    %v1934 = vadd.f32 %v1928, %v1933
    %v1935 = vpack.c.bf16 %v1934, %v1934
    %1937 = vrot.lane.b32.xlu0 %v1935, 96
    %v1938 = vpop.permute.xlu0 %1937
    %v1940 = vsel %vm435, %v1938, 0
    %1942 = vmatprep.subr.bf16.mxu0 %v1830
    %1943 = vmatpush1.bf16.msra.mxu0 %v1829
    %1944 = vmatprep.subr.bf16.mxu0 %v1832
    %1945 = vmatpush1.bf16.msra.mxu0 %v1831
    %1946 = vmatprep.subr.bf16.mxu0 0
    %1947 = vmatpush1.bf16.msra.mxu0 0
    %1948 = vmatprep.subr.bf16.mxu0 0
    %1949 = vmatpush1.bf16.msra.mxu0 0
    %1950 = vmatprep.subr.bf16.mxu0 0
    %1951 = vmatpush1.bf16.msra.mxu0 0
    %1952 = vmatprep.subr.bf16.mxu0 0
    %1953 = vmatpush1.bf16.msra.mxu0 0
    %1954 = vmatprep.subr.bf16.mxu0 0
    %1955 = vmatpush1.bf16.msra.mxu0 0
    %1956 = vmatprep.subr.bf16.mxu0 0
    %1957 = vmatpush1.bf16.msra.mxu0 0
    %1958 = vmatprep.subr.bf16.mxu0 0
    %1959 = vmatpush1.bf16.msra.mxu0 0
    %1960 = vmatprep.subr.bf16.mxu0 0
    %1961 = vmatpush1.bf16.msra.mxu0 0
    %1962 = vmatprep.subr.bf16.mxu0 0
    %1963 = vmatpush1.bf16.msra.mxu0 0
    %1964 = vmatprep.subr.bf16.mxu0 0
    %1965 = vmatpush1.bf16.msra.mxu0 0
    %1966 = vmatprep.subr.bf16.mxu0 0
    %1967 = vmatpush1.bf16.msra.mxu0 0
    %1968 = vmatprep.subr.bf16.mxu0 0
    %1969 = vmatpush1.bf16.msra.mxu0 0
    %1970 = vmatprep.subr.bf16.mxu0 0
    %1971 = vmatpush1.bf16.msra.mxu0 0
    %1972 = vmatprep.subr.bf16.mxu0 0
    %1973 = vmatpush1.bf16.msra.mxu0 0
    %1974 = vmatprep.mubr.bf16.mxu0 0
    %1975 = vmatmul.mubr.bf16.gmra.mrb[0].mxu0 %v1940
    %v1976 = vpop.f32.mrb[0].mxu0
    %v1977 = vadd.f32 0.0, %v1976
    %v1978 = vpop.f32.mrb[0].mxu0
    %v1979 = vadd.f32 0.0, %v1978
    %v1980 = vpop.f32.mrb[0].mxu0
    %v1981 = vpop.f32.mrb[0].mxu0
    %1982 = vdwg.mxu0
    %1985 = vrot.lane.b32.xlu0 %v1977, 32
    %v1986 = vpop.permute.xlu0 %1985
    %1987 = vrot.lane.b32.xlu0 %v1979, 32
    %v1988 = vpop.permute.xlu0 %1987
    %v1989 = vsel %vm435, %v1986, %v1988
    %v1991 = vsel %vm45, %v1977, %v1989
    %v1992 = vsel %vm681, %v1991, 0.0
    %1993 = vadd.xlane.f32.xlu0 %v1992
    %v1994 = vpop.xlane.xlu0 %1993
    %v1995 = vmul.f32 %v1994, %v387
    %v1996 = vsub.f32 %v1991, %v1995
    %v1997 = vmul.f32 %v1996, %v1996
    %v1998 = vsel %vm681, %v1997, 0.0
    %1999 = vadd.xlane.f32.xlu0 %v1998
    %v2000 = vpop.xlane.xlu0 %1999
    %v2001 = vmul.f32 %v2000, %v387
    %v2002 = vadd.f32 %v2001, 1e-05
    %v2003 = vrsqrt.pop %v2002
    %v2004 = vmul.f32 %v1996, %v2003
    %v2005 = vmul.f32 %v2004, %v1811
    %v2006 = vadd.f32 %v2005, %v1813
    %v2007 = vadd.f32 %v1743, %v2006
    %v2008 = vxor.u32 %v2007, 2147483648
    %v2009 = vmul.f32 %v2008, 1.442695
    %v2010 = vpow.pop %v2009
    %v2011 = vadd.f32 %v2010, 1.0
    %v2012 = vrcp.pop %v2011
    %v2013 = vmul.f32 1.0, %v2012
    %2015 = vrot.lane.b32.xlu0 %v2006, 64
    %v2016 = vpop.permute.xlu0 %2015
    %v2018 = vmul.f32 %v2013, %v2016
    %2020 = vrot.lane.b32.xlu0 %v2018, 64
    %v2021 = vpop.permute.xlu0 %2020
    %v2023 = vadd.f32 %v1743, %v2021
    %v2024 = vtanh.pop %v2023
    %v2025 = vsub.f32 1.0, %v2013
    %2027 = vrot.lane.b32.xlu0 %v2024, 96
    %v2028 = vpop.permute.xlu0 %2027
    %v2030 = vmul.f32 %v2025, %v2028
    %v2031 = vmul.f32 %v2013, %v1934
    %v2032 = vadd.f32 %v2030, %v2031
    %v2033 = vpack.c.bf16 %v2032, %v2032
    %2035 = vrot.lane.b32.xlu0 %v2033, 96
    %v2036 = vpop.permute.xlu0 %2035
    %v2038 = vsel %vm435, %v2036, 0
    %2040 = vmatprep.subr.bf16.mxu0 %v1830
    %2041 = vmatpush1.bf16.msra.mxu0 %v1829
    %2042 = vmatprep.subr.bf16.mxu0 %v1832
    %2043 = vmatpush1.bf16.msra.mxu0 %v1831
    %2044 = vmatprep.subr.bf16.mxu0 0
    %2045 = vmatpush1.bf16.msra.mxu0 0
    %2046 = vmatprep.subr.bf16.mxu0 0
    %2047 = vmatpush1.bf16.msra.mxu0 0
    %2048 = vmatprep.subr.bf16.mxu0 0
    %2049 = vmatpush1.bf16.msra.mxu0 0
    %2050 = vmatprep.subr.bf16.mxu0 0
    %2051 = vmatpush1.bf16.msra.mxu0 0
    %2052 = vmatprep.subr.bf16.mxu0 0
    %2053 = vmatpush1.bf16.msra.mxu0 0
    %2054 = vmatprep.subr.bf16.mxu0 0
    %2055 = vmatpush1.bf16.msra.mxu0 0
    %2056 = vmatprep.subr.bf16.mxu0 0
    %2057 = vmatpush1.bf16.msra.mxu0 0
    %2058 = vmatprep.subr.bf16.mxu0 0
    %2059 = vmatpush1.bf16.msra.mxu0 0
    %2060 = vmatprep.subr.bf16.mxu0 0
    %2061 = vmatpush1.bf16.msra.mxu0 0
    %2062 = vmatprep.subr.bf16.mxu0 0
    %2063 = vmatpush1.bf16.msra.mxu0 0
    %2064 = vmatprep.subr.bf16.mxu0 0
    %2065 = vmatpush1.bf16.msra.mxu0 0
    %2066 = vmatprep.subr.bf16.mxu0 0
    %2067 = vmatpush1.bf16.msra.mxu0 0
    %2068 = vmatprep.subr.bf16.mxu0 0
    %2069 = vmatpush1.bf16.msra.mxu0 0
    %2070 = vmatprep.subr.bf16.mxu0 0
    %2071 = vmatpush1.bf16.msra.mxu0 0
    %2072 = vmatprep.mubr.bf16.mxu0 0
    %2073 = vmatmul.mubr.bf16.gmra.mrb[0].mxu0 %v2038
    %v2074 = vpop.f32.mrb[0].mxu0
    %v2075 = vadd.f32 0.0, %v2074
    %v2076 = vpop.f32.mrb[0].mxu0
    %v2077 = vadd.f32 0.0, %v2076
    %v2078 = vpop.f32.mrb[0].mxu0
    %v2079 = vpop.f32.mrb[0].mxu0
    %2080 = vdwg.mxu0
    %2083 = vrot.lane.b32.xlu0 %v2075, 32
    %v2084 = vpop.permute.xlu0 %2083
    %2085 = vrot.lane.b32.xlu0 %v2077, 32
    %v2086 = vpop.permute.xlu0 %2085
    %v2087 = vsel %vm435, %v2084, %v2086
    %v2089 = vsel %vm45, %v2075, %v2087
    %v2090 = vsel %vm681, %v2089, 0.0
    %2091 = vadd.xlane.f32.xlu0 %v2090
    %v2092 = vpop.xlane.xlu0 %2091
    %v2093 = vmul.f32 %v2092, %v387
    %v2094 = vsub.f32 %v2089, %v2093
    %v2095 = vmul.f32 %v2094, %v2094
    %v2096 = vsel %vm681, %v2095, 0.0
    %2097 = vadd.xlane.f32.xlu0 %v2096
    %v2098 = vpop.xlane.xlu0 %2097
    %v2099 = vmul.f32 %v2098, %v387
    %v2100 = vadd.f32 %v2099, 1e-05
    %v2101 = vrsqrt.pop %v2100
    %v2102 = vmul.f32 %v2094, %v2101
    %v2103 = vmul.f32 %v2102, %v1811
    %v2104 = vadd.f32 %v2103, %v1813
    %v2105 = vadd.f32 %v1752, %v2104
    %v2106 = vxor.u32 %v2105, 2147483648
    %v2107 = vmul.f32 %v2106, 1.442695
    %v2108 = vpow.pop %v2107
    %v2109 = vadd.f32 %v2108, 1.0
    %v2110 = vrcp.pop %v2109
    %v2111 = vmul.f32 1.0, %v2110
    %2113 = vrot.lane.b32.xlu0 %v2104, 64
    %v2114 = vpop.permute.xlu0 %2113
    %v2116 = vmul.f32 %v2111, %v2114
    %2118 = vrot.lane.b32.xlu0 %v2116, 64
    %v2119 = vpop.permute.xlu0 %2118
    %v2121 = vadd.f32 %v1752, %v2119
    %v2122 = vtanh.pop %v2121
    %v2123 = vsub.f32 1.0, %v2111
    %2125 = vrot.lane.b32.xlu0 %v2122, 96
    %v2126 = vpop.permute.xlu0 %2125
    %v2128 = vmul.f32 %v2123, %v2126
    %v2129 = vmul.f32 %v2111, %v2032
    %v2130 = vadd.f32 %v2128, %v2129
    %v2131 = vpack.c.bf16 %v2130, %v2130
    %2133 = vrot.lane.b32.xlu0 %v2131, 96
    %v2134 = vpop.permute.xlu0 %2133
    %v2136 = vsel %vm435, %v2134, 0
    %2138 = vmatprep.subr.bf16.mxu0 %v1830
    %2139 = vmatpush1.bf16.msra.mxu0 %v1829
    %2140 = vmatprep.subr.bf16.mxu0 %v1832
    %2141 = vmatpush1.bf16.msra.mxu0 %v1831
    %2142 = vmatprep.subr.bf16.mxu0 0
    %2143 = vmatpush1.bf16.msra.mxu0 0
    %2144 = vmatprep.subr.bf16.mxu0 0
    %2145 = vmatpush1.bf16.msra.mxu0 0
    %2146 = vmatprep.subr.bf16.mxu0 0
    %2147 = vmatpush1.bf16.msra.mxu0 0
    %2148 = vmatprep.subr.bf16.mxu0 0
    %2149 = vmatpush1.bf16.msra.mxu0 0
    %2150 = vmatprep.subr.bf16.mxu0 0
    %2151 = vmatpush1.bf16.msra.mxu0 0
    %2152 = vmatprep.subr.bf16.mxu0 0
    %2153 = vmatpush1.bf16.msra.mxu0 0
    %2154 = vmatprep.subr.bf16.mxu0 0
    %2155 = vmatpush1.bf16.msra.mxu0 0
    %2156 = vmatprep.subr.bf16.mxu0 0
    %2157 = vmatpush1.bf16.msra.mxu0 0
    %2158 = vmatprep.subr.bf16.mxu0 0
    %2159 = vmatpush1.bf16.msra.mxu0 0
    %2160 = vmatprep.subr.bf16.mxu0 0
    %2161 = vmatpush1.bf16.msra.mxu0 0
    %2162 = vmatprep.subr.bf16.mxu0 0
    %2163 = vmatpush1.bf16.msra.mxu0 0
    %2164 = vmatprep.subr.bf16.mxu0 0
    %2165 = vmatpush1.bf16.msra.mxu0 0
    %2166 = vmatprep.subr.bf16.mxu0 0
    %2167 = vmatpush1.bf16.msra.mxu0 0
    %2168 = vmatprep.subr.bf16.mxu0 0
    %2169 = vmatpush1.bf16.msra.mxu0 0
    %2170 = vmatprep.mubr.bf16.mxu0 0
    %2171 = vmatmul.mubr.bf16.gmra.mrb[0].mxu0 %v2136
    %v2172 = vpop.f32.mrb[0].mxu0
    %v2173 = vadd.f32 0.0, %v2172
    %v2174 = vpop.f32.mrb[0].mxu0
    %v2175 = vadd.f32 0.0, %v2174
    %v2176 = vpop.f32.mrb[0].mxu0
    %v2177 = vpop.f32.mrb[0].mxu0
    %2178 = vdwg.mxu0
    %2181 = vrot.lane.b32.xlu0 %v2173, 32
    %v2182 = vpop.permute.xlu0 %2181
    %2183 = vrot.lane.b32.xlu0 %v2175, 32
    %v2184 = vpop.permute.xlu0 %2183
    %v2185 = vsel %vm435, %v2182, %v2184
    %v2187 = vsel %vm45, %v2173, %v2185
    %v2188 = vsel %vm681, %v2187, 0.0
    %2189 = vadd.xlane.f32.xlu0 %v2188
    %v2190 = vpop.xlane.xlu0 %2189
    %v2191 = vmul.f32 %v2190, %v387
    %v2192 = vsub.f32 %v2187, %v2191
    %v2193 = vmul.f32 %v2192, %v2192
    %v2194 = vsel %vm681, %v2193, 0.0
    %2195 = vadd.xlane.f32.xlu0 %v2194
    %v2196 = vpop.xlane.xlu0 %2195
    %v2197 = vmul.f32 %v2196, %v387
    %v2198 = vadd.f32 %v2197, 1e-05
    %v2199 = vrsqrt.pop %v2198
    %v2200 = vmul.f32 %v2192, %v2199
    %v2201 = vmul.f32 %v2200, %v1811
    %v2202 = vadd.f32 %v2201, %v1813
    %v2203 = vadd.f32 %v1763, %v2202
    %v2204 = vxor.u32 %v2203, 2147483648
    %v2205 = vmul.f32 %v2204, 1.442695
    %v2206 = vpow.pop %v2205
    %v2207 = vadd.f32 %v2206, 1.0
    %v2208 = vrcp.pop %v2207
    %v2209 = vmul.f32 1.0, %v2208
    %2211 = vrot.lane.b32.xlu0 %v2202, 64
    %v2212 = vpop.permute.xlu0 %2211
    %v2214 = vmul.f32 %v2209, %v2212
    %2216 = vrot.lane.b32.xlu0 %v2214, 64
    %v2217 = vpop.permute.xlu0 %2216
    %v2219 = vadd.f32 %v1763, %v2217
    %v2220 = vtanh.pop %v2219
    %v2221 = vsub.f32 1.0, %v2209
    %2223 = vrot.lane.b32.xlu0 %v2220, 96
    %v2224 = vpop.permute.xlu0 %2223
    %v2226 = vmul.f32 %v2221, %v2224
    %v2227 = vmul.f32 %v2209, %v2130
    %v2228 = vadd.f32 %v2226, %v2227
    %v2229 = vpack.c.bf16 %v2228, %v2228
    %2231 = vrot.lane.b32.xlu0 %v2229, 96
    %v2232 = vpop.permute.xlu0 %2231
    %v2234 = vsel %vm435, %v2232, 0
    %2236 = vmatprep.subr.bf16.mxu0 %v1830
    %2237 = vmatpush1.bf16.msra.mxu0 %v1829
    %2238 = vmatprep.subr.bf16.mxu0 %v1832
    %2239 = vmatpush1.bf16.msra.mxu0 %v1831
    %2240 = vmatprep.subr.bf16.mxu0 0
    %2241 = vmatpush1.bf16.msra.mxu0 0
    %2242 = vmatprep.subr.bf16.mxu0 0
    %2243 = vmatpush1.bf16.msra.mxu0 0
    %2244 = vmatprep.subr.bf16.mxu0 0
    %2245 = vmatpush1.bf16.msra.mxu0 0
    %2246 = vmatprep.subr.bf16.mxu0 0
    %2247 = vmatpush1.bf16.msra.mxu0 0
    %2248 = vmatprep.subr.bf16.mxu0 0
    %2249 = vmatpush1.bf16.msra.mxu0 0
    %2250 = vmatprep.subr.bf16.mxu0 0
    %2251 = vmatpush1.bf16.msra.mxu0 0
    %2252 = vmatprep.subr.bf16.mxu0 0
    %2253 = vmatpush1.bf16.msra.mxu0 0
    %2254 = vmatprep.subr.bf16.mxu0 0
    %2255 = vmatpush1.bf16.msra.mxu0 0
    %2256 = vmatprep.subr.bf16.mxu0 0
    %2257 = vmatpush1.bf16.msra.mxu0 0
    %2258 = vmatprep.subr.bf16.mxu0 0
    %2259 = vmatpush1.bf16.msra.mxu0 0
    %2260 = vmatprep.subr.bf16.mxu0 0
    %2261 = vmatpush1.bf16.msra.mxu0 0
    %2262 = vmatprep.subr.bf16.mxu0 0
    %2263 = vmatpush1.bf16.msra.mxu0 0
    %2264 = vmatprep.subr.bf16.mxu0 0
    %2265 = vmatpush1.bf16.msra.mxu0 0
    %2266 = vmatprep.subr.bf16.mxu0 0
    %2267 = vmatpush1.bf16.msra.mxu0 0
    %2268 = vmatprep.mubr.bf16.mxu0 0
    %2269 = vmatmul.mubr.bf16.gmra.mrb[0].mxu0 %v2234
    %v2270 = vpop.f32.mrb[0].mxu0
    %v2271 = vadd.f32 0.0, %v2270
    %v2272 = vpop.f32.mrb[0].mxu0
    %v2273 = vadd.f32 0.0, %v2272
    %v2274 = vpop.f32.mrb[0].mxu0
    %v2275 = vpop.f32.mrb[0].mxu0
    %2276 = vdwg.mxu0
    %2279 = vrot.lane.b32.xlu0 %v2271, 32
    %v2280 = vpop.permute.xlu0 %2279
    %2281 = vrot.lane.b32.xlu0 %v2273, 32
    %v2282 = vpop.permute.xlu0 %2281
    %v2283 = vsel %vm435, %v2280, %v2282
    %v2285 = vsel %vm45, %v2271, %v2283
    %v2286 = vsel %vm681, %v2285, 0.0
    %2287 = vadd.xlane.f32.xlu0 %v2286
    %v2288 = vpop.xlane.xlu0 %2287
    %v2289 = vmul.f32 %v2288, %v387
    %v2290 = vsub.f32 %v2285, %v2289
    %v2291 = vmul.f32 %v2290, %v2290
    %v2292 = vsel %vm681, %v2291, 0.0
    %2293 = vadd.xlane.f32.xlu0 %v2292
    %v2294 = vpop.xlane.xlu0 %2293
    %v2295 = vmul.f32 %v2294, %v387
    %v2296 = vadd.f32 %v2295, 1e-05
    %v2297 = vrsqrt.pop %v2296
    %v2298 = vmul.f32 %v2290, %v2297
    %v2299 = vmul.f32 %v2298, %v1811
    %v2300 = vadd.f32 %v2299, %v1813
    %v2301 = vadd.f32 %v1774, %v2300
    %v2302 = vxor.u32 %v2301, 2147483648
    %v2303 = vmul.f32 %v2302, 1.442695
    %v2304 = vpow.pop %v2303
    %v2305 = vadd.f32 %v2304, 1.0
    %v2306 = vrcp.pop %v2305
    %v2307 = vmul.f32 1.0, %v2306
    %2309 = vrot.lane.b32.xlu0 %v2300, 64
    %v2310 = vpop.permute.xlu0 %2309
    %v2312 = vmul.f32 %v2307, %v2310
    %2314 = vrot.lane.b32.xlu0 %v2312, 64
    %v2315 = vpop.permute.xlu0 %2314
    %v2317 = vadd.f32 %v1774, %v2315
    %v2318 = vtanh.pop %v2317
    %v2319 = vsub.f32 1.0, %v2307
    %2321 = vrot.lane.b32.xlu0 %v2318, 96
    %v2322 = vpop.permute.xlu0 %2321
    %v2324 = vmul.f32 %v2319, %v2322
    %v2325 = vmul.f32 %v2307, %v2228
    %v2326 = vadd.f32 %v2324, %v2325
    %v2327 = vpack.c.bf16 %v2326, %v2326
    %2329 = vrot.lane.b32.xlu0 %v2327, 96
    %v2330 = vpop.permute.xlu0 %2329
    %v2332 = vsel %vm435, %v2330, 0
    %2334 = vmatprep.subr.bf16.mxu0 %v1830
    %2335 = vmatpush1.bf16.msra.mxu0 %v1829
    %2336 = vmatprep.subr.bf16.mxu0 %v1832
    %2337 = vmatpush1.bf16.msra.mxu0 %v1831
    %2338 = vmatprep.subr.bf16.mxu0 0
    %2339 = vmatpush1.bf16.msra.mxu0 0
    %2340 = vmatprep.subr.bf16.mxu0 0
    %2341 = vmatpush1.bf16.msra.mxu0 0
    %2342 = vmatprep.subr.bf16.mxu0 0
    %2343 = vmatpush1.bf16.msra.mxu0 0
    %2344 = vmatprep.subr.bf16.mxu0 0
    %2345 = vmatpush1.bf16.msra.mxu0 0
    %2346 = vmatprep.subr.bf16.mxu0 0
    %2347 = vmatpush1.bf16.msra.mxu0 0
    %2348 = vmatprep.subr.bf16.mxu0 0
    %2349 = vmatpush1.bf16.msra.mxu0 0
    %2350 = vmatprep.subr.bf16.mxu0 0
    %2351 = vmatpush1.bf16.msra.mxu0 0
    %2352 = vmatprep.subr.bf16.mxu0 0
    %2353 = vmatpush1.bf16.msra.mxu0 0
    %2354 = vmatprep.subr.bf16.mxu0 0
    %2355 = vmatpush1.bf16.msra.mxu0 0
    %2356 = vmatprep.subr.bf16.mxu0 0
    %2357 = vmatpush1.bf16.msra.mxu0 0
    %2358 = vmatprep.subr.bf16.mxu0 0
    %2359 = vmatpush1.bf16.msra.mxu0 0
    %2360 = vmatprep.subr.bf16.mxu0 0
    %2361 = vmatpush1.bf16.msra.mxu0 0
    %2362 = vmatprep.subr.bf16.mxu0 0
    %2363 = vmatpush1.bf16.msra.mxu0 0
    %2364 = vmatprep.subr.bf16.mxu0 0
    %2365 = vmatpush1.bf16.msra.mxu0 0
    %2366 = vmatprep.mubr.bf16.mxu0 0
    %2367 = vmatmul.mubr.bf16.gmra.mrb[0].mxu0 %v2332
    %v2368 = vpop.f32.mrb[0].mxu0
    %v2369 = vadd.f32 0.0, %v2368
    %v2370 = vpop.f32.mrb[0].mxu0
    %v2371 = vadd.f32 0.0, %v2370
    %v2372 = vpop.f32.mrb[0].mxu0
    %v2373 = vpop.f32.mrb[0].mxu0
    %2374 = vdwg.mxu0
    %2377 = vrot.lane.b32.xlu0 %v2369, 32
    %v2378 = vpop.permute.xlu0 %2377
    %2379 = vrot.lane.b32.xlu0 %v2371, 32
    %v2380 = vpop.permute.xlu0 %2379
    %v2381 = vsel %vm435, %v2378, %v2380
    %v2383 = vsel %vm45, %v2369, %v2381
    %v2384 = vsel %vm681, %v2383, 0.0
    %2385 = vadd.xlane.f32.xlu0 %v2384
    %v2386 = vpop.xlane.xlu0 %2385
    %v2387 = vmul.f32 %v2386, %v387
    %v2388 = vsub.f32 %v2383, %v2387
    %v2389 = vmul.f32 %v2388, %v2388
    %v2390 = vsel %vm681, %v2389, 0.0
    %2391 = vadd.xlane.f32.xlu0 %v2390
    %v2392 = vpop.xlane.xlu0 %2391
    %v2393 = vmul.f32 %v2392, %v387
    %v2394 = vadd.f32 %v2393, 1e-05
    %v2395 = vrsqrt.pop %v2394
    %v2396 = vmul.f32 %v2388, %v2395
    %v2397 = vmul.f32 %v2396, %v1811
    %v2398 = vadd.f32 %v2397, %v1813
    %v2399 = vadd.f32 %v1786, %v2398
    %v2400 = vxor.u32 %v2399, 2147483648
    %v2401 = vmul.f32 %v2400, 1.442695
    %v2402 = vpow.pop %v2401
    %v2403 = vadd.f32 %v2402, 1.0
    %v2404 = vrcp.pop %v2403
    %v2405 = vmul.f32 1.0, %v2404
    %2407 = vrot.lane.b32.xlu0 %v2398, 64
    %v2408 = vpop.permute.xlu0 %2407
    %v2410 = vmul.f32 %v2405, %v2408
    %2412 = vrot.lane.b32.xlu0 %v2410, 64
    %v2413 = vpop.permute.xlu0 %2412
    %v2415 = vadd.f32 %v1786, %v2413
    %v2416 = vtanh.pop %v2415
    %v2417 = vsub.f32 1.0, %v2405
    %2419 = vrot.lane.b32.xlu0 %v2416, 96
    %v2420 = vpop.permute.xlu0 %2419
    %v2422 = vmul.f32 %v2417, %v2420
    %v2423 = vmul.f32 %v2405, %v2326
    %v2424 = vadd.f32 %v2422, %v2423
    %v2425 = vpack.c.bf16 %v2424, %v2424
    %2427 = vrot.lane.b32.xlu0 %v2425, 96
    %v2428 = vpop.permute.xlu0 %2427
    %v2430 = vsel %vm435, %v2428, 0
    %2432 = vmatprep.subr.bf16.mxu0 %v1830
    %2433 = vmatpush1.bf16.msra.mxu0 %v1829
    %2434 = vmatprep.subr.bf16.mxu0 %v1832
    %2435 = vmatpush1.bf16.msra.mxu0 %v1831
    %2436 = vmatprep.subr.bf16.mxu0 0
    %2437 = vmatpush1.bf16.msra.mxu0 0
    %2438 = vmatprep.subr.bf16.mxu0 0
    %2439 = vmatpush1.bf16.msra.mxu0 0
    %2440 = vmatprep.subr.bf16.mxu0 0
    %2441 = vmatpush1.bf16.msra.mxu0 0
    %2442 = vmatprep.subr.bf16.mxu0 0
    %2443 = vmatpush1.bf16.msra.mxu0 0
    %2444 = vmatprep.subr.bf16.mxu0 0
    %2445 = vmatpush1.bf16.msra.mxu0 0
    %2446 = vmatprep.subr.bf16.mxu0 0
    %2447 = vmatpush1.bf16.msra.mxu0 0
    %2448 = vmatprep.subr.bf16.mxu0 0
    %2449 = vmatpush1.bf16.msra.mxu0 0
    %2450 = vmatprep.subr.bf16.mxu0 0
    %2451 = vmatpush1.bf16.msra.mxu0 0
    %2452 = vmatprep.subr.bf16.mxu0 0
    %2453 = vmatpush1.bf16.msra.mxu0 0
    %2454 = vmatprep.subr.bf16.mxu0 0
    %2455 = vmatpush1.bf16.msra.mxu0 0
    %2456 = vmatprep.subr.bf16.mxu0 0
    %2457 = vmatpush1.bf16.msra.mxu0 0
    %2458 = vmatprep.subr.bf16.mxu0 0
    %2459 = vmatpush1.bf16.msra.mxu0 0
    %2460 = vmatprep.subr.bf16.mxu0 0
    %2461 = vmatpush1.bf16.msra.mxu0 0
    %2462 = vmatprep.subr.bf16.mxu0 0
    %2463 = vmatpush1.bf16.msra.mxu0 0
    %2464 = vmatprep.mubr.bf16.mxu0 0
    %2465 = vmatmul.mubr.bf16.gmra.mrb[0].mxu0 %v2430
    %v2466 = vpop.f32.mrb[0].mxu0
    %v2467 = vadd.f32 0.0, %v2466
    %v2468 = vpop.f32.mrb[0].mxu0
    %v2469 = vadd.f32 0.0, %v2468
    %v2470 = vpop.f32.mrb[0].mxu0
    %v2471 = vpop.f32.mrb[0].mxu0
    %2472 = vdwg.mxu0
    %2475 = vrot.lane.b32.xlu0 %v2467, 32
    %v2476 = vpop.permute.xlu0 %2475
    %2477 = vrot.lane.b32.xlu0 %v2469, 32
    %v2478 = vpop.permute.xlu0 %2477
    %v2479 = vsel %vm435, %v2476, %v2478
    %v2481 = vsel %vm45, %v2467, %v2479
    %v2482 = vsel %vm681, %v2481, 0.0
    %2483 = vadd.xlane.f32.xlu0 %v2482
    %v2484 = vpop.xlane.xlu0 %2483
    %v2485 = vmul.f32 %v2484, %v387
    %v2486 = vsub.f32 %v2481, %v2485
    %v2487 = vmul.f32 %v2486, %v2486
    %v2488 = vsel %vm681, %v2487, 0.0
    %2489 = vadd.xlane.f32.xlu0 %v2488
    %v2490 = vpop.xlane.xlu0 %2489
    %v2491 = vmul.f32 %v2490, %v387
    %v2492 = vadd.f32 %v2491, 1e-05
    %v2493 = vrsqrt.pop %v2492
    %v2494 = vmul.f32 %v2486, %v2493
    %v2495 = vmul.f32 %v2494, %v1811
    %v2496 = vadd.f32 %v2495, %v1813
    %v2497 = vadd.f32 %v1795, %v2496
    %v2498 = vxor.u32 %v2497, 2147483648
    %v2499 = vmul.f32 %v2498, 1.442695
    %v2500 = vpow.pop %v2499
    %v2501 = vadd.f32 %v2500, 1.0
    %v2502 = vrcp.pop %v2501
    %v2503 = vmul.f32 1.0, %v2502
    %2505 = vrot.lane.b32.xlu0 %v2496, 64
    %v2506 = vpop.permute.xlu0 %2505
    %v2508 = vmul.f32 %v2503, %v2506
    %2510 = vrot.lane.b32.xlu0 %v2508, 64
    %v2511 = vpop.permute.xlu0 %2510
    %v2513 = vadd.f32 %v1795, %v2511
    %v2514 = vtanh.pop %v2513
    %v2515 = vsub.f32 1.0, %v2503
    %2517 = vrot.lane.b32.xlu0 %v2514, 96
    %v2518 = vpop.permute.xlu0 %2517
    %v2520 = vmul.f32 %v2515, %v2518
    %v2521 = vmul.f32 %v2503, %v2424
    %v2522 = vadd.f32 %v2520, %v2521
    %v2523 = vpack.c.bf16 %v2522, %v2522
    %2525 = vrot.lane.b32.xlu0 %v2523, 96
    %v2526 = vpop.permute.xlu0 %2525
    %v2528 = vsel %vm435, %v2526, 0
    %2530 = vmatprep.subr.bf16.mxu0 %v1830
    %2531 = vmatpush1.bf16.msra.mxu0 %v1829
    %2532 = vmatprep.subr.bf16.mxu0 %v1832
    %2533 = vmatpush1.bf16.msra.mxu0 %v1831
    %2534 = vmatprep.subr.bf16.mxu0 0
    %2535 = vmatpush1.bf16.msra.mxu0 0
    %2536 = vmatprep.subr.bf16.mxu0 0
    %2537 = vmatpush1.bf16.msra.mxu0 0
    %2538 = vmatprep.subr.bf16.mxu0 0
    %2539 = vmatpush1.bf16.msra.mxu0 0
    %2540 = vmatprep.subr.bf16.mxu0 0
    %2541 = vmatpush1.bf16.msra.mxu0 0
    %2542 = vmatprep.subr.bf16.mxu0 0
    %2543 = vmatpush1.bf16.msra.mxu0 0
    %2544 = vmatprep.subr.bf16.mxu0 0
    %2545 = vmatpush1.bf16.msra.mxu0 0
    %2546 = vmatprep.subr.bf16.mxu0 0
    %2547 = vmatpush1.bf16.msra.mxu0 0
    %2548 = vmatprep.subr.bf16.mxu0 0
    %2549 = vmatpush1.bf16.msra.mxu0 0
    %2550 = vmatprep.subr.bf16.mxu0 0
    %2551 = vmatpush1.bf16.msra.mxu0 0
    %2552 = vmatprep.subr.bf16.mxu0 0
    %2553 = vmatpush1.bf16.msra.mxu0 0
    %2554 = vmatprep.subr.bf16.mxu0 0
    %2555 = vmatpush1.bf16.msra.mxu0 0
    %2556 = vmatprep.subr.bf16.mxu0 0
    %2557 = vmatpush1.bf16.msra.mxu0 0
    %2558 = vmatprep.subr.bf16.mxu0 0
    %2559 = vmatpush1.bf16.msra.mxu0 0
    %2560 = vmatprep.subr.bf16.mxu0 0
    %2561 = vmatpush1.bf16.msra.mxu0 0
    %2562 = vmatprep.mubr.bf16.mxu0 0
    %2563 = vmatmul.mubr.bf16.gmra.mrb[0].mxu0 %v2528
    %v2564 = vpop.f32.mrb[0].mxu0
    %v2565 = vadd.f32 0.0, %v2564
    %v2566 = vpop.f32.mrb[0].mxu0
    %v2567 = vadd.f32 0.0, %v2566
    %v2568 = vpop.f32.mrb[0].mxu0
    %v2569 = vpop.f32.mrb[0].mxu0
    %2570 = vdwg.mxu0
    %2573 = vrot.lane.b32.xlu0 %v2565, 32
    %v2574 = vpop.permute.xlu0 %2573
    %2575 = vrot.lane.b32.xlu0 %v2567, 32
    %v2576 = vpop.permute.xlu0 %2575
    %v2577 = vsel %vm435, %v2574, %v2576
    %v2579 = vsel %vm45, %v2565, %v2577
    %v2580 = vsel %vm681, %v2579, 0.0
    %2581 = vadd.xlane.f32.xlu0 %v2580
    %v2582 = vpop.xlane.xlu0 %2581
    %v2583 = vmul.f32 %v2582, %v387
    %v2584 = vsub.f32 %v2579, %v2583
    %v2585 = vmul.f32 %v2584, %v2584
    %v2586 = vsel %vm681, %v2585, 0.0
    %2587 = vadd.xlane.f32.xlu0 %v2586
    %v2588 = vpop.xlane.xlu0 %2587
    %v2589 = vmul.f32 %v2588, %v387
    %v2590 = vadd.f32 %v2589, 1e-05
    %v2591 = vrsqrt.pop %v2590
    %v2592 = vmul.f32 %v2584, %v2591
    %v2593 = vmul.f32 %v2592, %v1811
    %v2594 = vadd.f32 %v2593, %v1813
    %v2595 = vadd.f32 %v1806, %v2594
    %v2596 = vxor.u32 %v2595, 2147483648
    %v2597 = vmul.f32 %v2596, 1.442695
    %v2598 = vpow.pop %v2597
    %v2599 = vadd.f32 %v2598, 1.0
    %v2600 = vrcp.pop %v2599
    %v2601 = vmul.f32 1.0, %v2600
    %2603 = vrot.lane.b32.xlu0 %v2594, 64
    %v2604 = vpop.permute.xlu0 %2603
    %v2606 = vmul.f32 %v2601, %v2604
    %2608 = vrot.lane.b32.xlu0 %v2606, 64
    %v2609 = vpop.permute.xlu0 %2608
    %v2611 = vadd.f32 %v1806, %v2609
    %v2612 = vtanh.pop %v2611
    %v2613 = vsub.f32 1.0, %v2601
    %2615 = vrot.lane.b32.xlu0 %v2612, 96
    %v2616 = vpop.permute.xlu0 %2615
    %v2618 = vmul.f32 %v2613, %v2616
    %v2619 = vmul.f32 %v2601, %v2522
    %v2620 = vadd.f32 %v2618, %v2619
    %v2621 = vadd.f32 %v726, %v1934
    %v2622 = vadd.f32 %v824, %v2032
    %v2623 = vadd.f32 %v922, %v2130
    %v2624 = vadd.f32 %v1020, %v2228
    %v2625 = vadd.f32 %v1118, %v2326
    %v2626 = vadd.f32 %v1216, %v2424
    %v2627 = vadd.f32 %v1314, %v2522
    %v2628 = vadd.f32 %v1412, %v2620
    %v2630 = vrot.slane %v2628, 2
    %v2632 = vadd.f32 %v2621, %v2630
    %v2633 = vmul.f32 %v2632, 0.25
    %v2635 = vrot.slane %v2627, 2
    %v2637 = vadd.f32 %v2622, %v2635
    %v2638 = vmul.f32 %v2637, 0.25
    %v2640 = vrot.slane %v2626, 2
    %v2642 = vadd.f32 %v2623, %v2640
    %v2643 = vmul.f32 %v2642, 0.25
    %v2645 = vrot.slane %v2625, 2
    %v2647 = vadd.f32 %v2624, %v2645
    %v2648 = vmul.f32 %v2647, 0.25
    %v2650 = vrot.slane %v2624, 2
    %v2652 = vadd.f32 %v2625, %v2650
    %v2653 = vmul.f32 %v2652, 0.25
    %v2655 = vrot.slane %v2623, 2
    %v2657 = vadd.f32 %v2626, %v2655
    %v2658 = vmul.f32 %v2657, 0.25
    %v2660 = vrot.slane %v2622, 2
    %v2662 = vadd.f32 %v2627, %v2660
    %v2663 = vmul.f32 %v2662, 0.25
    %v2665 = vrot.slane %v2621, 2
    %v2667 = vadd.f32 %v2628, %v2665
    %v2668 = vmul.f32 %v2667, 0.25
    %2670 = vrot.lane.b32.xlu0 %v2633, 96
    %v2671 = vpop.permute.xlu0 %2670
    %2674 = vrot.lane.b32.xlu0 %v2643, 32
    %v2675 = vpop.permute.xlu0 %2674
    %2678 = vrot.lane.b32.xlu0 %v2648, 64
    %v2679 = vpop.permute.xlu0 %2678
    %2682 = vrot.lane.b32.xlu0 %v2653, 96
    %v2683 = vpop.permute.xlu0 %2682
    %2686 = vrot.lane.b32.xlu0 %v2663, 32
    %v2687 = vpop.permute.xlu0 %2686
    %2690 = vrot.lane.b32.xlu0 %v2668, 64
    %v2691 = vpop.permute.xlu0 %2690
    %v2693 = vsel %vm435, %v2671, %v2638
    %v2694 = vsel %vm1543, %v2693, %v2675
    %v2695 = vsel %vm380, %v2694, %v2679
    %v2696 = vsel %vm435, %v2683, %v2658
    %v2697 = vsel %vm1543, %v2696, %v2687
    %v2698 = vsel %vm380, %v2697, %v2691
    %v2701 = vcombine.low %v2695, %v2698
    %v2703 = vunpack.c.l.s4 1983009808
    %v2704 = vunpack.c.0.s8 %v2703
    %v2705 = vlaneseq
    %v2706 = vshrl.u32 %v2705, 7
    %v2707 = vsub.s32 %v2704, %v2706
    %v2708 = vrot.slane %v2701, %v2707
    %2710 = vst [vmem:[#allocation2] sm:$0xf] %v2708
    %v2711 = vld [vmem:[%s0] sm:$0x3]
    %vm2712 = vcmp.eq.s32.totalorder %v2711, 0
    %v2713 = vmul.f32 %v2621, 0.5
    %v2714 = vsel %vm2712, 1, 0
    %2715 = vset.pattern.permute.xlu0 0
    %2716 = vperm.xlu0 %2715, %v2714
    %v2717 = vpop.permute.xlu0 %2716
    %vm2718 = vcmp.eq.s32.totalorder %v2717, 1
    %v2719 = vsel %vm2718, %v2713, 0.0
    %v2720 = vadd.f32 %v2719, 0.0
    %vm2721 = vcmp.eq.s32.totalorder %v2711, 1
    %v2722 = vmul.f32 %v2622, 0.5
    %v2723 = vsel %vm2721, 1, 0
    %2724 = vset.pattern.permute.xlu0 0
    %2725 = vperm.xlu0 %2724, %v2723
    %v2726 = vpop.permute.xlu0 %2725
    %vm2727 = vcmp.eq.s32.totalorder %v2726, 1
    %v2728 = vsel %vm2727, %v2722, 0.0
    %v2729 = vadd.f32 %v2720, %v2728
    %vm2730 = vcmp.eq.s32.totalorder %v2711, 2
    %v2731 = vmul.f32 %v2623, 0.5
    %v2732 = vsel %vm2730, 1, 0
    %2733 = vset.pattern.permute.xlu0 0
    %2734 = vperm.xlu0 %2733, %v2732
    %v2735 = vpop.permute.xlu0 %2734
    %vm2736 = vcmp.eq.s32.totalorder %v2735, 1
    %v2737 = vsel %vm2736, %v2731, 0.0
    %v2738 = vadd.f32 %v2729, %v2737
    %vm2739 = vcmp.eq.s32.totalorder %v2711, 3
    %v2740 = vmul.f32 %v2624, 0.5
    %v2741 = vsel %vm2739, 1, 0
    %2742 = vset.pattern.permute.xlu0 0
    %2743 = vperm.xlu0 %2742, %v2741
    %v2744 = vpop.permute.xlu0 %2743
    %vm2745 = vcmp.eq.s32.totalorder %v2744, 1
    %v2746 = vsel %vm2745, %v2740, 0.0
    %v2747 = vadd.f32 %v2738, %v2746
    %vm2748 = vcmp.eq.s32.totalorder %v2711, 4
    %v2749 = vmul.f32 %v2625, 0.5
    %v2750 = vsel %vm2748, 1, 0
    %2751 = vset.pattern.permute.xlu0 0
    %2752 = vperm.xlu0 %2751, %v2750
    %v2753 = vpop.permute.xlu0 %2752
    %vm2754 = vcmp.eq.s32.totalorder %v2753, 1
    %v2755 = vsel %vm2754, %v2749, 0.0
    %v2756 = vadd.f32 %v2747, %v2755
    %vm2757 = vcmp.eq.s32.totalorder %v2711, 5
    %v2758 = vmul.f32 %v2626, 0.5
    %v2759 = vsel %vm2757, 1, 0
    %2760 = vset.pattern.permute.xlu0 0
    %2761 = vperm.xlu0 %2760, %v2759
    %v2762 = vpop.permute.xlu0 %2761
    %vm2763 = vcmp.eq.s32.totalorder %v2762, 1
    %v2764 = vsel %vm2763, %v2758, 0.0
    %v2765 = vadd.f32 %v2756, %v2764
    %vm2766 = vcmp.eq.s32.totalorder %v2711, 6
    %v2767 = vmul.f32 %v2627, 0.5
    %v2768 = vsel %vm2766, 1, 0
    %2769 = vset.pattern.permute.xlu0 0
    %2770 = vperm.xlu0 %2769, %v2768
    %v2771 = vpop.permute.xlu0 %2770
    %vm2772 = vcmp.eq.s32.totalorder %v2771, 1
    %v2773 = vsel %vm2772, %v2767, 0.0
    %v2774 = vadd.f32 %v2765, %v2773
    %vm2775 = vcmp.eq.s32.totalorder %v2711, 7
    %v2776 = vmul.f32 %v2628, 0.5
    %v2777 = vsel %vm2775, 1, 0
    %2778 = vset.pattern.permute.xlu0 0
    %2779 = vperm.xlu0 %2778, %v2777
    %v2780 = vpop.permute.xlu0 %2779
    %vm2781 = vcmp.eq.s32.totalorder %v2780, 1
    %v2782 = vsel %vm2781, %v2776, 0.0
    %v2783 = vadd.f32 %v2774, %v2782
    %v2785 = vrot.slane %v2783, 6
    %v2787 = vadd.f32 %v2776, %v2785
    %v2788 = vmul.f32 %v2787, 0.5
    %2790 = vrot.lane.b32.xlu0 %v2788, 96
    %v2791 = vpop.permute.xlu0 %2790
    %vm2793 = vcmask 257026
    %2794 = vst.msk [vmem:[#allocation4 - $0x2] sm:$0xc] %vm2793, %v2791
    // Predicated region
    $region46: #{tpu_custom_call.1} parent=1 // pred_check
      _
    $region47: #{tpu_custom_call.1} parent=1 // pred_check_branch
      %2796 = sbr.rel (0) target = $region49
    $region48: #{tpu_custom_call.1} parent=1 // pred_region
      %s2798 = ssub.s32 64, 64
      %2799 = vsyncadd [#allocation3], %s2798
      %s2801 = sshll.u32 [#allocation2], 4
      %s2802 = int_to_ptr.vmem [resolvable:$true] %s2801
      %2804 = dma.vmem_to_hbm [thread:$0]  %s2802, 64, %s11, [#allocation3]
    $region49: #{tpu_custom_call.1} parent=1 // pred_fallthru
      _
    // Predicated region
    $region50: #{tpu_custom_call.1} parent=1 // pred_check
      _
    $region51: #{tpu_custom_call.1} parent=1 // pred_check_branch
      %2806 = sbr.rel (0) target = $region53
    $region52: #{tpu_custom_call.1} parent=1 // pred_region
      %s2808 = ssub.s32 32, 32
      %2809 = vsyncadd [#allocation5], %s2808
      %s2811 = sshll.u32 [#allocation4], 4
      %s2812 = int_to_ptr.vmem [resolvable:$true] %s2811
      %2814 = dma.vmem_to_hbm [thread:$0]  %s2812, 32, %s12, [#allocation5]
    $region53: #{tpu_custom_call.1} parent=1 // pred_fallthru
      _
    // Predicated region
    $region54: #{tpu_custom_call.1} parent=1 // pred_check
      _
    $region55: #{tpu_custom_call.1} parent=1 // pred_check_branch
      %2816 = sbr.rel (0) target = $region57
    $region56: #{tpu_custom_call.1} parent=1 // pred_region
      %2817 = dma.done [#allocation3], 64
    $region57: #{tpu_custom_call.1} parent=1 // pred_fallthru
      _
    // Predicated region
    $region58: #{tpu_custom_call.1} parent=1 // pred_check
      _
    $region59: #{tpu_custom_call.1} parent=1 // pred_check_branch
      %2819 = sbr.rel (0) target = $region61
    $region60: #{tpu_custom_call.1} parent=1 // pred_region
      %2820 = dma.done [#allocation5], 32
    $region61: #{tpu_custom_call.1} parent=1 // pred_fallthru
      _
    %2821 = vsyncpa [#allocation3], 1
    %2822 = vsyncpa [#allocation5], 1

</llo_original>
